<compile_context>
chip_gen: v6e
topology: v6e:2x2x1
jax: 0.10.0
libtpu: 0.0.40
codegen_flags: <defaults>
</compile_context>

<pallas_src>
import jax
import jax.numpy as jnp
from jax import lax
from jax.experimental import pallas as pl
from jax.experimental.pallas import tpu as pltpu


def _make_kernel(H, W, Ch, F, B, reverse):
    HW = H * W
    BHW = B * HW

    def kernel(x1_ref, x2_ref, mask_ref, w1_ref, b1_ref, w2_ref, b2_ref,
               w3_ref, b3_ref, y2_ref, ld_ref):
        x1 = x1_ref[...]                                      # (Ch, B*HW)

        def tap(src, k):
            # src[:, p + o] with zero padding at image borders, o = dy*W + dx.
            # The (1, B*HW) mask zeros border taps and cross-image wraparound.
            dy, dx = k // 3 - 1, k % 3 - 1
            o = dy * W + dx
            if o == 0:                       # centre tap: mask is all ones
                return src
            return jnp.roll(src, -o, axis=-1) * mask_ref[k:k + 1, :]

        # ---- conv1: 3x3, pad=1 (ActNorm1 scale folded into w1/b1) + ReLU ---
        h = jnp.zeros((F, BHW), jnp.float32)
        for k in range(9):
            h = h + jnp.dot(w1_ref[k], tap(x1, k),
                            preferred_element_type=jnp.float32)
        h = jnp.maximum(h + b1_ref[...], 0.0)

        # ---- conv2: 1x1 (ActNorm2 folded into w2/b2) + ReLU -----------------
        h = jnp.maximum(
            jnp.dot(w2_ref[...], h, preferred_element_type=jnp.float32)
            + b2_ref[...], 0.0)

        # ---- conv3 (conv2d_zeros): 3x3, pad=1; exp(3*logs) folded; output
        #      channels pre-ordered as [t | h_scale] -------------------------
        h3 = jnp.zeros((2 * Ch, BHW), jnp.float32)
        for k in range(9):
            h3 = h3 + jnp.dot(w3_ref[k], tap(h, k),
                              preferred_element_type=jnp.float32)
        h3 = h3 + b3_ref[...]

        t = h3[:Ch, :]
        hs = h3[Ch:, :]
        # softplus, numerically stable; exp/log run on the EUP.
        sp = jnp.maximum(hs, 0.0) + jnp.log(1.0 + jnp.exp(-jnp.abs(hs)))

        x2 = x2_ref[...]
        if reverse:
            y2_ref[...] = x2 / sp - t        # exact division (invertibility)
        else:
            y2_ref[...] = (x2 + t) * sp      # lane-dense store

        # per-image logdet contributions, one (1, B) row per grid step
        logsc = jnp.log(sp)
        parts = [jnp.sum(logsc[:, b * HW:(b + 1) * HW], keepdims=True)
                 for b in range(B)]
        ld_ref[...] = jnp.concatenate(parts, axis=-1)

    return kernel


def _pick_block_batch(n, max_b=8):
    # Largest divisor of n that is <= max_b, preferring >= 2 grid steps so
    # both v7x TensorCores get work.  (At production Glow sizes, cap max_b by
    # the per-step VMEM budget instead.)
    divs = [b for b in range(1, min(n, max_b) + 1) if n % b == 0]
    two_step = [b for b in divs if n // b >= 2]
    return max(two_step) if two_step else max(divs)


def affine_coupling_forward(x, logdet, params, reverse=False, block_batch=None):
    """AffineCoupling.forward(x, logdet, reverse) with ActNorm pre-initialized."""
    (w1, an1_b, an1_logs, w2, an2_b, an2_logs, w3, b3, logs3) = params
    N, C, H, W = x.shape
    Ch = C // 2
    F = w1.shape[0]
    HW = H * W
    B = block_batch if block_batch is not None else _pick_block_batch(N)
    assert N % B == 0
    G = N // B
    BHW = B * HW

    x1 = x[:, :Ch]
    x2 = x[:, Ch:]

    # ---- lane-dense data layout: (grid, C, B*HW); spatial (x batch) on lanes
    def to_blocks(z):
        return (z.reshape(G, B, Ch, HW).transpose(0, 2, 1, 3)
                 .reshape(G, Ch, BHW))
    x1g = to_blocks(x1)
    x2g = to_blocks(x2)

    # ---- fold ActNorm / conv2d_zeros scales into weights & biases -----------
    an1s = jnp.exp(an1_logs.reshape(F))       # ActNorm logscale_factor = 1.0
    an2s = jnp.exp(an2_logs.reshape(F))
    s3 = jnp.exp(logs3.reshape(C) * 3.0)

    w1f = w1 * an1s[:, None, None, None]                        # (F, Ch, 3, 3)
    w1r = jnp.transpose(w1f, (2, 3, 0, 1)).reshape(9, F, Ch)    # tap-major
    b1r = (an1_b.reshape(F) * an1s).reshape(F, 1)

    w2r = w2[:, :, 0, 0] * an2s[:, None]                        # (F, F)
    b2r = (an2_b.reshape(F) * an2s).reshape(F, 1)

    # conv2d_zeros: reorder output channels to [t | h_scale], fold exp(3*logs)
    w3f = w3 * s3[:, None, None, None]
    b3f = b3 * s3
    w3c = jnp.concatenate([w3f[0::2], w3f[1::2]], axis=0)       # (2Ch, F, 3, 3)
    w3r = jnp.transpose(w3c, (2, 3, 0, 1)).reshape(9, 2 * Ch, F)
    b3r = jnp.concatenate([b3f[0::2], b3f[1::2]]).reshape(2 * Ch, 1)

    # ---- per-tap validity masks for the rolled 3x3 patches ------------------
    ys = jnp.arange(H).reshape(H, 1)
    xs = jnp.arange(W).reshape(1, W)
    masks = []
    for dy in (-1, 0, 1):
        for dx in (-1, 0, 1):
            m = ((ys + dy >= 0) & (ys + dy < H) &
                 (xs + dx >= 0) & (xs + dx < W))
            masks.append(m.reshape(HW))
    mask9 = jnp.tile(jnp.stack(masks).astype(jnp.float32), (1, B))  # (9, B*HW)

    kernel = _make_kernel(H, W, Ch, F, B, reverse)

    flops = 2 * N * HW * (9 * Ch * F + F * F + 9 * F * 2 * Ch)
    cost = pl.CostEstimate(
        flops=flops,
        transcendentals=3 * N * HW * Ch,
        bytes_accessed=4 * (3 * N * HW * Ch + mask9.size + w1r.size
                            + w2r.size + w3r.size + 2 * F + 2 * Ch + N))

    y2g, ld = pl.pallas_call(
        kernel,
        out_shape=(jax.ShapeDtypeStruct((G, Ch, BHW), jnp.float32),
                   jax.ShapeDtypeStruct((G, 1, B), jnp.float32)),
        grid=(G,),
        in_specs=[
            pl.BlockSpec((None, Ch, BHW), lambda g: (g, 0, 0)),   # x1
            pl.BlockSpec((None, Ch, BHW), lambda g: (g, 0, 0)),   # x2
            pl.BlockSpec((9, BHW), lambda g: (0, 0)),             # tap masks
            pl.BlockSpec((9, F, Ch), lambda g: (0, 0, 0)),        # w1 (folded)
            pl.BlockSpec((F, 1), lambda g: (0, 0)),               # b1 (folded)
            pl.BlockSpec((F, F), lambda g: (0, 0)),               # w2 (folded)
            pl.BlockSpec((F, 1), lambda g: (0, 0)),               # b2 (folded)
            pl.BlockSpec((9, 2 * Ch, F), lambda g: (0, 0, 0)),    # w3 (folded)
            pl.BlockSpec((2 * Ch, 1), lambda g: (0, 0)),          # b3 (folded)
        ],
        out_specs=(
            pl.BlockSpec((None, Ch, BHW), lambda g: (g, 0, 0)),   # y2 lane-dense
            pl.BlockSpec((None, 1, B), lambda g: (g, 0, 0)),      # per-image logdet
        ),
        compiler_params=pltpu.CompilerParams(
            dimension_semantics=("parallel",),
            vmem_limit_bytes=32 * 1024 * 1024),
        cost_estimate=cost,
    )(x1g, x2g, mask9, w1r, b1r, w2r, b2r, w3r, b3r)

    y2 = (y2g.reshape(G, Ch, B, HW).transpose(0, 2, 1, 3)
              .reshape(N, Ch, H, W))
    y = jnp.concatenate([x1, y2], axis=1)
    return y, logdet + ld.reshape(N)


def reference(x, logdet, params, reverse=False):
    """Pure-JAX reference of the same forward pass (for a correctness check)."""
    (w1, an1_b, an1_logs, w2, an2_b, an2_logs, w3, b3, logs3) = params
    N, C, H, W = x.shape
    Ch = C // 2
    F = w1.shape[0]
    x1 = x[:, :Ch]
    x2 = x[:, Ch:]

    def conv(z, w, pad):
        return lax.conv_general_dilated(
            z, w, (1, 1), ((pad, pad), (pad, pad)),
            dimension_numbers=('NCHW', 'OIHW', 'NCHW'),
            precision=lax.Precision.HIGHEST)

    h = conv(x1, w1, 1)
    h = (h + an1_b.reshape(1, F, 1, 1)) * jnp.exp(an1_logs.reshape(1, F, 1, 1))
    h = jnp.maximum(h, 0.0)
    h = conv(h, w2, 0)
    h = (h + an2_b.reshape(1, F, 1, 1)) * jnp.exp(an2_logs.reshape(1, F, 1, 1))
    h = jnp.maximum(h, 0.0)
    h = (conv(h, w3, 1) + b3.reshape(1, C, 1, 1)) * jnp.exp(
        logs3.reshape(1, C, 1, 1) * 3.0)
    t, hs = h[:, 0::2], h[:, 1::2]
    scale = jax.nn.softplus(hs)
    logscale = jnp.log(scale)
    if reverse:
        out2 = x2 / scale - t
    else:
        out2 = (x2 + t) * scale
    y = jnp.concatenate([x1, out2], axis=1)
    return y, logdet + jnp.sum(logscale, axis=(1, 2, 3))


if __name__ == "__main__":
    key = jax.random.PRNGKey(0)
    ks = jax.random.split(key, 10)

    # AffineCoupling(in_channels=8, filter_size=32) at small shapes.
    N, C, H, W = 2, 8, 16, 16
    F = 32
    Ch = C // 2

    x = jax.random.normal(ks[0], (N, C, H, W), jnp.float32)
    logdet = jnp.zeros((N,), jnp.float32)

    # Net parameters (the PyTorch zero inits would make the compute path
    # trivial, so use small deterministic random values instead).
    w1 = 0.1 * jax.random.normal(ks[1], (F, Ch, 3, 3), jnp.float32)
    an1_b = 0.1 * jax.random.normal(ks[2], (1, F, 1), jnp.float32)
    an1_logs = 0.1 * jax.random.normal(ks[3], (1, F, 1), jnp.float32)
    w2 = 0.1 * jax.random.normal(ks[4], (F, F, 1, 1), jnp.float32)
    an2_b = 0.1 * jax.random.normal(ks[5], (1, F, 1), jnp.float32)
    an2_logs = 0.1 * jax.random.normal(ks[6], (1, F, 1), jnp.float32)
    w3 = 0.05 * jax.random.normal(ks[7], (C, F, 3, 3), jnp.float32)
    b3 = 0.05 * jax.random.normal(ks[8], (C,), jnp.float32)
    logs3 = 0.1 * jax.random.normal(ks[9], (C, 1, 1), jnp.float32)

    params = (w1, an1_b, an1_logs, w2, an2_b, an2_logs, w3, b3, logs3)

    y, ld = affine_coupling_forward(x, logdet, params)
    jax.block_until_ready(y)
    jax.block_until_ready(ld)

    y_r, ld_r = reference(x, logdet, params)
    assert jnp.allclose(y[:, :Ch], x[:, :Ch])                    # y1 == x1
    assert jnp.allclose(y, y_r, rtol=1e-2, atol=1e-2), (y, y_r)
    assert jnp.allclose(ld, ld_r, rtol=1e-2, atol=1e-1), (ld, ld_r)

    print("KERNEL_OK")
</pallas_src>

<mosaic_0001>
module attributes {stable_mosaic.version = 11 : i64} {
  func.func @kernel(%arg0: i32, %arg1: memref<1x4x256xf32, #tpu.memory_space<vmem>>, %arg2: memref<1x4x256xf32, #tpu.memory_space<vmem>>, %arg3: memref<9x256xf32, #tpu.memory_space<vmem>>, %arg4: memref<9x32x4xf32, #tpu.memory_space<vmem>>, %arg5: memref<32x1xf32, #tpu.memory_space<vmem>>, %arg6: memref<32x32xf32, #tpu.memory_space<vmem>>, %arg7: memref<32x1xf32, #tpu.memory_space<vmem>>, %arg8: memref<9x8x32xf32, #tpu.memory_space<vmem>>, %arg9: memref<8x1xf32, #tpu.memory_space<vmem>>, %arg10: memref<1x4x256xf32, #tpu.memory_space<vmem>>, %arg11: memref<1x1x1xf32, #tpu.memory_space<vmem>>) attributes {dimension_semantics = [#tpu.dimension_semantics<parallel>], iteration_bounds = array<i64: 2>, scalar_prefetch = 0 : i64, scratch_operands = 0 : i64, tpu.core_type = #tpu.core_type<tc>, window_params = [{transform_indices = @transform_0, window_bounds = array<i64: 1, 4, 256>}, {transform_indices = @transform_1, window_bounds = array<i64: 1, 4, 256>}, {pipeline_mode = #tpu.pipeline_mode<synchronous>, transform_indices = @transform_2, window_bounds = array<i64: 9, 256>}, {pipeline_mode = #tpu.pipeline_mode<synchronous>, transform_indices = @transform_3, window_bounds = array<i64: 9, 32, 4>}, {pipeline_mode = #tpu.pipeline_mode<synchronous>, transform_indices = @transform_4, window_bounds = array<i64: 32, 1>}, {pipeline_mode = #tpu.pipeline_mode<synchronous>, transform_indices = @transform_5, window_bounds = array<i64: 32, 32>}, {pipeline_mode = #tpu.pipeline_mode<synchronous>, transform_indices = @transform_6, window_bounds = array<i64: 32, 1>}, {pipeline_mode = #tpu.pipeline_mode<synchronous>, transform_indices = @transform_7, window_bounds = array<i64: 9, 8, 32>}, {pipeline_mode = #tpu.pipeline_mode<synchronous>, transform_indices = @transform_8, window_bounds = array<i64: 8, 1>}, {transform_indices = @transform_9, window_bounds = array<i64: 1, 4, 256>}, {transform_indices = @transform_10, window_bounds = array<i64: 1, 1, 1>}]} {
    %c0 = arith.constant 0 : index
    %c0_0 = arith.constant 0 : index
    %c0_1 = arith.constant 0 : index
    %0 = vector.load %arg1[%c0, %c0_0, %c0_1] : memref<1x4x256xf32, #tpu.memory_space<vmem>>, vector<1x4x256xf32>
    %1 = vector.shape_cast %0 : vector<1x4x256xf32> to vector<4x256xf32>
    %cst = arith.constant 0.000000e+00 : f32
    %2 = vector.broadcast %cst : f32 to vector<32x256xf32>
    %c0_2 = arith.constant 0 : index
    %c0_3 = arith.constant 0 : index
    %c0_4 = arith.constant 0 : index
    %3 = vector.load %arg4[%c0_2, %c0_3, %c0_4] : memref<9x32x4xf32, #tpu.memory_space<vmem>>, vector<1x32x4xf32>
    %4 = vector.shape_cast %3 : vector<1x32x4xf32> to vector<32x4xf32>
    %5 = vector.extract_strided_slice %1 {offsets = [0, 239], sizes = [4, 17], strides = [1, 1]} : vector<4x256xf32> to vector<4x17xf32>
    %6 = vector.extract_strided_slice %1 {offsets = [0, 0], sizes = [4, 239], strides = [1, 1]} : vector<4x256xf32> to vector<4x239xf32>
    %7 = tpu.concatenate %5, %6 in 1 : vector<4x17xf32>, vector<4x239xf32> -> vector<4x256xf32>
    %c0_5 = arith.constant 0 : index
    %c0_6 = arith.constant 0 : index
    %8 = vector.load %arg3[%c0_5, %c0_6] : memref<9x256xf32, #tpu.memory_space<vmem>>, vector<1x256xf32>
    %9 = vector.broadcast %8 : vector<1x256xf32> to vector<4x256xf32>
    %10 = arith.mulf %7, %9 : vector<4x256xf32>
    %cst_7 = arith.constant dense<0.000000e+00> : vector<32x256xf32>
    %11 = tpu.matmul %4, %10, %cst_7 {dimension_numbers = #tpu.dot_dimension_numbers<[1], [0], [0], [1], [0, 0, 1, 1], [], []>} : vector<32x4xf32>, vector<4x256xf32>, vector<32x256xf32> -> vector<32x256xf32>
    %12 = arith.addf %2, %11 : vector<32x256xf32>
    %c1 = arith.constant 1 : index
    %c0_8 = arith.constant 0 : index
    %c0_9 = arith.constant 0 : index
    %13 = vector.load %arg4[%c1, %c0_8, %c0_9] : memref<9x32x4xf32, #tpu.memory_space<vmem>>, vector<1x32x4xf32>
    %14 = vector.shape_cast %13 : vector<1x32x4xf32> to vector<32x4xf32>
    %15 = vector.extract_strided_slice %1 {offsets = [0, 240], sizes = [4, 16], strides = [1, 1]} : vector<4x256xf32> to vector<4x16xf32>
    %16 = vector.extract_strided_slice %1 {offsets = [0, 0], sizes = [4, 240], strides = [1, 1]} : vector<4x256xf32> to vector<4x240xf32>
    %17 = tpu.concatenate %15, %16 in 1 : vector<4x16xf32>, vector<4x240xf32> -> vector<4x256xf32>
    %c1_10 = arith.constant 1 : index
    %c0_11 = arith.constant 0 : index
    %18 = vector.load %arg3[%c1_10, %c0_11] : memref<9x256xf32, #tpu.memory_space<vmem>>, vector<1x256xf32>
    %19 = vector.broadcast %18 : vector<1x256xf32> to vector<4x256xf32>
    %20 = arith.mulf %17, %19 : vector<4x256xf32>
    %cst_12 = arith.constant dense<0.000000e+00> : vector<32x256xf32>
    %21 = tpu.matmul %14, %20, %cst_12 {dimension_numbers = #tpu.dot_dimension_numbers<[1], [0], [0], [1], [0, 0, 1, 1], [], []>} : vector<32x4xf32>, vector<4x256xf32>, vector<32x256xf32> -> vector<32x256xf32>
    %22 = arith.addf %12, %21 : vector<32x256xf32>
    %c2 = arith.constant 2 : index
    %c0_13 = arith.constant 0 : index
    %c0_14 = arith.constant 0 : index
    %23 = vector.load %arg4[%c2, %c0_13, %c0_14] : memref<9x32x4xf32, #tpu.memory_space<vmem>>, vector<1x32x4xf32>
    %24 = vector.shape_cast %23 : vector<1x32x4xf32> to vector<32x4xf32>
    %25 = vector.extract_strided_slice %1 {offsets = [0, 241], sizes = [4, 15], strides = [1, 1]} : vector<4x256xf32> to vector<4x15xf32>
    %26 = vector.extract_strided_slice %1 {offsets = [0, 0], sizes = [4, 241], strides = [1, 1]} : vector<4x256xf32> to vector<4x241xf32>
    %27 = tpu.concatenate %25, %26 in 1 : vector<4x15xf32>, vector<4x241xf32> -> vector<4x256xf32>
    %c2_15 = arith.constant 2 : index
    %c0_16 = arith.constant 0 : index
    %28 = vector.load %arg3[%c2_15, %c0_16] : memref<9x256xf32, #tpu.memory_space<vmem>>, vector<1x256xf32>
    %29 = vector.broadcast %28 : vector<1x256xf32> to vector<4x256xf32>
    %30 = arith.mulf %27, %29 : vector<4x256xf32>
    %cst_17 = arith.constant dense<0.000000e+00> : vector<32x256xf32>
    %31 = tpu.matmul %24, %30, %cst_17 {dimension_numbers = #tpu.dot_dimension_numbers<[1], [0], [0], [1], [0, 0, 1, 1], [], []>} : vector<32x4xf32>, vector<4x256xf32>, vector<32x256xf32> -> vector<32x256xf32>
    %32 = arith.addf %22, %31 : vector<32x256xf32>
    %c3 = arith.constant 3 : index
    %c0_18 = arith.constant 0 : index
    %c0_19 = arith.constant 0 : index
    %33 = vector.load %arg4[%c3, %c0_18, %c0_19] : memref<9x32x4xf32, #tpu.memory_space<vmem>>, vector<1x32x4xf32>
    %34 = vector.shape_cast %33 : vector<1x32x4xf32> to vector<32x4xf32>
    %35 = vector.extract_strided_slice %1 {offsets = [0, 255], sizes = [4, 1], strides = [1, 1]} : vector<4x256xf32> to vector<4x1xf32>
    %36 = vector.extract_strided_slice %1 {offsets = [0, 0], sizes = [4, 255], strides = [1, 1]} : vector<4x256xf32> to vector<4x255xf32>
    %37 = tpu.concatenate %35, %36 in 1 : vector<4x1xf32>, vector<4x255xf32> -> vector<4x256xf32>
    %c3_20 = arith.constant 3 : index
    %c0_21 = arith.constant 0 : index
    %38 = vector.load %arg3[%c3_20, %c0_21] : memref<9x256xf32, #tpu.memory_space<vmem>>, vector<1x256xf32>
    %39 = vector.broadcast %38 : vector<1x256xf32> to vector<4x256xf32>
    %40 = arith.mulf %37, %39 : vector<4x256xf32>
    %cst_22 = arith.constant dense<0.000000e+00> : vector<32x256xf32>
    %41 = tpu.matmul %34, %40, %cst_22 {dimension_numbers = #tpu.dot_dimension_numbers<[1], [0], [0], [1], [0, 0, 1, 1], [], []>} : vector<32x4xf32>, vector<4x256xf32>, vector<32x256xf32> -> vector<32x256xf32>
    %42 = arith.addf %32, %41 : vector<32x256xf32>
    %c4 = arith.constant 4 : index
    %c0_23 = arith.constant 0 : index
    %c0_24 = arith.constant 0 : index
    %43 = vector.load %arg4[%c4, %c0_23, %c0_24] : memref<9x32x4xf32, #tpu.memory_space<vmem>>, vector<1x32x4xf32>
    %44 = vector.shape_cast %43 : vector<1x32x4xf32> to vector<32x4xf32>
    %cst_25 = arith.constant dense<0.000000e+00> : vector<32x256xf32>
    %45 = tpu.matmul %44, %1, %cst_25 {dimension_numbers = #tpu.dot_dimension_numbers<[1], [0], [0], [1], [0, 0, 1, 1], [], []>} : vector<32x4xf32>, vector<4x256xf32>, vector<32x256xf32> -> vector<32x256xf32>
    %46 = arith.addf %42, %45 : vector<32x256xf32>
    %c5 = arith.constant 5 : index
    %c0_26 = arith.constant 0 : index
    %c0_27 = arith.constant 0 : index
    %47 = vector.load %arg4[%c5, %c0_26, %c0_27] : memref<9x32x4xf32, #tpu.memory_space<vmem>>, vector<1x32x4xf32>
    %48 = vector.shape_cast %47 : vector<1x32x4xf32> to vector<32x4xf32>
    %49 = vector.extract_strided_slice %1 {offsets = [0, 1], sizes = [4, 255], strides = [1, 1]} : vector<4x256xf32> to vector<4x255xf32>
    %50 = vector.extract_strided_slice %1 {offsets = [0, 0], sizes = [4, 1], strides = [1, 1]} : vector<4x256xf32> to vector<4x1xf32>
    %51 = tpu.concatenate %49, %50 in 1 : vector<4x255xf32>, vector<4x1xf32> -> vector<4x256xf32>
    %c5_28 = arith.constant 5 : index
    %c0_29 = arith.constant 0 : index
    %52 = vector.load %arg3[%c5_28, %c0_29] : memref<9x256xf32, #tpu.memory_space<vmem>>, vector<1x256xf32>
    %53 = vector.broadcast %52 : vector<1x256xf32> to vector<4x256xf32>
    %54 = arith.mulf %51, %53 : vector<4x256xf32>
    %cst_30 = arith.constant dense<0.000000e+00> : vector<32x256xf32>
    %55 = tpu.matmul %48, %54, %cst_30 {dimension_numbers = #tpu.dot_dimension_numbers<[1], [0], [0], [1], [0, 0, 1, 1], [], []>} : vector<32x4xf32>, vector<4x256xf32>, vector<32x256xf32> -> vector<32x256xf32>
    %56 = arith.addf %46, %55 : vector<32x256xf32>
    %c6 = arith.constant 6 : index
    %c0_31 = arith.constant 0 : index
    %c0_32 = arith.constant 0 : index
    %57 = vector.load %arg4[%c6, %c0_31, %c0_32] : memref<9x32x4xf32, #tpu.memory_space<vmem>>, vector<1x32x4xf32>
    %58 = vector.shape_cast %57 : vector<1x32x4xf32> to vector<32x4xf32>
    %59 = vector.extract_strided_slice %1 {offsets = [0, 15], sizes = [4, 241], strides = [1, 1]} : vector<4x256xf32> to vector<4x241xf32>
    %60 = vector.extract_strided_slice %1 {offsets = [0, 0], sizes = [4, 15], strides = [1, 1]} : vector<4x256xf32> to vector<4x15xf32>
    %61 = tpu.concatenate %59, %60 in 1 : vector<4x241xf32>, vector<4x15xf32> -> vector<4x256xf32>
    %c6_33 = arith.constant 6 : index
    %c0_34 = arith.constant 0 : index
    %62 = vector.load %arg3[%c6_33, %c0_34] : memref<9x256xf32, #tpu.memory_space<vmem>>, vector<1x256xf32>
    %63 = vector.broadcast %62 : vector<1x256xf32> to vector<4x256xf32>
    %64 = arith.mulf %61, %63 : vector<4x256xf32>
    %cst_35 = arith.constant dense<0.000000e+00> : vector<32x256xf32>
    %65 = tpu.matmul %58, %64, %cst_35 {dimension_numbers = #tpu.dot_dimension_numbers<[1], [0], [0], [1], [0, 0, 1, 1], [], []>} : vector<32x4xf32>, vector<4x256xf32>, vector<32x256xf32> -> vector<32x256xf32>
    %66 = arith.addf %56, %65 : vector<32x256xf32>
    %c7 = arith.constant 7 : index
    %c0_36 = arith.constant 0 : index
    %c0_37 = arith.constant 0 : index
    %67 = vector.load %arg4[%c7, %c0_36, %c0_37] : memref<9x32x4xf32, #tpu.memory_space<vmem>>, vector<1x32x4xf32>
    %68 = vector.shape_cast %67 : vector<1x32x4xf32> to vector<32x4xf32>
    %69 = vector.extract_strided_slice %1 {offsets = [0, 16], sizes = [4, 240], strides = [1, 1]} : vector<4x256xf32> to vector<4x240xf32>
    %70 = vector.extract_strided_slice %1 {offsets = [0, 0], sizes = [4, 16], strides = [1, 1]} : vector<4x256xf32> to vector<4x16xf32>
    %71 = tpu.concatenate %69, %70 in 1 : vector<4x240xf32>, vector<4x16xf32> -> vector<4x256xf32>
    %c7_38 = arith.constant 7 : index
    %c0_39 = arith.constant 0 : index
    %72 = vector.load %arg3[%c7_38, %c0_39] : memref<9x256xf32, #tpu.memory_space<vmem>>, vector<1x256xf32>
    %73 = vector.broadcast %72 : vector<1x256xf32> to vector<4x256xf32>
    %74 = arith.mulf %71, %73 : vector<4x256xf32>
    %cst_40 = arith.constant dense<0.000000e+00> : vector<32x256xf32>
    %75 = tpu.matmul %68, %74, %cst_40 {dimension_numbers = #tpu.dot_dimension_numbers<[1], [0], [0], [1], [0, 0, 1, 1], [], []>} : vector<32x4xf32>, vector<4x256xf32>, vector<32x256xf32> -> vector<32x256xf32>
    %76 = arith.addf %66, %75 : vector<32x256xf32>
    %c8 = arith.constant 8 : index
    %c0_41 = arith.constant 0 : index
    %c0_42 = arith.constant 0 : index
    %77 = vector.load %arg4[%c8, %c0_41, %c0_42] : memref<9x32x4xf32, #tpu.memory_space<vmem>>, vector<1x32x4xf32>
    %78 = vector.shape_cast %77 : vector<1x32x4xf32> to vector<32x4xf32>
    %79 = vector.extract_strided_slice %1 {offsets = [0, 17], sizes = [4, 239], strides = [1, 1]} : vector<4x256xf32> to vector<4x239xf32>
    %80 = vector.extract_strided_slice %1 {offsets = [0, 0], sizes = [4, 17], strides = [1, 1]} : vector<4x256xf32> to vector<4x17xf32>
    %81 = tpu.concatenate %79, %80 in 1 : vector<4x239xf32>, vector<4x17xf32> -> vector<4x256xf32>
    %c8_43 = arith.constant 8 : index
    %c0_44 = arith.constant 0 : index
    %82 = vector.load %arg3[%c8_43, %c0_44] : memref<9x256xf32, #tpu.memory_space<vmem>>, vector<1x256xf32>
    %83 = vector.broadcast %82 : vector<1x256xf32> to vector<4x256xf32>
    %84 = arith.mulf %81, %83 : vector<4x256xf32>
    %cst_45 = arith.constant dense<0.000000e+00> : vector<32x256xf32>
    %85 = tpu.matmul %78, %84, %cst_45 {dimension_numbers = #tpu.dot_dimension_numbers<[1], [0], [0], [1], [0, 0, 1, 1], [], []>} : vector<32x4xf32>, vector<4x256xf32>, vector<32x256xf32> -> vector<32x256xf32>
    %86 = arith.addf %76, %85 : vector<32x256xf32>
    %c0_46 = arith.constant 0 : index
    %c0_47 = arith.constant 0 : index
    %87 = vector.load %arg5[%c0_46, %c0_47] : memref<32x1xf32, #tpu.memory_space<vmem>>, vector<32x1xf32>
    %88 = vector.broadcast %87 : vector<32x1xf32> to vector<32x256xf32>
    %89 = arith.addf %86, %88 : vector<32x256xf32>
    %cst_48 = arith.constant 0.000000e+00 : f32
    %90 = vector.broadcast %cst_48 : f32 to vector<32x256xf32>
    %91 = arith.maximumf %89, %90 : vector<32x256xf32>
    %c0_49 = arith.constant 0 : index
    %c0_50 = arith.constant 0 : index
    %92 = vector.load %arg6[%c0_49, %c0_50] : memref<32x32xf32, #tpu.memory_space<vmem>>, vector<32x32xf32>
    %cst_51 = arith.constant dense<0.000000e+00> : vector<32x256xf32>
    %93 = tpu.matmul %92, %91, %cst_51 {dimension_numbers = #tpu.dot_dimension_numbers<[1], [0], [0], [1], [0, 0, 1, 1], [], []>} : vector<32x32xf32>, vector<32x256xf32>, vector<32x256xf32> -> vector<32x256xf32>
    %c0_52 = arith.constant 0 : index
    %c0_53 = arith.constant 0 : index
    %94 = vector.load %arg7[%c0_52, %c0_53] : memref<32x1xf32, #tpu.memory_space<vmem>>, vector<32x1xf32>
    %95 = vector.broadcast %94 : vector<32x1xf32> to vector<32x256xf32>
    %96 = arith.addf %93, %95 : vector<32x256xf32>
    %cst_54 = arith.constant 0.000000e+00 : f32
    %97 = vector.broadcast %cst_54 : f32 to vector<32x256xf32>
    %98 = arith.maximumf %96, %97 : vector<32x256xf32>
    %cst_55 = arith.constant 0.000000e+00 : f32
    %99 = vector.broadcast %cst_55 : f32 to vector<8x256xf32>
    %c0_56 = arith.constant 0 : index
    %c0_57 = arith.constant 0 : index
    %c0_58 = arith.constant 0 : index
    %100 = vector.load %arg8[%c0_56, %c0_57, %c0_58] : memref<9x8x32xf32, #tpu.memory_space<vmem>>, vector<1x8x32xf32>
    %101 = vector.shape_cast %100 : vector<1x8x32xf32> to vector<8x32xf32>
    %102 = vector.extract_strided_slice %98 {offsets = [0, 239], sizes = [32, 17], strides = [1, 1]} : vector<32x256xf32> to vector<32x17xf32>
    %103 = vector.extract_strided_slice %98 {offsets = [0, 0], sizes = [32, 239], strides = [1, 1]} : vector<32x256xf32> to vector<32x239xf32>
    %104 = tpu.concatenate %102, %103 in 1 : vector<32x17xf32>, vector<32x239xf32> -> vector<32x256xf32>
    %c0_59 = arith.constant 0 : index
    %c0_60 = arith.constant 0 : index
    %105 = vector.load %arg3[%c0_59, %c0_60] : memref<9x256xf32, #tpu.memory_space<vmem>>, vector<1x256xf32>
    %106 = vector.broadcast %105 : vector<1x256xf32> to vector<32x256xf32>
    %107 = arith.mulf %104, %106 : vector<32x256xf32>
    %cst_61 = arith.constant dense<0.000000e+00> : vector<8x256xf32>
    %108 = tpu.matmul %101, %107, %cst_61 {dimension_numbers = #tpu.dot_dimension_numbers<[1], [0], [0], [1], [0, 0, 1, 1], [], []>} : vector<8x32xf32>, vector<32x256xf32>, vector<8x256xf32> -> vector<8x256xf32>
    %109 = arith.addf %99, %108 : vector<8x256xf32>
    %c1_62 = arith.constant 1 : index
    %c0_63 = arith.constant 0 : index
    %c0_64 = arith.constant 0 : index
    %110 = vector.load %arg8[%c1_62, %c0_63, %c0_64] : memref<9x8x32xf32, #tpu.memory_space<vmem>>, vector<1x8x32xf32>
    %111 = vector.shape_cast %110 : vector<1x8x32xf32> to vector<8x32xf32>
    %112 = vector.extract_strided_slice %98 {offsets = [0, 240], sizes = [32, 16], strides = [1, 1]} : vector<32x256xf32> to vector<32x16xf32>
    %113 = vector.extract_strided_slice %98 {offsets = [0, 0], sizes = [32, 240], strides = [1, 1]} : vector<32x256xf32> to vector<32x240xf32>
    %114 = tpu.concatenate %112, %113 in 1 : vector<32x16xf32>, vector<32x240xf32> -> vector<32x256xf32>
    %c1_65 = arith.constant 1 : index
    %c0_66 = arith.constant 0 : index
    %115 = vector.load %arg3[%c1_65, %c0_66] : memref<9x256xf32, #tpu.memory_space<vmem>>, vector<1x256xf32>
    %116 = vector.broadcast %115 : vector<1x256xf32> to vector<32x256xf32>
    %117 = arith.mulf %114, %116 : vector<32x256xf32>
    %cst_67 = arith.constant dense<0.000000e+00> : vector<8x256xf32>
    %118 = tpu.matmul %111, %117, %cst_67 {dimension_numbers = #tpu.dot_dimension_numbers<[1], [0], [0], [1], [0, 0, 1, 1], [], []>} : vector<8x32xf32>, vector<32x256xf32>, vector<8x256xf32> -> vector<8x256xf32>
    %119 = arith.addf %109, %118 : vector<8x256xf32>
    %c2_68 = arith.constant 2 : index
    %c0_69 = arith.constant 0 : index
    %c0_70 = arith.constant 0 : index
    %120 = vector.load %arg8[%c2_68, %c0_69, %c0_70] : memref<9x8x32xf32, #tpu.memory_space<vmem>>, vector<1x8x32xf32>
    %121 = vector.shape_cast %120 : vector<1x8x32xf32> to vector<8x32xf32>
    %122 = vector.extract_strided_slice %98 {offsets = [0, 241], sizes = [32, 15], strides = [1, 1]} : vector<32x256xf32> to vector<32x15xf32>
    %123 = vector.extract_strided_slice %98 {offsets = [0, 0], sizes = [32, 241], strides = [1, 1]} : vector<32x256xf32> to vector<32x241xf32>
    %124 = tpu.concatenate %122, %123 in 1 : vector<32x15xf32>, vector<32x241xf32> -> vector<32x256xf32>
    %c2_71 = arith.constant 2 : index
    %c0_72 = arith.constant 0 : index
    %125 = vector.load %arg3[%c2_71, %c0_72] : memref<9x256xf32, #tpu.memory_space<vmem>>, vector<1x256xf32>
    %126 = vector.broadcast %125 : vector<1x256xf32> to vector<32x256xf32>
    %127 = arith.mulf %124, %126 : vector<32x256xf32>
    %cst_73 = arith.constant dense<0.000000e+00> : vector<8x256xf32>
    %128 = tpu.matmul %121, %127, %cst_73 {dimension_numbers = #tpu.dot_dimension_numbers<[1], [0], [0], [1], [0, 0, 1, 1], [], []>} : vector<8x32xf32>, vector<32x256xf32>, vector<8x256xf32> -> vector<8x256xf32>
    %129 = arith.addf %119, %128 : vector<8x256xf32>
    %c3_74 = arith.constant 3 : index
    %c0_75 = arith.constant 0 : index
    %c0_76 = arith.constant 0 : index
    %130 = vector.load %arg8[%c3_74, %c0_75, %c0_76] : memref<9x8x32xf32, #tpu.memory_space<vmem>>, vector<1x8x32xf32>
    %131 = vector.shape_cast %130 : vector<1x8x32xf32> to vector<8x32xf32>
    %132 = vector.extract_strided_slice %98 {offsets = [0, 255], sizes = [32, 1], strides = [1, 1]} : vector<32x256xf32> to vector<32x1xf32>
    %133 = vector.extract_strided_slice %98 {offsets = [0, 0], sizes = [32, 255], strides = [1, 1]} : vector<32x256xf32> to vector<32x255xf32>
    %134 = tpu.concatenate %132, %133 in 1 : vector<32x1xf32>, vector<32x255xf32> -> vector<32x256xf32>
    %c3_77 = arith.constant 3 : index
    %c0_78 = arith.constant 0 : index
    %135 = vector.load %arg3[%c3_77, %c0_78] : memref<9x256xf32, #tpu.memory_space<vmem>>, vector<1x256xf32>
    %136 = vector.broadcast %135 : vector<1x256xf32> to vector<32x256xf32>
    %137 = arith.mulf %134, %136 : vector<32x256xf32>
    %cst_79 = arith.constant dense<0.000000e+00> : vector<8x256xf32>
    %138 = tpu.matmul %131, %137, %cst_79 {dimension_numbers = #tpu.dot_dimension_numbers<[1], [0], [0], [1], [0, 0, 1, 1], [], []>} : vector<8x32xf32>, vector<32x256xf32>, vector<8x256xf32> -> vector<8x256xf32>
    %139 = arith.addf %129, %138 : vector<8x256xf32>
    %c4_80 = arith.constant 4 : index
    %c0_81 = arith.constant 0 : index
    %c0_82 = arith.constant 0 : index
    %140 = vector.load %arg8[%c4_80, %c0_81, %c0_82] : memref<9x8x32xf32, #tpu.memory_space<vmem>>, vector<1x8x32xf32>
    %141 = vector.shape_cast %140 : vector<1x8x32xf32> to vector<8x32xf32>
    %cst_83 = arith.constant dense<0.000000e+00> : vector<8x256xf32>
    %142 = tpu.matmul %141, %98, %cst_83 {dimension_numbers = #tpu.dot_dimension_numbers<[1], [0], [0], [1], [0, 0, 1, 1], [], []>} : vector<8x32xf32>, vector<32x256xf32>, vector<8x256xf32> -> vector<8x256xf32>
    %143 = arith.addf %139, %142 : vector<8x256xf32>
    %c5_84 = arith.constant 5 : index
    %c0_85 = arith.constant 0 : index
    %c0_86 = arith.constant 0 : index
    %144 = vector.load %arg8[%c5_84, %c0_85, %c0_86] : memref<9x8x32xf32, #tpu.memory_space<vmem>>, vector<1x8x32xf32>
    %145 = vector.shape_cast %144 : vector<1x8x32xf32> to vector<8x32xf32>
    %146 = vector.extract_strided_slice %98 {offsets = [0, 1], sizes = [32, 255], strides = [1, 1]} : vector<32x256xf32> to vector<32x255xf32>
    %147 = vector.extract_strided_slice %98 {offsets = [0, 0], sizes = [32, 1], strides = [1, 1]} : vector<32x256xf32> to vector<32x1xf32>
    %148 = tpu.concatenate %146, %147 in 1 : vector<32x255xf32>, vector<32x1xf32> -> vector<32x256xf32>
    %c5_87 = arith.constant 5 : index
    %c0_88 = arith.constant 0 : index
    %149 = vector.load %arg3[%c5_87, %c0_88] : memref<9x256xf32, #tpu.memory_space<vmem>>, vector<1x256xf32>
    %150 = vector.broadcast %149 : vector<1x256xf32> to vector<32x256xf32>
    %151 = arith.mulf %148, %150 : vector<32x256xf32>
    %cst_89 = arith.constant dense<0.000000e+00> : vector<8x256xf32>
    %152 = tpu.matmul %145, %151, %cst_89 {dimension_numbers = #tpu.dot_dimension_numbers<[1], [0], [0], [1], [0, 0, 1, 1], [], []>} : vector<8x32xf32>, vector<32x256xf32>, vector<8x256xf32> -> vector<8x256xf32>
    %153 = arith.addf %143, %152 : vector<8x256xf32>
    %c6_90 = arith.constant 6 : index
    %c0_91 = arith.constant 0 : index
    %c0_92 = arith.constant 0 : index
    %154 = vector.load %arg8[%c6_90, %c0_91, %c0_92] : memref<9x8x32xf32, #tpu.memory_space<vmem>>, vector<1x8x32xf32>
    %155 = vector.shape_cast %154 : vector<1x8x32xf32> to vector<8x32xf32>
    %156 = vector.extract_strided_slice %98 {offsets = [0, 15], sizes = [32, 241], strides = [1, 1]} : vector<32x256xf32> to vector<32x241xf32>
    %157 = vector.extract_strided_slice %98 {offsets = [0, 0], sizes = [32, 15], strides = [1, 1]} : vector<32x256xf32> to vector<32x15xf32>
    %158 = tpu.concatenate %156, %157 in 1 : vector<32x241xf32>, vector<32x15xf32> -> vector<32x256xf32>
    %c6_93 = arith.constant 6 : index
    %c0_94 = arith.constant 0 : index
    %159 = vector.load %arg3[%c6_93, %c0_94] : memref<9x256xf32, #tpu.memory_space<vmem>>, vector<1x256xf32>
    %160 = vector.broadcast %159 : vector<1x256xf32> to vector<32x256xf32>
    %161 = arith.mulf %158, %160 : vector<32x256xf32>
    %cst_95 = arith.constant dense<0.000000e+00> : vector<8x256xf32>
    %162 = tpu.matmul %155, %161, %cst_95 {dimension_numbers = #tpu.dot_dimension_numbers<[1], [0], [0], [1], [0, 0, 1, 1], [], []>} : vector<8x32xf32>, vector<32x256xf32>, vector<8x256xf32> -> vector<8x256xf32>
    %163 = arith.addf %153, %162 : vector<8x256xf32>
    %c7_96 = arith.constant 7 : index
    %c0_97 = arith.constant 0 : index
    %c0_98 = arith.constant 0 : index
    %164 = vector.load %arg8[%c7_96, %c0_97, %c0_98] : memref<9x8x32xf32, #tpu.memory_space<vmem>>, vector<1x8x32xf32>
    %165 = vector.shape_cast %164 : vector<1x8x32xf32> to vector<8x32xf32>
    %166 = vector.extract_strided_slice %98 {offsets = [0, 16], sizes = [32, 240], strides = [1, 1]} : vector<32x256xf32> to vector<32x240xf32>
    %167 = vector.extract_strided_slice %98 {offsets = [0, 0], sizes = [32, 16], strides = [1, 1]} : vector<32x256xf32> to vector<32x16xf32>
    %168 = tpu.concatenate %166, %167 in 1 : vector<32x240xf32>, vector<32x16xf32> -> vector<32x256xf32>
    %c7_99 = arith.constant 7 : index
    %c0_100 = arith.constant 0 : index
    %169 = vector.load %arg3[%c7_99, %c0_100] : memref<9x256xf32, #tpu.memory_space<vmem>>, vector<1x256xf32>
    %170 = vector.broadcast %169 : vector<1x256xf32> to vector<32x256xf32>
    %171 = arith.mulf %168, %170 : vector<32x256xf32>
    %cst_101 = arith.constant dense<0.000000e+00> : vector<8x256xf32>
    %172 = tpu.matmul %165, %171, %cst_101 {dimension_numbers = #tpu.dot_dimension_numbers<[1], [0], [0], [1], [0, 0, 1, 1], [], []>} : vector<8x32xf32>, vector<32x256xf32>, vector<8x256xf32> -> vector<8x256xf32>
    %173 = arith.addf %163, %172 : vector<8x256xf32>
    %c8_102 = arith.constant 8 : index
    %c0_103 = arith.constant 0 : index
    %c0_104 = arith.constant 0 : index
    %174 = vector.load %arg8[%c8_102, %c0_103, %c0_104] : memref<9x8x32xf32, #tpu.memory_space<vmem>>, vector<1x8x32xf32>
    %175 = vector.shape_cast %174 : vector<1x8x32xf32> to vector<8x32xf32>
    %176 = vector.extract_strided_slice %98 {offsets = [0, 17], sizes = [32, 239], strides = [1, 1]} : vector<32x256xf32> to vector<32x239xf32>
    %177 = vector.extract_strided_slice %98 {offsets = [0, 0], sizes = [32, 17], strides = [1, 1]} : vector<32x256xf32> to vector<32x17xf32>
    %178 = tpu.concatenate %176, %177 in 1 : vector<32x239xf32>, vector<32x17xf32> -> vector<32x256xf32>
    %c8_105 = arith.constant 8 : index
    %c0_106 = arith.constant 0 : index
    %179 = vector.load %arg3[%c8_105, %c0_106] : memref<9x256xf32, #tpu.memory_space<vmem>>, vector<1x256xf32>
    %180 = vector.broadcast %179 : vector<1x256xf32> to vector<32x256xf32>
    %181 = arith.mulf %178, %180 : vector<32x256xf32>
    %cst_107 = arith.constant dense<0.000000e+00> : vector<8x256xf32>
    %182 = tpu.matmul %175, %181, %cst_107 {dimension_numbers = #tpu.dot_dimension_numbers<[1], [0], [0], [1], [0, 0, 1, 1], [], []>} : vector<8x32xf32>, vector<32x256xf32>, vector<8x256xf32> -> vector<8x256xf32>
    %183 = arith.addf %173, %182 : vector<8x256xf32>
    %c0_108 = arith.constant 0 : index
    %c0_109 = arith.constant 0 : index
    %184 = vector.load %arg9[%c0_108, %c0_109] : memref<8x1xf32, #tpu.memory_space<vmem>>, vector<8x1xf32>
    %185 = vector.broadcast %184 : vector<8x1xf32> to vector<8x256xf32>
    %186 = arith.addf %183, %185 : vector<8x256xf32>
    %187 = vector.extract_strided_slice %186 {offsets = [0, 0], sizes = [4, 256], strides = [1, 1]} : vector<8x256xf32> to vector<4x256xf32>
    %188 = vector.extract_strided_slice %186 {offsets = [4, 0], sizes = [4, 256], strides = [1, 1]} : vector<8x256xf32> to vector<4x256xf32>
    %cst_110 = arith.constant 0.000000e+00 : f32
    %189 = vector.broadcast %cst_110 : f32 to vector<4x256xf32>
    %190 = arith.maximumf %188, %189 : vector<4x256xf32>
    %191 = math.absf %188 : vector<4x256xf32>
    %cst_111 = arith.constant 0.000000e+00 : f32
    %192 = vector.broadcast %cst_111 : f32 to vector<4x256xf32>
    %193 = arith.subf %192, %191 : vector<4x256xf32>
    %194 = math.exp %193 : vector<4x256xf32>
    %cst_112 = arith.constant 1.000000e+00 : f32
    %195 = vector.broadcast %cst_112 : f32 to vector<4x256xf32>
    %196 = arith.addf %195, %194 : vector<4x256xf32>
    %197 = math.log %196 : vector<4x256xf32>
    %198 = arith.addf %190, %197 : vector<4x256xf32>
    %c0_113 = arith.constant 0 : index
    %c0_114 = arith.constant 0 : index
    %c0_115 = arith.constant 0 : index
    %199 = vector.load %arg2[%c0_113, %c0_114, %c0_115] : memref<1x4x256xf32, #tpu.memory_space<vmem>>, vector<1x4x256xf32>
    %200 = vector.shape_cast %199 : vector<1x4x256xf32> to vector<4x256xf32>
    %201 = arith.addf %200, %187 : vector<4x256xf32>
    %202 = arith.mulf %201, %198 : vector<4x256xf32>
    %c0_116 = arith.constant 0 : index
    %c0_117 = arith.constant 0 : index
    %c0_118 = arith.constant 0 : index
    %203 = vector.load %arg10[%c0_116, %c0_117, %c0_118] : memref<1x4x256xf32, #tpu.memory_space<vmem>>, vector<1x4x256xf32>
    %204 = vector.shape_cast %203 : vector<1x4x256xf32> to vector<4x256xf32>
    %205 = vector.shape_cast %202 : vector<4x256xf32> to vector<1x4x256xf32>
    tpu.vector_store %arg10[%c0_116, %c0_117, %c0_118], %205 {strides = array<i32>} : memref<1x4x256xf32, #tpu.memory_space<vmem>>, vector<1x4x256xf32>,
    %206 = math.log %198 : vector<4x256xf32>
    %207 = vector.shape_cast %206 : vector<4x256xf32> to vector<1x4x256xf32>
    %cst_119 = arith.constant dense<0.000000e+00> : vector<1xf32>
    %208 = vector.multi_reduction <add>, %207, %cst_119 [1, 2] : vector<1x4x256xf32> to vector<1xf32>
    %209 = vector.shape_cast %208 : vector<1xf32> to vector<1x1x1xf32>
    %210 = vector.extract %209[0, 0, 0] : f32 from vector<1x1x1xf32>
    %211 = vector.broadcast %210 : f32 to vector<1x1xf32>
    %c0_120 = arith.constant 0 : index
    %c0_121 = arith.constant 0 : index
    %c0_122 = arith.constant 0 : index
    %212 = vector.load %arg11[%c0_120, %c0_121, %c0_122] : memref<1x1x1xf32, #tpu.memory_space<vmem>>, vector<1x1x1xf32>
    %213 = vector.shape_cast %212 : vector<1x1x1xf32> to vector<1x1xf32>
    %214 = vector.shape_cast %211 : vector<1x1xf32> to vector<1x1x1xf32>
    tpu.vector_store %arg11[%c0_120, %c0_121, %c0_122], %214 {strides = array<i32>} : memref<1x1x1xf32, #tpu.memory_space<vmem>>, vector<1x1x1xf32>,
    return
  }
  func.func @transform_0(%arg0: i32) -> (i32, i32, i32) {
    %c0_i32 = arith.constant 0 : i32
    %c0_i32_0 = arith.constant 0 : i32
    %c0_i32_1 = arith.constant 0 : i32
    return %arg0, %c0_i32, %c0_i32_0 : i32, i32, i32
  }
  func.func @transform_1(%arg0: i32) -> (i32, i32, i32) {
    %c0_i32 = arith.constant 0 : i32
    %c0_i32_0 = arith.constant 0 : i32
    %c0_i32_1 = arith.constant 0 : i32
    return %arg0, %c0_i32, %c0_i32_0 : i32, i32, i32
  }
  func.func @transform_2(%arg0: i32) -> (i32, i32) {
    %c0_i32 = arith.constant 0 : i32
    %c0_i32_0 = arith.constant 0 : i32
    %c0_i32_1 = arith.constant 0 : i32
    return %c0_i32, %c0_i32_0 : i32, i32
  }
  func.func @transform_3(%arg0: i32) -> (i32, i32, i32) {
    %c0_i32 = arith.constant 0 : i32
    %c0_i32_0 = arith.constant 0 : i32
    %c0_i32_1 = arith.constant 0 : i32
    %c0_i32_2 = arith.constant 0 : i32
    return %c0_i32, %c0_i32_0, %c0_i32_1 : i32, i32, i32
  }
  func.func @transform_4(%arg0: i32) -> (i32, i32) {
    %c0_i32 = arith.constant 0 : i32
    %c0_i32_0 = arith.constant 0 : i32
    %c0_i32_1 = arith.constant 0 : i32
    return %c0_i32, %c0_i32_0 : i32, i32
  }
  func.func @transform_5(%arg0: i32) -> (i32, i32) {
    %c0_i32 = arith.constant 0 : i32
    %c0_i32_0 = arith.constant 0 : i32
    %c0_i32_1 = arith.constant 0 : i32
    return %c0_i32, %c0_i32_0 : i32, i32
  }
  func.func @transform_6(%arg0: i32) -> (i32, i32) {
    %c0_i32 = arith.constant 0 : i32
    %c0_i32_0 = arith.constant 0 : i32
    %c0_i32_1 = arith.constant 0 : i32
    return %c0_i32, %c0_i32_0 : i32, i32
  }
  func.func @transform_7(%arg0: i32) -> (i32, i32, i32) {
    %c0_i32 = arith.constant 0 : i32
    %c0_i32_0 = arith.constant 0 : i32
    %c0_i32_1 = arith.constant 0 : i32
    %c0_i32_2 = arith.constant 0 : i32
    return %c0_i32, %c0_i32_0, %c0_i32_1 : i32, i32, i32
  }
  func.func @transform_8(%arg0: i32) -> (i32, i32) {
    %c0_i32 = arith.constant 0 : i32
    %c0_i32_0 = arith.constant 0 : i32
    %c0_i32_1 = arith.constant 0 : i32
    return %c0_i32, %c0_i32_0 : i32, i32
  }
  func.func @transform_9(%arg0: i32) -> (i32, i32, i32) {
    %c0_i32 = arith.constant 0 : i32
    %c0_i32_0 = arith.constant 0 : i32
    %c0_i32_1 = arith.constant 0 : i32
    return %arg0, %c0_i32, %c0_i32_0 : i32, i32, i32
  }
  func.func @transform_10(%arg0: i32) -> (i32, i32, i32) {
    %c0_i32 = arith.constant 0 : i32
    %c0_i32_0 = arith.constant 0 : i32
    %c0_i32_1 = arith.constant 0 : i32
    return %arg0, %c0_i32, %c0_i32_0 : i32, i32, i32
  }
}

</mosaic_0001>

<llo_original>
// kernel: tpu_custom_call.1
$region0: #{tpu_custom_call.1}
  #allocation0 [shape = 'u32[]', space=smem, size = 0x4, offset = 0x4, fixed_abs, tag = 'smem constant byte address 0x4 - core index']
  #allocation1 [shape = 'u32[144,128]{1,0:T(1,128)}', space=vmem, size = 0x12000, scoped, tag = 'internal scratch']
  %s0 = inlined_call_operand.vmem [shape: f32[2,4,256], index: 0, kind: input, shape index: {}]
  %s1 = inlined_call_operand.vmem [shape: f32[2,4,256], index: 1, kind: input, shape index: {}]
  %s2 = inlined_call_operand.vmem [shape: f32[9,256], index: 2, kind: input, shape index: {}]
  %s3 = inlined_call_operand.vmem [shape: f32[9,32,4], index: 3, kind: input, shape index: {}]
  %s4 = inlined_call_operand.vmem [shape: f32[32,1], index: 4, kind: input, shape index: {}]
  %s5 = inlined_call_operand.vmem [shape: f32[32,32], index: 5, kind: input, shape index: {}]
  %s6 = inlined_call_operand.vmem [shape: f32[32,1], index: 6, kind: input, shape index: {}]
  %s7 = inlined_call_operand.vmem [shape: f32[9,8,32], index: 7, kind: input, shape index: {}]
  %s8 = inlined_call_operand.vmem [shape: f32[8,1], index: 8, kind: input, shape index: {}]
  %s9 = inlined_call_operand.hbm [shape: f32[2,4,256], index: 9, kind: output, shape index: {0}]
  %s10 = inlined_call_operand.vmem [shape: f32[2,1,1], index: 10, kind: output, shape index: {1}]
  %11 = xla_tuple %s9, %s10
  %s12 = sld [smem:[#allocation0]]
  $region77: #{tpu_custom_call.1} parent=0
    _
  %s14 = ssub.s32 1, %s12
  %s15 = scalar_select 0, %s14, %s12
  $region1: #{tpu_custom_call.1} parent=0
    #allocation2 [shape = 'u8[8192]{0}', space=vmem, size = 0x2000, scoped, tag = 'output window, operand 0']
    #allocation3 [shape = 's32[2]{0}', space=sflag, size = 0x8, scoped, tag = 'scoped memory for tpu_custom_call.1']
    %16 = vsyncpa [#allocation3], 0
    %s17 = scalar_lea.sflag [#allocation3], 1
    %18 = vsyncpa %s17, 0
    loop: start=0, step=1, limit=4
    $region2: #{tpu_custom_call.1} parent=1 // loop_pre_header
      _
    $region3: #{tpu_custom_call.1} parent=1 // loop_header
      %s20 = sphi 0, %s24
      %p21 = scmp.ge.s32.totalorder %s20, 4
      %s30 = sphi 0, %s32
      %s33 = sphi 0, %s30
      %s34 = sphi 0, %s33
      %s50 = sphi 0, %s34
      %s56 = sphi 0, %s58
      %s59 = sphi 0, %s56
      %s60 = sphi 0, %s59
      %s76 = sphi 0, %s60
      %s80 = sphi 0, %s80
      %s82 = sphi 0, %s80
      %s83 = sphi 0, %s82
      %s97 = sphi 0, %s83
      %s101 = sphi 0, %s101
      %s103 = sphi 0, %s101
      %s104 = sphi 0, %s103
      %s118 = sphi 0, %s104
      %s122 = sphi 0, %s122
      %s124 = sphi 0, %s122
      %s125 = sphi 0, %s124
      %s139 = sphi 0, %s125
      %s143 = sphi 0, %s143
      %s145 = sphi 0, %s143
      %s146 = sphi 0, %s145
      %s160 = sphi 0, %s146
      %s164 = sphi 0, %s164
      %s166 = sphi 0, %s164
      %s167 = sphi 0, %s166
      %s181 = sphi 0, %s167
      %s185 = sphi 0, %s185
      %s187 = sphi 0, %s185
      %s188 = sphi 0, %s187
      %s202 = sphi 0, %s188
      %s206 = sphi 0, %s206
      %s208 = sphi 0, %s206
      %s209 = sphi 0, %s208
      %s223 = sphi 0, %s209
      %s229 = sphi 0, %s231
      %s232 = sphi 0, %s229
      %s233 = sphi 0, %s232
      %s249 = sphi 0, %s233
      %s255 = sphi 0, %s257
      %s258 = sphi 0, %s255
      %s259 = sphi 0, %s258
      %s275 = sphi 0, %s259
    $region4: #{tpu_custom_call.1} parent=1 // loop_header_branch
      %23 = sbr.rel (%p21) target = $region8
    $region5: #{tpu_custom_call.1} parent=1 // loop_body
      %s25 = ssub.s32 %s20, 1
      %s26 = ssub.s32 %s20, 2
      %s27 = sadd.s32 %s20, 1
      %s28 = ssub.s32 %s20, %s27
      %p29 = scmp.eq.s32.totalorder %s28, 0
      %s31 = sadd.s32 %s30, 1
      %s32 = scalar_select %p29, %s30, %s31
      %p35 = pneg %p29
      %p36 = scmp.eq.s32.totalorder %s20, 1
      %p37 = por %p35, %p36
      %p38 = scmp.ne.s32.totalorder %s30, %s33
      %p39 = scmp.eq.s32.totalorder %s20, 0
      %p40 = por %p38, %p39
      %p41 = scmp.ne.s32.totalorder %s30, %s33
      %p42 = scmp.eq.s32.totalorder %s25, 1
      %p43 = por %p41, %p42
      %p44 = scmp.ne.s32.totalorder %s33, %s34
      %p45 = scmp.eq.s32.totalorder %s25, 0
      %p46 = por %p44, %p45
      %p47 = scmp.ne.s32.totalorder %s33, %s34
      %p48 = scmp.eq.s32.totalorder %s26, 1
      %p49 = por %p47, %p48
      %p51 = scmp.ne.s32.totalorder %s34, %s50
      %p52 = scmp.eq.s32.totalorder %s26, 0
      %p53 = por %p51, %p52
      %s54 = ssub.s32 %s20, %s27
      %p55 = scmp.eq.s32.totalorder %s54, 0
      %s57 = sadd.s32 %s56, 1
      %s58 = scalar_select %p55, %s56, %s57
      %p61 = pneg %p55
      %p62 = scmp.eq.s32.totalorder %s20, 1
      %p63 = por %p61, %p62
      %p64 = scmp.ne.s32.totalorder %s56, %s59
      %p65 = scmp.eq.s32.totalorder %s20, 0
      %p66 = por %p64, %p65
      %p67 = scmp.ne.s32.totalorder %s56, %s59
      %p68 = scmp.eq.s32.totalorder %s25, 1
      %p69 = por %p67, %p68
      %p70 = scmp.ne.s32.totalorder %s59, %s60
      %p71 = scmp.eq.s32.totalorder %s25, 0
      %p72 = por %p70, %p71
      %p73 = scmp.ne.s32.totalorder %s59, %s60
      %p74 = scmp.eq.s32.totalorder %s26, 1
      %p75 = por %p73, %p74
      %p77 = scmp.ne.s32.totalorder %s60, %s76
      %p78 = scmp.eq.s32.totalorder %s26, 0
      %p79 = por %p77, %p78
      %s81 = sadd.s32 %s80, 1
      %p84 = scmp.eq.s32.totalorder %s20, 1
      %p85 = scmp.ne.s32.totalorder %s80, %s82
      %p86 = scmp.eq.s32.totalorder %s20, 0
      %p87 = por %p85, %p86
      %p88 = scmp.ne.s32.totalorder %s80, %s82
      %p89 = scmp.eq.s32.totalorder %s25, 1
      %p90 = por %p88, %p89
      %p91 = scmp.ne.s32.totalorder %s82, %s83
      %p92 = scmp.eq.s32.totalorder %s25, 0
      %p93 = por %p91, %p92
      %p94 = scmp.ne.s32.totalorder %s82, %s83
      %p95 = scmp.eq.s32.totalorder %s26, 1
      %p96 = por %p94, %p95
      %p98 = scmp.ne.s32.totalorder %s83, %s97
      %p99 = scmp.eq.s32.totalorder %s26, 0
      %p100 = por %p98, %p99
      %s102 = sadd.s32 %s101, 1
      %p105 = scmp.eq.s32.totalorder %s20, 1
      %p106 = scmp.ne.s32.totalorder %s101, %s103
      %p107 = scmp.eq.s32.totalorder %s20, 0
      %p108 = por %p106, %p107
      %p109 = scmp.ne.s32.totalorder %s101, %s103
      %p110 = scmp.eq.s32.totalorder %s25, 1
      %p111 = por %p109, %p110
      %p112 = scmp.ne.s32.totalorder %s103, %s104
      %p113 = scmp.eq.s32.totalorder %s25, 0
      %p114 = por %p112, %p113
      %p115 = scmp.ne.s32.totalorder %s103, %s104
      %p116 = scmp.eq.s32.totalorder %s26, 1
      %p117 = por %p115, %p116
      %p119 = scmp.ne.s32.totalorder %s104, %s118
      %p120 = scmp.eq.s32.totalorder %s26, 0
      %p121 = por %p119, %p120
      %s123 = sadd.s32 %s122, 1
      %p126 = scmp.eq.s32.totalorder %s20, 1
      %p127 = scmp.ne.s32.totalorder %s122, %s124
      %p128 = scmp.eq.s32.totalorder %s20, 0
      %p129 = por %p127, %p128
      %p130 = scmp.ne.s32.totalorder %s122, %s124
      %p131 = scmp.eq.s32.totalorder %s25, 1
      %p132 = por %p130, %p131
      %p133 = scmp.ne.s32.totalorder %s124, %s125
      %p134 = scmp.eq.s32.totalorder %s25, 0
      %p135 = por %p133, %p134
      %p136 = scmp.ne.s32.totalorder %s124, %s125
      %p137 = scmp.eq.s32.totalorder %s26, 1
      %p138 = por %p136, %p137
      %p140 = scmp.ne.s32.totalorder %s125, %s139
      %p141 = scmp.eq.s32.totalorder %s26, 0
      %p142 = por %p140, %p141
      %s144 = sadd.s32 %s143, 1
      %p147 = scmp.eq.s32.totalorder %s20, 1
      %p148 = scmp.ne.s32.totalorder %s143, %s145
      %p149 = scmp.eq.s32.totalorder %s20, 0
      %p150 = por %p148, %p149
      %p151 = scmp.ne.s32.totalorder %s143, %s145
      %p152 = scmp.eq.s32.totalorder %s25, 1
      %p153 = por %p151, %p152
      %p154 = scmp.ne.s32.totalorder %s145, %s146
      %p155 = scmp.eq.s32.totalorder %s25, 0
      %p156 = por %p154, %p155
      %p157 = scmp.ne.s32.totalorder %s145, %s146
      %p158 = scmp.eq.s32.totalorder %s26, 1
      %p159 = por %p157, %p158
      %p161 = scmp.ne.s32.totalorder %s146, %s160
      %p162 = scmp.eq.s32.totalorder %s26, 0
      %p163 = por %p161, %p162
      %s165 = sadd.s32 %s164, 1
      %p168 = scmp.eq.s32.totalorder %s20, 1
      %p169 = scmp.ne.s32.totalorder %s164, %s166
      %p170 = scmp.eq.s32.totalorder %s20, 0
      %p171 = por %p169, %p170
      %p172 = scmp.ne.s32.totalorder %s164, %s166
      %p173 = scmp.eq.s32.totalorder %s25, 1
      %p174 = por %p172, %p173
      %p175 = scmp.ne.s32.totalorder %s166, %s167
      %p176 = scmp.eq.s32.totalorder %s25, 0
      %p177 = por %p175, %p176
      %p178 = scmp.ne.s32.totalorder %s166, %s167
      %p179 = scmp.eq.s32.totalorder %s26, 1
      %p180 = por %p178, %p179
      %p182 = scmp.ne.s32.totalorder %s167, %s181
      %p183 = scmp.eq.s32.totalorder %s26, 0
      %p184 = por %p182, %p183
      %s186 = sadd.s32 %s185, 1
      %p189 = scmp.eq.s32.totalorder %s20, 1
      %p190 = scmp.ne.s32.totalorder %s185, %s187
      %p191 = scmp.eq.s32.totalorder %s20, 0
      %p192 = por %p190, %p191
      %p193 = scmp.ne.s32.totalorder %s185, %s187
      %p194 = scmp.eq.s32.totalorder %s25, 1
      %p195 = por %p193, %p194
      %p196 = scmp.ne.s32.totalorder %s187, %s188
      %p197 = scmp.eq.s32.totalorder %s25, 0
      %p198 = por %p196, %p197
      %p199 = scmp.ne.s32.totalorder %s187, %s188
      %p200 = scmp.eq.s32.totalorder %s26, 1
      %p201 = por %p199, %p200
      %p203 = scmp.ne.s32.totalorder %s188, %s202
      %p204 = scmp.eq.s32.totalorder %s26, 0
      %p205 = por %p203, %p204
      %s207 = sadd.s32 %s206, 1
      %p210 = scmp.eq.s32.totalorder %s20, 1
      %p211 = scmp.ne.s32.totalorder %s206, %s208
      %p212 = scmp.eq.s32.totalorder %s20, 0
      %p213 = por %p211, %p212
      %p214 = scmp.ne.s32.totalorder %s206, %s208
      %p215 = scmp.eq.s32.totalorder %s25, 1
      %p216 = por %p214, %p215
      %p217 = scmp.ne.s32.totalorder %s208, %s209
      %p218 = scmp.eq.s32.totalorder %s25, 0
      %p219 = por %p217, %p218
      %p220 = scmp.ne.s32.totalorder %s208, %s209
      %p221 = scmp.eq.s32.totalorder %s26, 1
      %p222 = por %p220, %p221
      %p224 = scmp.ne.s32.totalorder %s209, %s223
      %p225 = scmp.eq.s32.totalorder %s26, 0
      %p226 = por %p224, %p225
      %s227 = ssub.s32 %s20, %s27
      %p228 = scmp.eq.s32.totalorder %s227, 0
      %s230 = sadd.s32 %s229, 1
      %s231 = scalar_select %p228, %s229, %s230
      %p234 = pneg %p228
      %p235 = scmp.eq.s32.totalorder %s20, 1
      %p236 = por %p234, %p235
      %p237 = scmp.ne.s32.totalorder %s229, %s232
      %p238 = scmp.eq.s32.totalorder %s20, 0
      %p239 = por %p237, %p238
      %p240 = scmp.ne.s32.totalorder %s229, %s232
      %p241 = scmp.eq.s32.totalorder %s25, 1
      %p242 = por %p240, %p241
      %p243 = scmp.ne.s32.totalorder %s232, %s233
      %p244 = scmp.eq.s32.totalorder %s25, 0
      %p245 = por %p243, %p244
      %p246 = scmp.ne.s32.totalorder %s232, %s233
      %p247 = scmp.eq.s32.totalorder %s26, 1
      %p248 = por %p246, %p247
      %p250 = scmp.ne.s32.totalorder %s233, %s249
      %p251 = scmp.eq.s32.totalorder %s26, 0
      %p252 = por %p250, %p251
      %s253 = ssub.s32 %s20, %s27
      %p254 = scmp.eq.s32.totalorder %s253, 0
      %s256 = sadd.s32 %s255, 1
      %s257 = scalar_select %p254, %s255, %s256
      %p260 = pneg %p254
      %p261 = scmp.eq.s32.totalorder %s20, 1
      %p262 = por %p260, %p261
      %p263 = scmp.ne.s32.totalorder %s255, %s258
      %p264 = scmp.eq.s32.totalorder %s20, 0
      %p265 = por %p263, %p264
      %p266 = scmp.ne.s32.totalorder %s255, %s258
      %p267 = scmp.eq.s32.totalorder %s25, 1
      %p268 = por %p266, %p267
      %p269 = scmp.ne.s32.totalorder %s258, %s259
      %p270 = scmp.eq.s32.totalorder %s25, 0
      %p271 = por %p269, %p270
      %p272 = scmp.ne.s32.totalorder %s258, %s259
      %p273 = scmp.eq.s32.totalorder %s26, 1
      %p274 = por %p272, %p273
      %p276 = scmp.ne.s32.totalorder %s259, %s275
      %p277 = scmp.eq.s32.totalorder %s26, 0
      %p278 = por %p276, %p277
      %p279 = scmp.le.s32.totalorder 1, %s20
      %p280 = scmp.lt.s32.totalorder %s20, 3
      %p281 = pnand %p279, %p280
      %p282 = pneg %p281
      // Predicated region
      $region9: #{tpu_custom_call.1} parent=5 // pred_check
        _
      $region10: #{tpu_custom_call.1} parent=5 // pred_check_branch
        %284 = sbr.rel (%p281) target = $region12
      $region11: #{tpu_custom_call.1} parent=5 // pred_region
        %s285 = ssub.s32 %s20, 1
        // Predicated region
        $region13: #{tpu_custom_call.1} parent=11 // pred_check
          %p286 = pneg %p93
        $region14: #{tpu_custom_call.1} parent=11 // pred_check_branch
          %288 = sbr.rel (%p286) target = $region16
        $region15: #{tpu_custom_call.1} parent=11 // pred_region
          _
        $region16: #{tpu_custom_call.1} parent=11 // pred_fallthru
          _
        // Predicated region
        $region17: #{tpu_custom_call.1} parent=11 // pred_check
          %p289 = pneg %p114
        $region18: #{tpu_custom_call.1} parent=11 // pred_check_branch
          %291 = sbr.rel (%p289) target = $region20
        $region19: #{tpu_custom_call.1} parent=11 // pred_region
          _
        $region20: #{tpu_custom_call.1} parent=11 // pred_fallthru
          _
        // Predicated region
        $region21: #{tpu_custom_call.1} parent=11 // pred_check
          %p292 = pneg %p135
        $region22: #{tpu_custom_call.1} parent=11 // pred_check_branch
          %294 = sbr.rel (%p292) target = $region24
        $region23: #{tpu_custom_call.1} parent=11 // pred_region
          _
        $region24: #{tpu_custom_call.1} parent=11 // pred_fallthru
          _
        // Predicated region
        $region25: #{tpu_custom_call.1} parent=11 // pred_check
          %p295 = pneg %p156
        $region26: #{tpu_custom_call.1} parent=11 // pred_check_branch
          %297 = sbr.rel (%p295) target = $region28
        $region27: #{tpu_custom_call.1} parent=11 // pred_region
          _
        $region28: #{tpu_custom_call.1} parent=11 // pred_fallthru
          _
        // Predicated region
        $region29: #{tpu_custom_call.1} parent=11 // pred_check
          %p298 = pneg %p177
        $region30: #{tpu_custom_call.1} parent=11 // pred_check_branch
          %300 = sbr.rel (%p298) target = $region32
        $region31: #{tpu_custom_call.1} parent=11 // pred_region
          _
        $region32: #{tpu_custom_call.1} parent=11 // pred_fallthru
          _
        // Predicated region
        $region33: #{tpu_custom_call.1} parent=11 // pred_check
          %p301 = pneg %p198
        $region34: #{tpu_custom_call.1} parent=11 // pred_check_branch
          %303 = sbr.rel (%p301) target = $region36
        $region35: #{tpu_custom_call.1} parent=11 // pred_region
          _
        $region36: #{tpu_custom_call.1} parent=11 // pred_fallthru
          _
        // Predicated region
        $region37: #{tpu_custom_call.1} parent=11 // pred_check
          %p304 = pneg %p219
        $region38: #{tpu_custom_call.1} parent=11 // pred_check_branch
          %306 = sbr.rel (%p304) target = $region40
        $region39: #{tpu_custom_call.1} parent=11 // pred_region
          _
        $region40: #{tpu_custom_call.1} parent=11 // pred_fallthru
          _
      $region12: #{tpu_custom_call.1} parent=5 // pred_fallthru
        _
      %p307 = scmp.lt.s32.totalorder %s20, 2
      // Predicated region
      $region41: #{tpu_custom_call.1} parent=5 // pred_check
        %p308 = pneg %p307
      $region42: #{tpu_custom_call.1} parent=5 // pred_check_branch
        %310 = sbr.rel (%p308) target = $region44
      $region43: #{tpu_custom_call.1} parent=5 // pred_region
        // Predicated region
        $region45: #{tpu_custom_call.1} parent=43 // pred_check
          %p311 = pneg %p40
        $region46: #{tpu_custom_call.1} parent=43 // pred_check_branch
          %313 = sbr.rel (%p311) target = $region48
        $region47: #{tpu_custom_call.1} parent=43 // pred_region
          %p314 = scmp.lt.s32.totalorder %s20, 1
          %s315 = scalar_select %p314, %s20, 1
          %s316 = smul.addr %s315, 2
          %s317 = smul.addr %s316, 4
          %s318 = scalar_lea.vmem %s0, %s317
        $region48: #{tpu_custom_call.1} parent=43 // pred_fallthru
          _
        // Predicated region
        $region49: #{tpu_custom_call.1} parent=43 // pred_check
          %p319 = pneg %p66
        $region50: #{tpu_custom_call.1} parent=43 // pred_check_branch
          %321 = sbr.rel (%p319) target = $region52
        $region51: #{tpu_custom_call.1} parent=43 // pred_region
          %p322 = scmp.lt.s32.totalorder %s20, 1
          %s323 = scalar_select %p322, %s20, 1
          %s324 = smul.addr %s323, 2
          %s325 = smul.addr %s324, 4
          %s326 = scalar_lea.vmem %s1, %s325
        $region52: #{tpu_custom_call.1} parent=43 // pred_fallthru
          _
      $region44: #{tpu_custom_call.1} parent=5 // pred_fallthru
        _
      %p327 = scmp.le.s32.totalorder 1, %s20
      %p328 = scmp.lt.s32.totalorder %s20, 3
      %p329 = pnand %p327, %p328
      %p330 = pneg %p329
      // Predicated region
      $region53: #{tpu_custom_call.1} parent=5 // pred_check
        _
      $region54: #{tpu_custom_call.1} parent=5 // pred_check_branch
        %332 = sbr.rel (%p329) target = $region56
      $region55: #{tpu_custom_call.1} parent=5 // pred_region
        %s333 = ssub.s32 %s20, 1
        %p334 = scmp.lt.s32.totalorder %s25, 1
        %s335 = scalar_select %p334, %s25, 1
        %s336 = smul.addr %s335, 2
        %s337 = smul.addr %s336, 4
        %s338 = scalar_lea.vmem %s0, %s337
        %p339 = pneg %p46
        %p340 = pneg %p43
        %p341 = scmp.lt.s32.totalorder %s25, 1
        %s342 = scalar_select %p341, %s25, 1
        %s343 = smul.addr %s342, 2
        %s344 = smul.addr %s343, 4
        %s345 = scalar_lea.vmem %s1, %s344
        %p346 = pneg %p72
        %p347 = pneg %p69
        %p348 = pneg %p93
        %p349 = pneg %p90
        %p350 = pneg %p114
        %p351 = pneg %p111
        %p352 = pneg %p135
        %p353 = pneg %p132
        %p354 = pneg %p156
        %p355 = pneg %p153
        %p356 = pneg %p177
        %p357 = pneg %p174
        %p358 = pneg %p198
        %p359 = pneg %p195
        %p360 = pneg %p219
        %p361 = pneg %p216
        %p362 = pneg %p245
        %p363 = pneg %p242
        %s364 = sand.u32 %s232, 1
        %s365 = scalar_lea.sflag [#allocation3], %s364
        %s366 = sand.u32 %s232, 1
        %s367 = smul.addr %s366, 8
        %s368 = scalar_lea.vmem [#allocation2], %s367
        %p369 = pneg %p271
        %p370 = pneg %p268
        %p371 = scmp.lt.s32.totalorder %s25, 1
        %s372 = scalar_select %p371, %s25, 1
        %s373 = scalar_lea.vmem %s10, %s372
        %p374 = scmp.lt.s32.totalorder %s25, 1
        %s375 = scalar_select %p374, %s25, 1
        %s376 = smul.addr %s375, 2
        %s377 = smul.addr %s376, 4
        %s378 = scalar_lea.vmem %s0, %s377
        %p379 = scmp.lt.s32.totalorder %s25, 1
        %s380 = scalar_select %p379, %s25, 1
        %s381 = smul.addr %s380, 2
        %s382 = smul.addr %s381, 4
        %s383 = scalar_lea.vmem %s1, %s382
        %p384 = scmp.lt.s32.totalorder %s25, 1
        %s385 = scalar_select %p384, %s25, 1
        %s386 = scalar_lea.vmem %s10, %s385
        %v387 = vld [vmem:[%s378] sm:$0xff]
        %v388 = vld [vmem:[%s3] sm:$0xff]
        %v389 = vld [vmem:[%s3 + $0x8] sm:$0xff]
        %v390 = vld [vmem:[%s3 + $0x10] sm:$0xff]
        %v391 = vld [vmem:[%s3 + $0x18] sm:$0xff]
        %v393 = vcombine.high %v387, %v387
        %394 = vrot.lane.b32.xlu0 %v393, 17
        %v395 = vpop.permute.xlu0 %394
        %397 = vrot.lane.b32.xlu0 %v387, 17
        %v398 = vpop.permute.xlu0 %397
        %vm399 = vcmask 138240
        %v400 = vsel %vm399, %v398, %v395
        %v403 = vsel %vm399, %v395, %v398
        %v404 = vld [vmem:[%s2] ss:$8 sm:$0x3]
        %v406 = vlaneseq
        %v407 = vshrl.u32 %v406, 7
        %v408 = vsub.s32 0, %v407
        %v409 = vrot.slane %v404, %v408
        %v410 = vlaneseq
        %v411 = vshrl.u32 %v410, 7
        %v412 = vsub.s32 1, %v411
        %v413 = vrot.slane %v404, %v412
        %v416 = vmul.f32 %v403, %v409
        %v417 = vmul.f32 %v400, %v413
        %s418 = scalar_lea.vmem %s3, 32
        %v419 = vld [vmem:[%s418] sm:$0xff]
        %v420 = vld [vmem:[%s418 + $0x8] sm:$0xff]
        %v421 = vld [vmem:[%s418 + $0x10] sm:$0xff]
        %v422 = vld [vmem:[%s418 + $0x18] sm:$0xff]
        %423 = vrot.lane.b32.xlu0 %v393, 16
        %v424 = vpop.permute.xlu0 %423
        %426 = vrot.lane.b32.xlu0 %v387, 16
        %v427 = vpop.permute.xlu0 %426
        %vm428 = vcmask 130048
        %v429 = vsel %vm428, %v427, %v424
        %v432 = vsel %vm428, %v424, %v427
        %s433 = scalar_lea.vmem %s2, 1
        %v434 = vld [vmem:[%s433] ss:$8 sm:$0x3]
        %v436 = vlaneseq
        %v437 = vshrl.u32 %v436, 7
        %v438 = vsub.s32 0, %v437
        %v439 = vrot.slane %v434, %v438
        %v440 = vlaneseq
        %v441 = vshrl.u32 %v440, 7
        %v442 = vsub.s32 1, %v441
        %v443 = vrot.slane %v434, %v442
        %v446 = vmul.f32 %v432, %v439
        %v447 = vmul.f32 %v429, %v443
        %vm448 = vcmask 31744
        %v450 = vsel %vm448, %v419, 0
        %v453 = vsel %vm448, %v420, 0
        %v456 = vsel %vm448, %v421, 0
        %v459 = vsel %vm448, %v422, 0
        %vm461 = vcmask 1043456
        %v463 = vsel %vm461, %v446, 0
        %v466 = vsel %vm461, %v447, 0
        %468 = vmatprep.subr.mxu0 0.0
        %469 = vmatpush1.msra.mxu0 0.0
        %470 = vmatprep.subr.mxu0 0.0
        %471 = vmatpush1.msra.mxu0 0.0
        %472 = vmatprep.subr.mxu0 0.0
        %473 = vmatpush1.msra.mxu0 0.0
        %474 = vmatprep.subr.mxu0 0.0
        %475 = vmatpush1.msra.mxu0 0.0
        %476 = vmatprep.subr.mxu0 0.0
        %477 = vmatpush1.msra.mxu0 0.0
        %478 = vmatprep.subr.mxu0 0.0
        %479 = vmatpush1.msra.mxu0 0.0
        %480 = vmatprep.subr.mxu0 0.0
        %481 = vmatpush1.msra.mxu0 0.0
        %482 = vmatprep.subr.mxu0 0.0
        %483 = vmatpush1.msra.mxu0 0.0
        %484 = vmatprep.subr.mxu0 0.0
        %485 = vmatpush1.msra.mxu0 0.0
        %486 = vmatprep.subr.mxu0 0.0
        %487 = vmatpush1.msra.mxu0 0.0
        %488 = vmatprep.subr.mxu0 0.0
        %489 = vmatpush1.msra.mxu0 0.0
        %490 = vmatprep.subr.mxu0 0.0
        %491 = vmatpush1.msra.mxu0 0.0
        %492 = vmatprep.subr.mxu0 0.0
        %493 = vmatpush1.msra.mxu0 0.0
        %494 = vmatprep.subr.mxu0 0.0
        %495 = vmatpush1.msra.mxu0 0.0
        %496 = vmatprep.subr.mxu0 0.0
        %497 = vmatpush1.msra.mxu0 0.0
        %498 = vmatprep.subr.mxu0 %v466
        %499 = vmatpush1.msra.mxu0 %v463
        %500 = vmatprep.subr.mxu0 0.0
        %501 = vmatpush2.msra.mxu0 0.0
        %502 = vmatprep.subr.mxu0 0.0
        %503 = vmatpush2.msra.mxu0 0.0
        %504 = vmatprep.subr.mxu0 0.0
        %505 = vmatpush2.msra.mxu0 0.0
        %506 = vmatprep.subr.mxu0 0.0
        %507 = vmatpush2.msra.mxu0 0.0
        %508 = vmatprep.subr.mxu0 0.0
        %509 = vmatpush2.msra.mxu0 0.0
        %510 = vmatprep.subr.mxu0 0.0
        %511 = vmatpush2.msra.mxu0 0.0
        %512 = vmatprep.subr.mxu0 0.0
        %513 = vmatpush2.msra.mxu0 0.0
        %514 = vmatprep.subr.mxu0 0.0
        %515 = vmatpush2.msra.mxu0 0.0
        %516 = vmatprep.subr.mxu0 0.0
        %517 = vmatpush2.msra.mxu0 0.0
        %518 = vmatprep.subr.mxu0 0.0
        %519 = vmatpush2.msra.mxu0 0.0
        %520 = vmatprep.subr.mxu0 0.0
        %521 = vmatpush2.msra.mxu0 0.0
        %522 = vmatprep.subr.mxu0 0.0
        %523 = vmatpush2.msra.mxu0 0.0
        %524 = vmatprep.subr.mxu0 0.0
        %525 = vmatpush2.msra.mxu0 0.0
        %526 = vmatprep.subr.mxu0 0.0
        %527 = vmatpush2.msra.mxu0 0.0
        %528 = vmatprep.subr.mxu0 0.0
        %529 = vmatpush2.msra.mxu0 0.0
        %530 = vmatprep.subr.mxu0 0.0
        %531 = vmatpush2.msra.mxu0 0.0
        %532 = vmatprep.mubr.f32.mxu0 0.0
        %533 = vmatmul.mubr.f32.gmra.mxu0 %v450
        %v534 = vpop.f32.mrf.mxu0
        %v535 = vadd.f32 0.0, %v534
        %v536 = vpop.f32.mrf.mxu0
        %v537 = vadd.f32 0.0, %v536
        %538 = vmatprep.mubr.f32.mxu0 0.0
        %539 = vmatmul.mubr.f32.gmra.mxu0 %v453
        %v540 = vpop.f32.mrf.mxu0
        %v541 = vadd.f32 0.0, %v540
        %v542 = vpop.f32.mrf.mxu0
        %v543 = vadd.f32 0.0, %v542
        %544 = vmatprep.mubr.f32.mxu0 0.0
        %545 = vmatmul.mubr.f32.gmra.mxu0 %v456
        %v546 = vpop.f32.mrf.mxu0
        %v547 = vadd.f32 0.0, %v546
        %v548 = vpop.f32.mrf.mxu0
        %v549 = vadd.f32 0.0, %v548
        %550 = vmatprep.mubr.f32.mxu0 0.0
        %551 = vmatmul.mubr.f32.gmra.mxu0 %v459
        %v552 = vpop.f32.mrf.mxu0
        %v553 = vadd.f32 0.0, %v552
        %v554 = vpop.f32.mrf.mxu0
        %v555 = vadd.f32 0.0, %v554
        %556 = vdwg.mxu0
        %v558 = vsel %vm448, %v388, 0
        %v561 = vsel %vm448, %v389, 0
        %v564 = vsel %vm448, %v390, 0
        %v567 = vsel %vm448, %v391, 0
        %v570 = vsel %vm461, %v416, 0
        %v573 = vsel %vm461, %v417, 0
        %575 = vmatprep.subr.mxu0 0.0
        %576 = vmatpush1.msra.mxu0 0.0
        %577 = vmatprep.subr.mxu0 0.0
        %578 = vmatpush1.msra.mxu0 0.0
        %579 = vmatprep.subr.mxu0 0.0
        %580 = vmatpush1.msra.mxu0 0.0
        %581 = vmatprep.subr.mxu0 0.0
        %582 = vmatpush1.msra.mxu0 0.0
        %583 = vmatprep.subr.mxu0 0.0
        %584 = vmatpush1.msra.mxu0 0.0
        %585 = vmatprep.subr.mxu0 0.0
        %586 = vmatpush1.msra.mxu0 0.0
        %587 = vmatprep.subr.mxu0 0.0
        %588 = vmatpush1.msra.mxu0 0.0
        %589 = vmatprep.subr.mxu0 0.0
        %590 = vmatpush1.msra.mxu0 0.0
        %591 = vmatprep.subr.mxu0 0.0
        %592 = vmatpush1.msra.mxu0 0.0
        %593 = vmatprep.subr.mxu0 0.0
        %594 = vmatpush1.msra.mxu0 0.0
        %595 = vmatprep.subr.mxu0 0.0
        %596 = vmatpush1.msra.mxu0 0.0
        %597 = vmatprep.subr.mxu0 0.0
        %598 = vmatpush1.msra.mxu0 0.0
        %599 = vmatprep.subr.mxu0 0.0
        %600 = vmatpush1.msra.mxu0 0.0
        %601 = vmatprep.subr.mxu0 0.0
        %602 = vmatpush1.msra.mxu0 0.0
        %603 = vmatprep.subr.mxu0 0.0
        %604 = vmatpush1.msra.mxu0 0.0
        %605 = vmatprep.subr.mxu0 %v573
        %606 = vmatpush1.msra.mxu0 %v570
        %607 = vmatprep.subr.mxu0 0.0
        %608 = vmatpush2.msra.mxu0 0.0
        %609 = vmatprep.subr.mxu0 0.0
        %610 = vmatpush2.msra.mxu0 0.0
        %611 = vmatprep.subr.mxu0 0.0
        %612 = vmatpush2.msra.mxu0 0.0
        %613 = vmatprep.subr.mxu0 0.0
        %614 = vmatpush2.msra.mxu0 0.0
        %615 = vmatprep.subr.mxu0 0.0
        %616 = vmatpush2.msra.mxu0 0.0
        %617 = vmatprep.subr.mxu0 0.0
        %618 = vmatpush2.msra.mxu0 0.0
        %619 = vmatprep.subr.mxu0 0.0
        %620 = vmatpush2.msra.mxu0 0.0
        %621 = vmatprep.subr.mxu0 0.0
        %622 = vmatpush2.msra.mxu0 0.0
        %623 = vmatprep.subr.mxu0 0.0
        %624 = vmatpush2.msra.mxu0 0.0
        %625 = vmatprep.subr.mxu0 0.0
        %626 = vmatpush2.msra.mxu0 0.0
        %627 = vmatprep.subr.mxu0 0.0
        %628 = vmatpush2.msra.mxu0 0.0
        %629 = vmatprep.subr.mxu0 0.0
        %630 = vmatpush2.msra.mxu0 0.0
        %631 = vmatprep.subr.mxu0 0.0
        %632 = vmatpush2.msra.mxu0 0.0
        %633 = vmatprep.subr.mxu0 0.0
        %634 = vmatpush2.msra.mxu0 0.0
        %635 = vmatprep.subr.mxu0 0.0
        %636 = vmatpush2.msra.mxu0 0.0
        %637 = vmatprep.subr.mxu0 0.0
        %638 = vmatpush2.msra.mxu0 0.0
        %639 = vmatprep.mubr.f32.mxu0 0.0
        %640 = vmatmul.mubr.f32.gmra.mxu0 %v558
        %v641 = vpop.f32.mrf.mxu0
        %v642 = vadd.f32 %v535, %v641
        %v643 = vpop.f32.mrf.mxu0
        %v644 = vadd.f32 %v537, %v643
        %645 = vmatprep.mubr.f32.mxu0 0.0
        %646 = vmatmul.mubr.f32.gmra.mxu0 %v561
        %v647 = vpop.f32.mrf.mxu0
        %v648 = vadd.f32 %v541, %v647
        %v649 = vpop.f32.mrf.mxu0
        %v650 = vadd.f32 %v543, %v649
        %651 = vmatprep.mubr.f32.mxu0 0.0
        %652 = vmatmul.mubr.f32.gmra.mxu0 %v564
        %v653 = vpop.f32.mrf.mxu0
        %v654 = vadd.f32 %v547, %v653
        %v655 = vpop.f32.mrf.mxu0
        %v656 = vadd.f32 %v549, %v655
        %657 = vmatprep.mubr.f32.mxu0 0.0
        %658 = vmatmul.mubr.f32.gmra.mxu0 %v567
        %v659 = vpop.f32.mrf.mxu0
        %v660 = vadd.f32 %v553, %v659
        %v661 = vpop.f32.mrf.mxu0
        %v662 = vadd.f32 %v555, %v661
        %663 = vdwg.mxu0
        %s664 = scalar_lea.vmem %s3, 64
        %v665 = vld [vmem:[%s664] sm:$0xff]
        %v666 = vld [vmem:[%s664 + $0x8] sm:$0xff]
        %v667 = vld [vmem:[%s664 + $0x10] sm:$0xff]
        %v668 = vld [vmem:[%s664 + $0x18] sm:$0xff]
        %669 = vrot.lane.b32.xlu0 %v393, 15
        %v670 = vpop.permute.xlu0 %669
        %672 = vrot.lane.b32.xlu0 %v387, 15
        %v673 = vpop.permute.xlu0 %672
        %vm674 = vcmask 121856
        %v675 = vsel %vm674, %v673, %v670
        %v678 = vsel %vm674, %v670, %v673
        %s679 = scalar_lea.vmem %s2, 2
        %v680 = vld [vmem:[%s679] ss:$8 sm:$0x3]
        %v682 = vlaneseq
        %v683 = vshrl.u32 %v682, 7
        %v684 = vsub.s32 0, %v683
        %v685 = vrot.slane %v680, %v684
        %v686 = vlaneseq
        %v687 = vshrl.u32 %v686, 7
        %v688 = vsub.s32 1, %v687
        %v689 = vrot.slane %v680, %v688
        %v692 = vmul.f32 %v678, %v685
        %v693 = vmul.f32 %v675, %v689
        %v695 = vsel %vm448, %v665, 0
        %v698 = vsel %vm448, %v666, 0
        %v701 = vsel %vm448, %v667, 0
        %v704 = vsel %vm448, %v668, 0
        %v707 = vsel %vm461, %v692, 0
        %v710 = vsel %vm461, %v693, 0
        %712 = vmatprep.subr.mxu0 0.0
        %713 = vmatpush1.msra.mxu0 0.0
        %714 = vmatprep.subr.mxu0 0.0
        %715 = vmatpush1.msra.mxu0 0.0
        %716 = vmatprep.subr.mxu0 0.0
        %717 = vmatpush1.msra.mxu0 0.0
        %718 = vmatprep.subr.mxu0 0.0
        %719 = vmatpush1.msra.mxu0 0.0
        %720 = vmatprep.subr.mxu0 0.0
        %721 = vmatpush1.msra.mxu0 0.0
        %722 = vmatprep.subr.mxu0 0.0
        %723 = vmatpush1.msra.mxu0 0.0
        %724 = vmatprep.subr.mxu0 0.0
        %725 = vmatpush1.msra.mxu0 0.0
        %726 = vmatprep.subr.mxu0 0.0
        %727 = vmatpush1.msra.mxu0 0.0
        %728 = vmatprep.subr.mxu0 0.0
        %729 = vmatpush1.msra.mxu0 0.0
        %730 = vmatprep.subr.mxu0 0.0
        %731 = vmatpush1.msra.mxu0 0.0
        %732 = vmatprep.subr.mxu0 0.0
        %733 = vmatpush1.msra.mxu0 0.0
        %734 = vmatprep.subr.mxu0 0.0
        %735 = vmatpush1.msra.mxu0 0.0
        %736 = vmatprep.subr.mxu0 0.0
        %737 = vmatpush1.msra.mxu0 0.0
        %738 = vmatprep.subr.mxu0 0.0
        %739 = vmatpush1.msra.mxu0 0.0
        %740 = vmatprep.subr.mxu0 0.0
        %741 = vmatpush1.msra.mxu0 0.0
        %742 = vmatprep.subr.mxu0 %v710
        %743 = vmatpush1.msra.mxu0 %v707
        %744 = vmatprep.subr.mxu0 0.0
        %745 = vmatpush2.msra.mxu0 0.0
        %746 = vmatprep.subr.mxu0 0.0
        %747 = vmatpush2.msra.mxu0 0.0
        %748 = vmatprep.subr.mxu0 0.0
        %749 = vmatpush2.msra.mxu0 0.0
        %750 = vmatprep.subr.mxu0 0.0
        %751 = vmatpush2.msra.mxu0 0.0
        %752 = vmatprep.subr.mxu0 0.0
        %753 = vmatpush2.msra.mxu0 0.0
        %754 = vmatprep.subr.mxu0 0.0
        %755 = vmatpush2.msra.mxu0 0.0
        %756 = vmatprep.subr.mxu0 0.0
        %757 = vmatpush2.msra.mxu0 0.0
        %758 = vmatprep.subr.mxu0 0.0
        %759 = vmatpush2.msra.mxu0 0.0
        %760 = vmatprep.subr.mxu0 0.0
        %761 = vmatpush2.msra.mxu0 0.0
        %762 = vmatprep.subr.mxu0 0.0
        %763 = vmatpush2.msra.mxu0 0.0
        %764 = vmatprep.subr.mxu0 0.0
        %765 = vmatpush2.msra.mxu0 0.0
        %766 = vmatprep.subr.mxu0 0.0
        %767 = vmatpush2.msra.mxu0 0.0
        %768 = vmatprep.subr.mxu0 0.0
        %769 = vmatpush2.msra.mxu0 0.0
        %770 = vmatprep.subr.mxu0 0.0
        %771 = vmatpush2.msra.mxu0 0.0
        %772 = vmatprep.subr.mxu0 0.0
        %773 = vmatpush2.msra.mxu0 0.0
        %774 = vmatprep.subr.mxu0 0.0
        %775 = vmatpush2.msra.mxu0 0.0
        %776 = vmatprep.mubr.f32.mxu0 0.0
        %777 = vmatmul.mubr.f32.gmra.mxu0 %v695
        %v778 = vpop.f32.mrf.mxu0
        %v779 = vadd.f32 0.0, %v778
        %v780 = vpop.f32.mrf.mxu0
        %v781 = vadd.f32 0.0, %v780
        %782 = vmatprep.mubr.f32.mxu0 0.0
        %783 = vmatmul.mubr.f32.gmra.mxu0 %v698
        %v784 = vpop.f32.mrf.mxu0
        %v785 = vadd.f32 0.0, %v784
        %v786 = vpop.f32.mrf.mxu0
        %v787 = vadd.f32 0.0, %v786
        %788 = vmatprep.mubr.f32.mxu0 0.0
        %789 = vmatmul.mubr.f32.gmra.mxu0 %v701
        %v790 = vpop.f32.mrf.mxu0
        %v791 = vadd.f32 0.0, %v790
        %v792 = vpop.f32.mrf.mxu0
        %v793 = vadd.f32 0.0, %v792
        %794 = vmatprep.mubr.f32.mxu0 0.0
        %795 = vmatmul.mubr.f32.gmra.mxu0 %v704
        %v796 = vpop.f32.mrf.mxu0
        %v797 = vadd.f32 0.0, %v796
        %v798 = vpop.f32.mrf.mxu0
        %v799 = vadd.f32 0.0, %v798
        %800 = vdwg.mxu0
        %v801 = vadd.f32 %v642, %v779
        %v802 = vadd.f32 %v644, %v781
        %v803 = vadd.f32 %v648, %v785
        %v804 = vadd.f32 %v650, %v787
        %v805 = vadd.f32 %v654, %v791
        %v806 = vadd.f32 %v656, %v793
        %v807 = vadd.f32 %v660, %v797
        %v808 = vadd.f32 %v662, %v799
        %s809 = scalar_lea.vmem %s3, 96
        %v810 = vld [vmem:[%s809] sm:$0xff]
        %v811 = vld [vmem:[%s809 + $0x8] sm:$0xff]
        %v812 = vld [vmem:[%s809 + $0x10] sm:$0xff]
        %v813 = vld [vmem:[%s809 + $0x18] sm:$0xff]
        %814 = vrot.lane.b32.xlu0 %v393, 1
        %v815 = vpop.permute.xlu0 %814
        %817 = vrot.lane.b32.xlu0 %v387, 1
        %v818 = vpop.permute.xlu0 %817
        %vm819 = vcmask 7168
        %v820 = vsel %vm819, %v818, %v815
        %v823 = vsel %vm819, %v815, %v818
        %s824 = scalar_lea.vmem %s2, 3
        %v825 = vld [vmem:[%s824] ss:$8 sm:$0x3]
        %v827 = vlaneseq
        %v828 = vshrl.u32 %v827, 7
        %v829 = vsub.s32 0, %v828
        %v830 = vrot.slane %v825, %v829
        %v831 = vlaneseq
        %v832 = vshrl.u32 %v831, 7
        %v833 = vsub.s32 1, %v832
        %v834 = vrot.slane %v825, %v833
        %v837 = vmul.f32 %v823, %v830
        %v838 = vmul.f32 %v820, %v834
        %v840 = vsel %vm448, %v810, 0
        %v843 = vsel %vm448, %v811, 0
        %v846 = vsel %vm448, %v812, 0
        %v849 = vsel %vm448, %v813, 0
        %v852 = vsel %vm461, %v837, 0
        %v855 = vsel %vm461, %v838, 0
        %857 = vmatprep.subr.mxu0 0.0
        %858 = vmatpush1.msra.mxu0 0.0
        %859 = vmatprep.subr.mxu0 0.0
        %860 = vmatpush1.msra.mxu0 0.0
        %861 = vmatprep.subr.mxu0 0.0
        %862 = vmatpush1.msra.mxu0 0.0
        %863 = vmatprep.subr.mxu0 0.0
        %864 = vmatpush1.msra.mxu0 0.0
        %865 = vmatprep.subr.mxu0 0.0
        %866 = vmatpush1.msra.mxu0 0.0
        %867 = vmatprep.subr.mxu0 0.0
        %868 = vmatpush1.msra.mxu0 0.0
        %869 = vmatprep.subr.mxu0 0.0
        %870 = vmatpush1.msra.mxu0 0.0
        %871 = vmatprep.subr.mxu0 0.0
        %872 = vmatpush1.msra.mxu0 0.0
        %873 = vmatprep.subr.mxu0 0.0
        %874 = vmatpush1.msra.mxu0 0.0
        %875 = vmatprep.subr.mxu0 0.0
        %876 = vmatpush1.msra.mxu0 0.0
        %877 = vmatprep.subr.mxu0 0.0
        %878 = vmatpush1.msra.mxu0 0.0
        %879 = vmatprep.subr.mxu0 0.0
        %880 = vmatpush1.msra.mxu0 0.0
        %881 = vmatprep.subr.mxu0 0.0
        %882 = vmatpush1.msra.mxu0 0.0
        %883 = vmatprep.subr.mxu0 0.0
        %884 = vmatpush1.msra.mxu0 0.0
        %885 = vmatprep.subr.mxu0 0.0
        %886 = vmatpush1.msra.mxu0 0.0
        %887 = vmatprep.subr.mxu0 %v855
        %888 = vmatpush1.msra.mxu0 %v852
        %889 = vmatprep.subr.mxu0 0.0
        %890 = vmatpush2.msra.mxu0 0.0
        %891 = vmatprep.subr.mxu0 0.0
        %892 = vmatpush2.msra.mxu0 0.0
        %893 = vmatprep.subr.mxu0 0.0
        %894 = vmatpush2.msra.mxu0 0.0
        %895 = vmatprep.subr.mxu0 0.0
        %896 = vmatpush2.msra.mxu0 0.0
        %897 = vmatprep.subr.mxu0 0.0
        %898 = vmatpush2.msra.mxu0 0.0
        %899 = vmatprep.subr.mxu0 0.0
        %900 = vmatpush2.msra.mxu0 0.0
        %901 = vmatprep.subr.mxu0 0.0
        %902 = vmatpush2.msra.mxu0 0.0
        %903 = vmatprep.subr.mxu0 0.0
        %904 = vmatpush2.msra.mxu0 0.0
        %905 = vmatprep.subr.mxu0 0.0
        %906 = vmatpush2.msra.mxu0 0.0
        %907 = vmatprep.subr.mxu0 0.0
        %908 = vmatpush2.msra.mxu0 0.0
        %909 = vmatprep.subr.mxu0 0.0
        %910 = vmatpush2.msra.mxu0 0.0
        %911 = vmatprep.subr.mxu0 0.0
        %912 = vmatpush2.msra.mxu0 0.0
        %913 = vmatprep.subr.mxu0 0.0
        %914 = vmatpush2.msra.mxu0 0.0
        %915 = vmatprep.subr.mxu0 0.0
        %916 = vmatpush2.msra.mxu0 0.0
        %917 = vmatprep.subr.mxu0 0.0
        %918 = vmatpush2.msra.mxu0 0.0
        %919 = vmatprep.subr.mxu0 0.0
        %920 = vmatpush2.msra.mxu0 0.0
        %921 = vmatprep.mubr.f32.mxu0 0.0
        %922 = vmatmul.mubr.f32.gmra.mxu0 %v840
        %v923 = vpop.f32.mrf.mxu0
        %v924 = vadd.f32 0.0, %v923
        %v925 = vpop.f32.mrf.mxu0
        %v926 = vadd.f32 0.0, %v925
        %927 = vmatprep.mubr.f32.mxu0 0.0
        %928 = vmatmul.mubr.f32.gmra.mxu0 %v843
        %v929 = vpop.f32.mrf.mxu0
        %v930 = vadd.f32 0.0, %v929
        %v931 = vpop.f32.mrf.mxu0
        %v932 = vadd.f32 0.0, %v931
        %933 = vmatprep.mubr.f32.mxu0 0.0
        %934 = vmatmul.mubr.f32.gmra.mxu0 %v846
        %v935 = vpop.f32.mrf.mxu0
        %v936 = vadd.f32 0.0, %v935
        %v937 = vpop.f32.mrf.mxu0
        %v938 = vadd.f32 0.0, %v937
        %939 = vmatprep.mubr.f32.mxu0 0.0
        %940 = vmatmul.mubr.f32.gmra.mxu0 %v849
        %v941 = vpop.f32.mrf.mxu0
        %v942 = vadd.f32 0.0, %v941
        %v943 = vpop.f32.mrf.mxu0
        %v944 = vadd.f32 0.0, %v943
        %945 = vdwg.mxu0
        %v946 = vadd.f32 %v801, %v924
        %v947 = vadd.f32 %v802, %v926
        %v948 = vadd.f32 %v803, %v930
        %v949 = vadd.f32 %v804, %v932
        %v950 = vadd.f32 %v805, %v936
        %v951 = vadd.f32 %v806, %v938
        %v952 = vadd.f32 %v807, %v942
        %v953 = vadd.f32 %v808, %v944
        %s954 = scalar_lea.vmem %s3, 128
        %v955 = vld [vmem:[%s954] sm:$0xff]
        %v956 = vld [vmem:[%s954 + $0x8] sm:$0xff]
        %v957 = vld [vmem:[%s954 + $0x10] sm:$0xff]
        %v958 = vld [vmem:[%s954 + $0x18] sm:$0xff]
        %v960 = vsel %vm448, %v955, 0
        %v963 = vsel %vm448, %v956, 0
        %v966 = vsel %vm448, %v957, 0
        %v969 = vsel %vm448, %v958, 0
        %v971 = vsel %vm461, %v387, 0
        %v973 = vsel %vm461, %v393, 0
        %975 = vmatprep.subr.mxu0 0.0
        %976 = vmatpush1.msra.mxu0 0.0
        %977 = vmatprep.subr.mxu0 0.0
        %978 = vmatpush1.msra.mxu0 0.0
        %979 = vmatprep.subr.mxu0 0.0
        %980 = vmatpush1.msra.mxu0 0.0
        %981 = vmatprep.subr.mxu0 0.0
        %982 = vmatpush1.msra.mxu0 0.0
        %983 = vmatprep.subr.mxu0 0.0
        %984 = vmatpush1.msra.mxu0 0.0
        %985 = vmatprep.subr.mxu0 0.0
        %986 = vmatpush1.msra.mxu0 0.0
        %987 = vmatprep.subr.mxu0 0.0
        %988 = vmatpush1.msra.mxu0 0.0
        %989 = vmatprep.subr.mxu0 0.0
        %990 = vmatpush1.msra.mxu0 0.0
        %991 = vmatprep.subr.mxu0 0.0
        %992 = vmatpush1.msra.mxu0 0.0
        %993 = vmatprep.subr.mxu0 0.0
        %994 = vmatpush1.msra.mxu0 0.0
        %995 = vmatprep.subr.mxu0 0.0
        %996 = vmatpush1.msra.mxu0 0.0
        %997 = vmatprep.subr.mxu0 0.0
        %998 = vmatpush1.msra.mxu0 0.0
        %999 = vmatprep.subr.mxu0 0.0
        %1000 = vmatpush1.msra.mxu0 0.0
        %1001 = vmatprep.subr.mxu0 0.0
        %1002 = vmatpush1.msra.mxu0 0.0
        %1003 = vmatprep.subr.mxu0 0.0
        %1004 = vmatpush1.msra.mxu0 0.0
        %1005 = vmatprep.subr.mxu0 %v973
        %1006 = vmatpush1.msra.mxu0 %v971
        %1007 = vmatprep.subr.mxu0 0.0
        %1008 = vmatpush2.msra.mxu0 0.0
        %1009 = vmatprep.subr.mxu0 0.0
        %1010 = vmatpush2.msra.mxu0 0.0
        %1011 = vmatprep.subr.mxu0 0.0
        %1012 = vmatpush2.msra.mxu0 0.0
        %1013 = vmatprep.subr.mxu0 0.0
        %1014 = vmatpush2.msra.mxu0 0.0
        %1015 = vmatprep.subr.mxu0 0.0
        %1016 = vmatpush2.msra.mxu0 0.0
        %1017 = vmatprep.subr.mxu0 0.0
        %1018 = vmatpush2.msra.mxu0 0.0
        %1019 = vmatprep.subr.mxu0 0.0
        %1020 = vmatpush2.msra.mxu0 0.0
        %1021 = vmatprep.subr.mxu0 0.0
        %1022 = vmatpush2.msra.mxu0 0.0
        %1023 = vmatprep.subr.mxu0 0.0
        %1024 = vmatpush2.msra.mxu0 0.0
        %1025 = vmatprep.subr.mxu0 0.0
        %1026 = vmatpush2.msra.mxu0 0.0
        %1027 = vmatprep.subr.mxu0 0.0
        %1028 = vmatpush2.msra.mxu0 0.0
        %1029 = vmatprep.subr.mxu0 0.0
        %1030 = vmatpush2.msra.mxu0 0.0
        %1031 = vmatprep.subr.mxu0 0.0
        %1032 = vmatpush2.msra.mxu0 0.0
        %1033 = vmatprep.subr.mxu0 0.0
        %1034 = vmatpush2.msra.mxu0 0.0
        %1035 = vmatprep.subr.mxu0 0.0
        %1036 = vmatpush2.msra.mxu0 0.0
        %1037 = vmatprep.subr.mxu0 0.0
        %1038 = vmatpush2.msra.mxu0 0.0
        %1039 = vmatprep.mubr.f32.mxu0 0.0
        %1040 = vmatmul.mubr.f32.gmra.mxu0 %v960
        %v1041 = vpop.f32.mrf.mxu0
        %v1042 = vadd.f32 0.0, %v1041
        %v1043 = vpop.f32.mrf.mxu0
        %v1044 = vadd.f32 0.0, %v1043
        %1045 = vmatprep.mubr.f32.mxu0 0.0
        %1046 = vmatmul.mubr.f32.gmra.mxu0 %v963
        %v1047 = vpop.f32.mrf.mxu0
        %v1048 = vadd.f32 0.0, %v1047
        %v1049 = vpop.f32.mrf.mxu0
        %v1050 = vadd.f32 0.0, %v1049
        %1051 = vmatprep.mubr.f32.mxu0 0.0
        %1052 = vmatmul.mubr.f32.gmra.mxu0 %v966
        %v1053 = vpop.f32.mrf.mxu0
        %v1054 = vadd.f32 0.0, %v1053
        %v1055 = vpop.f32.mrf.mxu0
        %v1056 = vadd.f32 0.0, %v1055
        %1057 = vmatprep.mubr.f32.mxu0 0.0
        %1058 = vmatmul.mubr.f32.gmra.mxu0 %v969
        %v1059 = vpop.f32.mrf.mxu0
        %v1060 = vadd.f32 0.0, %v1059
        %v1061 = vpop.f32.mrf.mxu0
        %v1062 = vadd.f32 0.0, %v1061
        %1063 = vdwg.mxu0
        %v1064 = vadd.f32 %v946, %v1042
        %v1065 = vadd.f32 %v947, %v1044
        %v1066 = vadd.f32 %v948, %v1048
        %v1067 = vadd.f32 %v949, %v1050
        %v1068 = vadd.f32 %v950, %v1054
        %v1069 = vadd.f32 %v951, %v1056
        %v1070 = vadd.f32 %v952, %v1060
        %v1071 = vadd.f32 %v953, %v1062
        %s1072 = scalar_lea.vmem %s3, 160
        %v1073 = vld [vmem:[%s1072] sm:$0xff]
        %v1074 = vld [vmem:[%s1072 + $0x8] sm:$0xff]
        %v1075 = vld [vmem:[%s1072 + $0x10] sm:$0xff]
        %v1076 = vld [vmem:[%s1072 + $0x18] sm:$0xff]
        %1077 = vrot.lane.b32.xlu0 %v387, 127
        %v1078 = vpop.permute.xlu0 %1077
        %1079 = vrot.lane.b32.xlu0 %v393, 127
        %v1080 = vpop.permute.xlu0 %1079
        %vm1081 = vcmask 1039360
        %v1082 = vsel %vm1081, %v1078, %v1080
        %v1086 = vsel %vm1081, %v1080, %v1078
        %s1087 = scalar_lea.vmem %s2, 5
        %v1088 = vld [vmem:[%s1087] ss:$8 sm:$0x3]
        %v1090 = vlaneseq
        %v1091 = vshrl.u32 %v1090, 7
        %v1092 = vsub.s32 0, %v1091
        %v1093 = vrot.slane %v1088, %v1092
        %v1094 = vlaneseq
        %v1095 = vshrl.u32 %v1094, 7
        %v1096 = vsub.s32 1, %v1095
        %v1097 = vrot.slane %v1088, %v1096
        %v1100 = vmul.f32 %v1082, %v1093
        %v1101 = vmul.f32 %v1086, %v1097
        %v1103 = vsel %vm448, %v1073, 0
        %v1106 = vsel %vm448, %v1074, 0
        %v1109 = vsel %vm448, %v1075, 0
        %v1112 = vsel %vm448, %v1076, 0
        %v1115 = vsel %vm461, %v1100, 0
        %v1118 = vsel %vm461, %v1101, 0
        %1120 = vmatprep.subr.mxu0 0.0
        %1121 = vmatpush1.msra.mxu0 0.0
        %1122 = vmatprep.subr.mxu0 0.0
        %1123 = vmatpush1.msra.mxu0 0.0
        %1124 = vmatprep.subr.mxu0 0.0
        %1125 = vmatpush1.msra.mxu0 0.0
        %1126 = vmatprep.subr.mxu0 0.0
        %1127 = vmatpush1.msra.mxu0 0.0
        %1128 = vmatprep.subr.mxu0 0.0
        %1129 = vmatpush1.msra.mxu0 0.0
        %1130 = vmatprep.subr.mxu0 0.0
        %1131 = vmatpush1.msra.mxu0 0.0
        %1132 = vmatprep.subr.mxu0 0.0
        %1133 = vmatpush1.msra.mxu0 0.0
        %1134 = vmatprep.subr.mxu0 0.0
        %1135 = vmatpush1.msra.mxu0 0.0
        %1136 = vmatprep.subr.mxu0 0.0
        %1137 = vmatpush1.msra.mxu0 0.0
        %1138 = vmatprep.subr.mxu0 0.0
        %1139 = vmatpush1.msra.mxu0 0.0
        %1140 = vmatprep.subr.mxu0 0.0
        %1141 = vmatpush1.msra.mxu0 0.0
        %1142 = vmatprep.subr.mxu0 0.0
        %1143 = vmatpush1.msra.mxu0 0.0
        %1144 = vmatprep.subr.mxu0 0.0
        %1145 = vmatpush1.msra.mxu0 0.0
        %1146 = vmatprep.subr.mxu0 0.0
        %1147 = vmatpush1.msra.mxu0 0.0
        %1148 = vmatprep.subr.mxu0 0.0
        %1149 = vmatpush1.msra.mxu0 0.0
        %1150 = vmatprep.subr.mxu0 %v1118
        %1151 = vmatpush1.msra.mxu0 %v1115
        %1152 = vmatprep.subr.mxu0 0.0
        %1153 = vmatpush2.msra.mxu0 0.0
        %1154 = vmatprep.subr.mxu0 0.0
        %1155 = vmatpush2.msra.mxu0 0.0
        %1156 = vmatprep.subr.mxu0 0.0
        %1157 = vmatpush2.msra.mxu0 0.0
        %1158 = vmatprep.subr.mxu0 0.0
        %1159 = vmatpush2.msra.mxu0 0.0
        %1160 = vmatprep.subr.mxu0 0.0
        %1161 = vmatpush2.msra.mxu0 0.0
        %1162 = vmatprep.subr.mxu0 0.0
        %1163 = vmatpush2.msra.mxu0 0.0
        %1164 = vmatprep.subr.mxu0 0.0
        %1165 = vmatpush2.msra.mxu0 0.0
        %1166 = vmatprep.subr.mxu0 0.0
        %1167 = vmatpush2.msra.mxu0 0.0
        %1168 = vmatprep.subr.mxu0 0.0
        %1169 = vmatpush2.msra.mxu0 0.0
        %1170 = vmatprep.subr.mxu0 0.0
        %1171 = vmatpush2.msra.mxu0 0.0
        %1172 = vmatprep.subr.mxu0 0.0
        %1173 = vmatpush2.msra.mxu0 0.0
        %1174 = vmatprep.subr.mxu0 0.0
        %1175 = vmatpush2.msra.mxu0 0.0
        %1176 = vmatprep.subr.mxu0 0.0
        %1177 = vmatpush2.msra.mxu0 0.0
        %1178 = vmatprep.subr.mxu0 0.0
        %1179 = vmatpush2.msra.mxu0 0.0
        %1180 = vmatprep.subr.mxu0 0.0
        %1181 = vmatpush2.msra.mxu0 0.0
        %1182 = vmatprep.subr.mxu0 0.0
        %1183 = vmatpush2.msra.mxu0 0.0
        %1184 = vmatprep.mubr.f32.mxu0 0.0
        %1185 = vmatmul.mubr.f32.gmra.mxu0 %v1103
        %v1186 = vpop.f32.mrf.mxu0
        %v1187 = vadd.f32 0.0, %v1186
        %v1188 = vpop.f32.mrf.mxu0
        %v1189 = vadd.f32 0.0, %v1188
        %1190 = vmatprep.mubr.f32.mxu0 0.0
        %1191 = vmatmul.mubr.f32.gmra.mxu0 %v1106
        %v1192 = vpop.f32.mrf.mxu0
        %v1193 = vadd.f32 0.0, %v1192
        %v1194 = vpop.f32.mrf.mxu0
        %v1195 = vadd.f32 0.0, %v1194
        %1196 = vmatprep.mubr.f32.mxu0 0.0
        %1197 = vmatmul.mubr.f32.gmra.mxu0 %v1109
        %v1198 = vpop.f32.mrf.mxu0
        %v1199 = vadd.f32 0.0, %v1198
        %v1200 = vpop.f32.mrf.mxu0
        %v1201 = vadd.f32 0.0, %v1200
        %1202 = vmatprep.mubr.f32.mxu0 0.0
        %1203 = vmatmul.mubr.f32.gmra.mxu0 %v1112
        %v1204 = vpop.f32.mrf.mxu0
        %v1205 = vadd.f32 0.0, %v1204
        %v1206 = vpop.f32.mrf.mxu0
        %v1207 = vadd.f32 0.0, %v1206
        %1208 = vdwg.mxu0
        %v1209 = vadd.f32 %v1064, %v1187
        %v1210 = vadd.f32 %v1065, %v1189
        %v1211 = vadd.f32 %v1066, %v1193
        %v1212 = vadd.f32 %v1067, %v1195
        %v1213 = vadd.f32 %v1068, %v1199
        %v1214 = vadd.f32 %v1069, %v1201
        %v1215 = vadd.f32 %v1070, %v1205
        %v1216 = vadd.f32 %v1071, %v1207
        %s1217 = scalar_lea.vmem %s3, 192
        %v1218 = vld [vmem:[%s1217] sm:$0xff]
        %v1219 = vld [vmem:[%s1217 + $0x8] sm:$0xff]
        %v1220 = vld [vmem:[%s1217 + $0x10] sm:$0xff]
        %v1221 = vld [vmem:[%s1217 + $0x18] sm:$0xff]
        %1222 = vrot.lane.b32.xlu0 %v387, 113
        %v1223 = vpop.permute.xlu0 %1222
        %1224 = vrot.lane.b32.xlu0 %v393, 113
        %v1225 = vpop.permute.xlu0 %1224
        %vm1226 = vcmask 924672
        %v1227 = vsel %vm1226, %v1223, %v1225
        %v1231 = vsel %vm1226, %v1225, %v1223
        %s1232 = scalar_lea.vmem %s2, 6
        %v1233 = vld [vmem:[%s1232] ss:$8 sm:$0x3]
        %v1235 = vlaneseq
        %v1236 = vshrl.u32 %v1235, 7
        %v1237 = vsub.s32 0, %v1236
        %v1238 = vrot.slane %v1233, %v1237
        %v1239 = vlaneseq
        %v1240 = vshrl.u32 %v1239, 7
        %v1241 = vsub.s32 1, %v1240
        %v1242 = vrot.slane %v1233, %v1241
        %v1245 = vmul.f32 %v1227, %v1238
        %v1246 = vmul.f32 %v1231, %v1242
        %v1248 = vsel %vm448, %v1218, 0
        %v1251 = vsel %vm448, %v1219, 0
        %v1254 = vsel %vm448, %v1220, 0
        %v1257 = vsel %vm448, %v1221, 0
        %v1260 = vsel %vm461, %v1245, 0
        %v1263 = vsel %vm461, %v1246, 0
        %1265 = vmatprep.subr.mxu0 0.0
        %1266 = vmatpush1.msra.mxu0 0.0
        %1267 = vmatprep.subr.mxu0 0.0
        %1268 = vmatpush1.msra.mxu0 0.0
        %1269 = vmatprep.subr.mxu0 0.0
        %1270 = vmatpush1.msra.mxu0 0.0
        %1271 = vmatprep.subr.mxu0 0.0
        %1272 = vmatpush1.msra.mxu0 0.0
        %1273 = vmatprep.subr.mxu0 0.0
        %1274 = vmatpush1.msra.mxu0 0.0
        %1275 = vmatprep.subr.mxu0 0.0
        %1276 = vmatpush1.msra.mxu0 0.0
        %1277 = vmatprep.subr.mxu0 0.0
        %1278 = vmatpush1.msra.mxu0 0.0
        %1279 = vmatprep.subr.mxu0 0.0
        %1280 = vmatpush1.msra.mxu0 0.0
        %1281 = vmatprep.subr.mxu0 0.0
        %1282 = vmatpush1.msra.mxu0 0.0
        %1283 = vmatprep.subr.mxu0 0.0
        %1284 = vmatpush1.msra.mxu0 0.0
        %1285 = vmatprep.subr.mxu0 0.0
        %1286 = vmatpush1.msra.mxu0 0.0
        %1287 = vmatprep.subr.mxu0 0.0
        %1288 = vmatpush1.msra.mxu0 0.0
        %1289 = vmatprep.subr.mxu0 0.0
        %1290 = vmatpush1.msra.mxu0 0.0
        %1291 = vmatprep.subr.mxu0 0.0
        %1292 = vmatpush1.msra.mxu0 0.0
        %1293 = vmatprep.subr.mxu0 0.0
        %1294 = vmatpush1.msra.mxu0 0.0
        %1295 = vmatprep.subr.mxu0 %v1263
        %1296 = vmatpush1.msra.mxu0 %v1260
        %1297 = vmatprep.subr.mxu0 0.0
        %1298 = vmatpush2.msra.mxu0 0.0
        %1299 = vmatprep.subr.mxu0 0.0
        %1300 = vmatpush2.msra.mxu0 0.0
        %1301 = vmatprep.subr.mxu0 0.0
        %1302 = vmatpush2.msra.mxu0 0.0
        %1303 = vmatprep.subr.mxu0 0.0
        %1304 = vmatpush2.msra.mxu0 0.0
        %1305 = vmatprep.subr.mxu0 0.0
        %1306 = vmatpush2.msra.mxu0 0.0
        %1307 = vmatprep.subr.mxu0 0.0
        %1308 = vmatpush2.msra.mxu0 0.0
        %1309 = vmatprep.subr.mxu0 0.0
        %1310 = vmatpush2.msra.mxu0 0.0
        %1311 = vmatprep.subr.mxu0 0.0
        %1312 = vmatpush2.msra.mxu0 0.0
        %1313 = vmatprep.subr.mxu0 0.0
        %1314 = vmatpush2.msra.mxu0 0.0
        %1315 = vmatprep.subr.mxu0 0.0
        %1316 = vmatpush2.msra.mxu0 0.0
        %1317 = vmatprep.subr.mxu0 0.0
        %1318 = vmatpush2.msra.mxu0 0.0
        %1319 = vmatprep.subr.mxu0 0.0
        %1320 = vmatpush2.msra.mxu0 0.0
        %1321 = vmatprep.subr.mxu0 0.0
        %1322 = vmatpush2.msra.mxu0 0.0
        %1323 = vmatprep.subr.mxu0 0.0
        %1324 = vmatpush2.msra.mxu0 0.0
        %1325 = vmatprep.subr.mxu0 0.0
        %1326 = vmatpush2.msra.mxu0 0.0
        %1327 = vmatprep.subr.mxu0 0.0
        %1328 = vmatpush2.msra.mxu0 0.0
        %1329 = vmatprep.mubr.f32.mxu0 0.0
        %1330 = vmatmul.mubr.f32.gmra.mxu0 %v1248
        %v1331 = vpop.f32.mrf.mxu0
        %v1332 = vadd.f32 0.0, %v1331
        %v1333 = vpop.f32.mrf.mxu0
        %v1334 = vadd.f32 0.0, %v1333
        %1335 = vmatprep.mubr.f32.mxu0 0.0
        %1336 = vmatmul.mubr.f32.gmra.mxu0 %v1251
        %v1337 = vpop.f32.mrf.mxu0
        %v1338 = vadd.f32 0.0, %v1337
        %v1339 = vpop.f32.mrf.mxu0
        %v1340 = vadd.f32 0.0, %v1339
        %1341 = vmatprep.mubr.f32.mxu0 0.0
        %1342 = vmatmul.mubr.f32.gmra.mxu0 %v1254
        %v1343 = vpop.f32.mrf.mxu0
        %v1344 = vadd.f32 0.0, %v1343
        %v1345 = vpop.f32.mrf.mxu0
        %v1346 = vadd.f32 0.0, %v1345
        %1347 = vmatprep.mubr.f32.mxu0 0.0
        %1348 = vmatmul.mubr.f32.gmra.mxu0 %v1257
        %v1349 = vpop.f32.mrf.mxu0
        %v1350 = vadd.f32 0.0, %v1349
        %v1351 = vpop.f32.mrf.mxu0
        %v1352 = vadd.f32 0.0, %v1351
        %1353 = vdwg.mxu0
        %v1354 = vadd.f32 %v1209, %v1332
        %v1355 = vadd.f32 %v1210, %v1334
        %v1356 = vadd.f32 %v1211, %v1338
        %v1357 = vadd.f32 %v1212, %v1340
        %v1358 = vadd.f32 %v1213, %v1344
        %v1359 = vadd.f32 %v1214, %v1346
        %v1360 = vadd.f32 %v1215, %v1350
        %v1361 = vadd.f32 %v1216, %v1352
        %s1362 = scalar_lea.vmem %s3, 224
        %v1363 = vld [vmem:[%s1362] sm:$0xff]
        %v1364 = vld [vmem:[%s1362 + $0x8] sm:$0xff]
        %v1365 = vld [vmem:[%s1362 + $0x10] sm:$0xff]
        %v1366 = vld [vmem:[%s1362 + $0x18] sm:$0xff]
        %1367 = vrot.lane.b32.xlu0 %v387, 112
        %v1368 = vpop.permute.xlu0 %1367
        %1369 = vrot.lane.b32.xlu0 %v393, 112
        %v1370 = vpop.permute.xlu0 %1369
        %vm1371 = vcmask 916480
        %v1372 = vsel %vm1371, %v1368, %v1370
        %v1376 = vsel %vm1371, %v1370, %v1368
        %s1377 = scalar_lea.vmem %s2, 7
        %v1378 = vld [vmem:[%s1377] ss:$8 sm:$0x3]
        %v1380 = vlaneseq
        %v1381 = vshrl.u32 %v1380, 7
        %v1382 = vsub.s32 0, %v1381
        %v1383 = vrot.slane %v1378, %v1382
        %v1384 = vlaneseq
        %v1385 = vshrl.u32 %v1384, 7
        %v1386 = vsub.s32 1, %v1385
        %v1387 = vrot.slane %v1378, %v1386
        %v1390 = vmul.f32 %v1372, %v1383
        %v1391 = vmul.f32 %v1376, %v1387
        %v1393 = vsel %vm448, %v1363, 0
        %v1396 = vsel %vm448, %v1364, 0
        %v1399 = vsel %vm448, %v1365, 0
        %v1402 = vsel %vm448, %v1366, 0
        %v1405 = vsel %vm461, %v1390, 0
        %v1408 = vsel %vm461, %v1391, 0
        %1410 = vmatprep.subr.mxu0 0.0
        %1411 = vmatpush1.msra.mxu0 0.0
        %1412 = vmatprep.subr.mxu0 0.0
        %1413 = vmatpush1.msra.mxu0 0.0
        %1414 = vmatprep.subr.mxu0 0.0
        %1415 = vmatpush1.msra.mxu0 0.0
        %1416 = vmatprep.subr.mxu0 0.0
        %1417 = vmatpush1.msra.mxu0 0.0
        %1418 = vmatprep.subr.mxu0 0.0
        %1419 = vmatpush1.msra.mxu0 0.0
        %1420 = vmatprep.subr.mxu0 0.0
        %1421 = vmatpush1.msra.mxu0 0.0
        %1422 = vmatprep.subr.mxu0 0.0
        %1423 = vmatpush1.msra.mxu0 0.0
        %1424 = vmatprep.subr.mxu0 0.0
        %1425 = vmatpush1.msra.mxu0 0.0
        %1426 = vmatprep.subr.mxu0 0.0
        %1427 = vmatpush1.msra.mxu0 0.0
        %1428 = vmatprep.subr.mxu0 0.0
        %1429 = vmatpush1.msra.mxu0 0.0
        %1430 = vmatprep.subr.mxu0 0.0
        %1431 = vmatpush1.msra.mxu0 0.0
        %1432 = vmatprep.subr.mxu0 0.0
        %1433 = vmatpush1.msra.mxu0 0.0
        %1434 = vmatprep.subr.mxu0 0.0
        %1435 = vmatpush1.msra.mxu0 0.0
        %1436 = vmatprep.subr.mxu0 0.0
        %1437 = vmatpush1.msra.mxu0 0.0
        %1438 = vmatprep.subr.mxu0 0.0
        %1439 = vmatpush1.msra.mxu0 0.0
        %1440 = vmatprep.subr.mxu0 %v1408
        %1441 = vmatpush1.msra.mxu0 %v1405
        %1442 = vmatprep.subr.mxu0 0.0
        %1443 = vmatpush2.msra.mxu0 0.0
        %1444 = vmatprep.subr.mxu0 0.0
        %1445 = vmatpush2.msra.mxu0 0.0
        %1446 = vmatprep.subr.mxu0 0.0
        %1447 = vmatpush2.msra.mxu0 0.0
        %1448 = vmatprep.subr.mxu0 0.0
        %1449 = vmatpush2.msra.mxu0 0.0
        %1450 = vmatprep.subr.mxu0 0.0
        %1451 = vmatpush2.msra.mxu0 0.0
        %1452 = vmatprep.subr.mxu0 0.0
        %1453 = vmatpush2.msra.mxu0 0.0
        %1454 = vmatprep.subr.mxu0 0.0
        %1455 = vmatpush2.msra.mxu0 0.0
        %1456 = vmatprep.subr.mxu0 0.0
        %1457 = vmatpush2.msra.mxu0 0.0
        %1458 = vmatprep.subr.mxu0 0.0
        %1459 = vmatpush2.msra.mxu0 0.0
        %1460 = vmatprep.subr.mxu0 0.0
        %1461 = vmatpush2.msra.mxu0 0.0
        %1462 = vmatprep.subr.mxu0 0.0
        %1463 = vmatpush2.msra.mxu0 0.0
        %1464 = vmatprep.subr.mxu0 0.0
        %1465 = vmatpush2.msra.mxu0 0.0
        %1466 = vmatprep.subr.mxu0 0.0
        %1467 = vmatpush2.msra.mxu0 0.0
        %1468 = vmatprep.subr.mxu0 0.0
        %1469 = vmatpush2.msra.mxu0 0.0
        %1470 = vmatprep.subr.mxu0 0.0
        %1471 = vmatpush2.msra.mxu0 0.0
        %1472 = vmatprep.subr.mxu0 0.0
        %1473 = vmatpush2.msra.mxu0 0.0
        %1474 = vmatprep.mubr.f32.mxu0 0.0
        %1475 = vmatmul.mubr.f32.gmra.mxu0 %v1393
        %v1476 = vpop.f32.mrf.mxu0
        %v1477 = vadd.f32 0.0, %v1476
        %v1478 = vpop.f32.mrf.mxu0
        %v1479 = vadd.f32 0.0, %v1478
        %1480 = vmatprep.mubr.f32.mxu0 0.0
        %1481 = vmatmul.mubr.f32.gmra.mxu0 %v1396
        %v1482 = vpop.f32.mrf.mxu0
        %v1483 = vadd.f32 0.0, %v1482
        %v1484 = vpop.f32.mrf.mxu0
        %v1485 = vadd.f32 0.0, %v1484
        %1486 = vmatprep.mubr.f32.mxu0 0.0
        %1487 = vmatmul.mubr.f32.gmra.mxu0 %v1399
        %v1488 = vpop.f32.mrf.mxu0
        %v1489 = vadd.f32 0.0, %v1488
        %v1490 = vpop.f32.mrf.mxu0
        %v1491 = vadd.f32 0.0, %v1490
        %1492 = vmatprep.mubr.f32.mxu0 0.0
        %1493 = vmatmul.mubr.f32.gmra.mxu0 %v1402
        %v1494 = vpop.f32.mrf.mxu0
        %v1495 = vadd.f32 0.0, %v1494
        %v1496 = vpop.f32.mrf.mxu0
        %v1497 = vadd.f32 0.0, %v1496
        %1498 = vdwg.mxu0
        %v1499 = vadd.f32 %v1354, %v1477
        %v1500 = vadd.f32 %v1355, %v1479
        %v1501 = vadd.f32 %v1356, %v1483
        %v1502 = vadd.f32 %v1357, %v1485
        %v1503 = vadd.f32 %v1358, %v1489
        %v1504 = vadd.f32 %v1359, %v1491
        %v1505 = vadd.f32 %v1360, %v1495
        %v1506 = vadd.f32 %v1361, %v1497
        %s1507 = scalar_lea.vmem %s3, 256
        %v1508 = vld [vmem:[%s1507] sm:$0xff]
        %v1509 = vld [vmem:[%s1507 + $0x8] sm:$0xff]
        %v1510 = vld [vmem:[%s1507 + $0x10] sm:$0xff]
        %v1511 = vld [vmem:[%s1507 + $0x18] sm:$0xff]
        %1512 = vrot.lane.b32.xlu0 %v387, 111
        %v1513 = vpop.permute.xlu0 %1512
        %1514 = vrot.lane.b32.xlu0 %v393, 111
        %v1515 = vpop.permute.xlu0 %1514
        %vm1516 = vcmask 908288
        %v1517 = vsel %vm1516, %v1513, %v1515
        %v1521 = vsel %vm1516, %v1515, %v1513
        %s1522 = scalar_lea.vmem %s2, 16
        %v1523 = vld [vmem:[%s1522] ss:$8 sm:$0x3]
        %v1525 = vlaneseq
        %v1526 = vshrl.u32 %v1525, 7
        %v1527 = vsub.s32 0, %v1526
        %v1528 = vrot.slane %v1523, %v1527
        %v1529 = vlaneseq
        %v1530 = vshrl.u32 %v1529, 7
        %v1531 = vsub.s32 1, %v1530
        %v1532 = vrot.slane %v1523, %v1531
        %v1535 = vmul.f32 %v1517, %v1528
        %v1536 = vmul.f32 %v1521, %v1532
        %v1538 = vsel %vm448, %v1508, 0
        %v1541 = vsel %vm448, %v1509, 0
        %v1544 = vsel %vm448, %v1510, 0
        %v1547 = vsel %vm448, %v1511, 0
        %v1550 = vsel %vm461, %v1535, 0
        %v1553 = vsel %vm461, %v1536, 0
        %1555 = vmatprep.subr.mxu0 0.0
        %1556 = vmatpush1.msra.mxu0 0.0
        %1557 = vmatprep.subr.mxu0 0.0
        %1558 = vmatpush1.msra.mxu0 0.0
        %1559 = vmatprep.subr.mxu0 0.0
        %1560 = vmatpush1.msra.mxu0 0.0
        %1561 = vmatprep.subr.mxu0 0.0
        %1562 = vmatpush1.msra.mxu0 0.0
        %1563 = vmatprep.subr.mxu0 0.0
        %1564 = vmatpush1.msra.mxu0 0.0
        %1565 = vmatprep.subr.mxu0 0.0
        %1566 = vmatpush1.msra.mxu0 0.0
        %1567 = vmatprep.subr.mxu0 0.0
        %1568 = vmatpush1.msra.mxu0 0.0
        %1569 = vmatprep.subr.mxu0 0.0
        %1570 = vmatpush1.msra.mxu0 0.0
        %1571 = vmatprep.subr.mxu0 0.0
        %1572 = vmatpush1.msra.mxu0 0.0
        %1573 = vmatprep.subr.mxu0 0.0
        %1574 = vmatpush1.msra.mxu0 0.0
        %1575 = vmatprep.subr.mxu0 0.0
        %1576 = vmatpush1.msra.mxu0 0.0
        %1577 = vmatprep.subr.mxu0 0.0
        %1578 = vmatpush1.msra.mxu0 0.0
        %1579 = vmatprep.subr.mxu0 0.0
        %1580 = vmatpush1.msra.mxu0 0.0
        %1581 = vmatprep.subr.mxu0 0.0
        %1582 = vmatpush1.msra.mxu0 0.0
        %1583 = vmatprep.subr.mxu0 0.0
        %1584 = vmatpush1.msra.mxu0 0.0
        %1585 = vmatprep.subr.mxu0 %v1553
        %1586 = vmatpush1.msra.mxu0 %v1550
        %1587 = vmatprep.subr.mxu0 0.0
        %1588 = vmatpush2.msra.mxu0 0.0
        %1589 = vmatprep.subr.mxu0 0.0
        %1590 = vmatpush2.msra.mxu0 0.0
        %1591 = vmatprep.subr.mxu0 0.0
        %1592 = vmatpush2.msra.mxu0 0.0
        %1593 = vmatprep.subr.mxu0 0.0
        %1594 = vmatpush2.msra.mxu0 0.0
        %1595 = vmatprep.subr.mxu0 0.0
        %1596 = vmatpush2.msra.mxu0 0.0
        %1597 = vmatprep.subr.mxu0 0.0
        %1598 = vmatpush2.msra.mxu0 0.0
        %1599 = vmatprep.subr.mxu0 0.0
        %1600 = vmatpush2.msra.mxu0 0.0
        %1601 = vmatprep.subr.mxu0 0.0
        %1602 = vmatpush2.msra.mxu0 0.0
        %1603 = vmatprep.subr.mxu0 0.0
        %1604 = vmatpush2.msra.mxu0 0.0
        %1605 = vmatprep.subr.mxu0 0.0
        %1606 = vmatpush2.msra.mxu0 0.0
        %1607 = vmatprep.subr.mxu0 0.0
        %1608 = vmatpush2.msra.mxu0 0.0
        %1609 = vmatprep.subr.mxu0 0.0
        %1610 = vmatpush2.msra.mxu0 0.0
        %1611 = vmatprep.subr.mxu0 0.0
        %1612 = vmatpush2.msra.mxu0 0.0
        %1613 = vmatprep.subr.mxu0 0.0
        %1614 = vmatpush2.msra.mxu0 0.0
        %1615 = vmatprep.subr.mxu0 0.0
        %1616 = vmatpush2.msra.mxu0 0.0
        %1617 = vmatprep.subr.mxu0 0.0
        %1618 = vmatpush2.msra.mxu0 0.0
        %1619 = vmatprep.mubr.f32.mxu0 0.0
        %1620 = vmatmul.mubr.f32.gmra.mxu0 %v1538
        %v1621 = vpop.f32.mrf.mxu0
        %v1622 = vadd.f32 0.0, %v1621
        %v1623 = vpop.f32.mrf.mxu0
        %v1624 = vadd.f32 0.0, %v1623
        %1625 = vmatprep.mubr.f32.mxu0 0.0
        %1626 = vmatmul.mubr.f32.gmra.mxu0 %v1541
        %v1627 = vpop.f32.mrf.mxu0
        %v1628 = vadd.f32 0.0, %v1627
        %v1629 = vpop.f32.mrf.mxu0
        %v1630 = vadd.f32 0.0, %v1629
        %1631 = vmatprep.mubr.f32.mxu0 0.0
        %1632 = vmatmul.mubr.f32.gmra.mxu0 %v1544
        %v1633 = vpop.f32.mrf.mxu0
        %v1634 = vadd.f32 0.0, %v1633
        %v1635 = vpop.f32.mrf.mxu0
        %v1636 = vadd.f32 0.0, %v1635
        %1637 = vmatprep.mubr.f32.mxu0 0.0
        %1638 = vmatmul.mubr.f32.gmra.mxu0 %v1547
        %v1639 = vpop.f32.mrf.mxu0
        %v1640 = vadd.f32 0.0, %v1639
        %v1641 = vpop.f32.mrf.mxu0
        %v1642 = vadd.f32 0.0, %v1641
        %1643 = vdwg.mxu0
        %v1644 = vadd.f32 %v1499, %v1622
        %v1645 = vadd.f32 %v1500, %v1624
        %v1646 = vadd.f32 %v1501, %v1628
        %v1647 = vadd.f32 %v1502, %v1630
        %v1648 = vadd.f32 %v1503, %v1634
        %v1649 = vadd.f32 %v1504, %v1636
        %v1650 = vadd.f32 %v1505, %v1640
        %v1651 = vadd.f32 %v1506, %v1642
        %v1652 = vld [vmem:[%s4] sm:$0xff]
        %v1653 = vld [vmem:[%s4 + $0x8] sm:$0xff]
        %v1654 = vld [vmem:[%s4 + $0x10] sm:$0xff]
        %v1655 = vld [vmem:[%s4 + $0x18] sm:$0xff]
        %1657 = vset.pattern.permute.xlu0 0
        %1658 = vperm.xlu0 %1657, %v1652
        %v1659 = vpop.permute.xlu0 %1658
        %1662 = vset.pattern.permute.xlu0 0
        %1663 = vperm.xlu0 %1662, %v1653
        %v1664 = vpop.permute.xlu0 %1663
        %1667 = vset.pattern.permute.xlu0 0
        %1668 = vperm.xlu0 %1667, %v1654
        %v1669 = vpop.permute.xlu0 %1668
        %1672 = vset.pattern.permute.xlu0 0
        %1673 = vperm.xlu0 %1672, %v1655
        %v1674 = vpop.permute.xlu0 %1673
        %v1676 = vadd.f32 %v1644, %v1659
        %v1677 = vadd.f32 %v1645, %v1659
        %v1678 = vadd.f32 %v1646, %v1664
        %v1679 = vadd.f32 %v1647, %v1664
        %v1680 = vadd.f32 %v1648, %v1669
        %v1681 = vadd.f32 %v1649, %v1669
        %v1682 = vadd.f32 %v1650, %v1674
        %v1683 = vadd.f32 %v1651, %v1674
        %v1684 = vmax.f32 %v1676, 0.0
        %v1685 = vmax.f32 %v1677, 0.0
        %v1686 = vmax.f32 %v1678, 0.0
        %v1687 = vmax.f32 %v1679, 0.0
        %v1688 = vmax.f32 %v1680, 0.0
        %v1689 = vmax.f32 %v1681, 0.0
        %v1690 = vmax.f32 %v1682, 0.0
        %v1691 = vmax.f32 %v1683, 0.0
        %v1692 = vld [vmem:[%s5] sm:$0xff]
        %v1693 = vld [vmem:[%s5 + $0x8] sm:$0xff]
        %v1694 = vld [vmem:[%s5 + $0x10] sm:$0xff]
        %v1695 = vld [vmem:[%s5 + $0x18] sm:$0xff]
        %v1696 = vld [vmem:[%s6] sm:$0xff]
        %v1697 = vld [vmem:[%s6 + $0x8] sm:$0xff]
        %v1698 = vld [vmem:[%s6 + $0x10] sm:$0xff]
        %v1699 = vld [vmem:[%s6 + $0x18] sm:$0xff]
        %1701 = vset.pattern.permute.xlu0 0
        %1702 = vperm.xlu0 %1701, %v1696
        %v1703 = vpop.permute.xlu0 %1702
        %1706 = vset.pattern.permute.xlu0 0
        %1707 = vperm.xlu0 %1706, %v1697
        %v1708 = vpop.permute.xlu0 %1707
        %1711 = vset.pattern.permute.xlu0 0
        %1712 = vperm.xlu0 %1711, %v1698
        %v1713 = vpop.permute.xlu0 %1712
        %1716 = vset.pattern.permute.xlu0 0
        %1717 = vperm.xlu0 %1716, %v1699
        %v1718 = vpop.permute.xlu0 %1717
        %vm1720 = vcmask 261120
        %v1722 = vsel %vm1720, %v1692, 0
        %v1725 = vsel %vm1720, %v1693, 0
        %v1728 = vsel %vm1720, %v1694, 0
        %v1731 = vsel %vm1720, %v1695, 0
        %1733 = vmatprep.subr.mxu0 0.0
        %1734 = vmatpush1.msra.mxu0 0.0
        %1735 = vmatprep.subr.mxu0 0.0
        %1736 = vmatpush1.msra.mxu0 0.0
        %1737 = vmatprep.subr.mxu0 0.0
        %1738 = vmatpush1.msra.mxu0 0.0
        %1739 = vmatprep.subr.mxu0 0.0
        %1740 = vmatpush1.msra.mxu0 0.0
        %1741 = vmatprep.subr.mxu0 0.0
        %1742 = vmatpush1.msra.mxu0 0.0
        %1743 = vmatprep.subr.mxu0 0.0
        %1744 = vmatpush1.msra.mxu0 0.0
        %1745 = vmatprep.subr.mxu0 0.0
        %1746 = vmatpush1.msra.mxu0 0.0
        %1747 = vmatprep.subr.mxu0 0.0
        %1748 = vmatpush1.msra.mxu0 0.0
        %1749 = vmatprep.subr.mxu0 0.0
        %1750 = vmatpush1.msra.mxu0 0.0
        %1751 = vmatprep.subr.mxu0 0.0
        %1752 = vmatpush1.msra.mxu0 0.0
        %1753 = vmatprep.subr.mxu0 0.0
        %1754 = vmatpush1.msra.mxu0 0.0
        %1755 = vmatprep.subr.mxu0 0.0
        %1756 = vmatpush1.msra.mxu0 0.0
        %1757 = vmatprep.subr.mxu0 %v1691
        %1758 = vmatpush1.msra.mxu0 %v1690
        %1759 = vmatprep.subr.mxu0 %v1689
        %1760 = vmatpush1.msra.mxu0 %v1688
        %1761 = vmatprep.subr.mxu0 %v1687
        %1762 = vmatpush1.msra.mxu0 %v1686
        %1763 = vmatprep.subr.mxu0 %v1685
        %1764 = vmatpush1.msra.mxu0 %v1684
        %1765 = vmatprep.subr.mxu0 0.0
        %1766 = vmatpush2.msra.mxu0 0.0
        %1767 = vmatprep.subr.mxu0 0.0
        %1768 = vmatpush2.msra.mxu0 0.0
        %1769 = vmatprep.subr.mxu0 0.0
        %1770 = vmatpush2.msra.mxu0 0.0
        %1771 = vmatprep.subr.mxu0 0.0
        %1772 = vmatpush2.msra.mxu0 0.0
        %1773 = vmatprep.subr.mxu0 0.0
        %1774 = vmatpush2.msra.mxu0 0.0
        %1775 = vmatprep.subr.mxu0 0.0
        %1776 = vmatpush2.msra.mxu0 0.0
        %1777 = vmatprep.subr.mxu0 0.0
        %1778 = vmatpush2.msra.mxu0 0.0
        %1779 = vmatprep.subr.mxu0 0.0
        %1780 = vmatpush2.msra.mxu0 0.0
        %1781 = vmatprep.subr.mxu0 0.0
        %1782 = vmatpush2.msra.mxu0 0.0
        %1783 = vmatprep.subr.mxu0 0.0
        %1784 = vmatpush2.msra.mxu0 0.0
        %1785 = vmatprep.subr.mxu0 0.0
        %1786 = vmatpush2.msra.mxu0 0.0
        %1787 = vmatprep.subr.mxu0 0.0
        %1788 = vmatpush2.msra.mxu0 0.0
        %1789 = vmatprep.subr.mxu0 0.0
        %1790 = vmatpush2.msra.mxu0 0.0
        %1791 = vmatprep.subr.mxu0 0.0
        %1792 = vmatpush2.msra.mxu0 0.0
        %1793 = vmatprep.subr.mxu0 0.0
        %1794 = vmatpush2.msra.mxu0 0.0
        %1795 = vmatprep.subr.mxu0 0.0
        %1796 = vmatpush2.msra.mxu0 0.0
        %1797 = vmatprep.mubr.f32.mxu0 0.0
        %1798 = vmatmul.mubr.f32.gmra.mxu0 %v1722
        %v1799 = vpop.f32.mrf.mxu0
        %v1800 = vadd.f32 %v1703, %v1799
        %v1801 = vpop.f32.mrf.mxu0
        %v1802 = vadd.f32 %v1703, %v1801
        %1803 = vmatprep.mubr.f32.mxu0 0.0
        %1804 = vmatmul.mubr.f32.gmra.mxu0 %v1725
        %v1805 = vpop.f32.mrf.mxu0
        %v1806 = vadd.f32 %v1708, %v1805
        %v1807 = vpop.f32.mrf.mxu0
        %v1808 = vadd.f32 %v1708, %v1807
        %1809 = vmatprep.mubr.f32.mxu0 0.0
        %1810 = vmatmul.mubr.f32.gmra.mxu0 %v1728
        %v1811 = vpop.f32.mrf.mxu0
        %v1812 = vadd.f32 %v1713, %v1811
        %v1813 = vpop.f32.mrf.mxu0
        %v1814 = vadd.f32 %v1713, %v1813
        %1815 = vmatprep.mubr.f32.mxu0 0.0
        %1816 = vmatmul.mubr.f32.gmra.mxu0 %v1731
        %v1817 = vpop.f32.mrf.mxu0
        %v1818 = vadd.f32 %v1718, %v1817
        %v1819 = vpop.f32.mrf.mxu0
        %v1820 = vadd.f32 %v1718, %v1819
        %1821 = vdwg.mxu0
        %v1822 = vmax.f32 %v1800, 0.0
        %v1823 = vmax.f32 %v1802, 0.0
        %v1824 = vmax.f32 %v1806, 0.0
        %v1825 = vmax.f32 %v1808, 0.0
        %v1826 = vmax.f32 %v1812, 0.0
        %v1827 = vmax.f32 %v1814, 0.0
        %v1828 = vmax.f32 %v1818, 0.0
        %v1829 = vmax.f32 %v1820, 0.0
        %v1830 = vld [vmem:[%s7] sm:$0xff]
        %1835 = vrot.lane.b32.xlu0 %v1823, 17
        %v1836 = vpop.permute.xlu0 %1835
        %1837 = vrot.lane.b32.xlu0 %v1825, 17
        %v1838 = vpop.permute.xlu0 %1837
        %1839 = vrot.lane.b32.xlu0 %v1827, 17
        %v1840 = vpop.permute.xlu0 %1839
        %1841 = vrot.lane.b32.xlu0 %v1829, 17
        %v1842 = vpop.permute.xlu0 %1841
        %1851 = vrot.lane.b32.xlu0 %v1822, 17
        %v1852 = vpop.permute.xlu0 %1851
        %1853 = vrot.lane.b32.xlu0 %v1824, 17
        %v1854 = vpop.permute.xlu0 %1853
        %1855 = vrot.lane.b32.xlu0 %v1826, 17
        %v1856 = vpop.permute.xlu0 %1855
        %1857 = vrot.lane.b32.xlu0 %v1828, 17
        %v1858 = vpop.permute.xlu0 %1857
        %v1859 = vsel %vm399, %v1852, %v1836
        %v1860 = vsel %vm399, %v1854, %v1838
        %v1861 = vsel %vm399, %v1856, %v1840
        %v1862 = vsel %vm399, %v1858, %v1842
        %v1871 = vsel %vm399, %v1836, %v1852
        %v1872 = vsel %vm399, %v1838, %v1854
        %v1873 = vsel %vm399, %v1840, %v1856
        %v1874 = vsel %vm399, %v1842, %v1858
        %v1875 = vmul.f32 %v1871, %v409
        %v1876 = vmul.f32 %v1859, %v413
        %v1877 = vmul.f32 %v1872, %v409
        %v1878 = vmul.f32 %v1860, %v413
        %v1879 = vmul.f32 %v1873, %v409
        %v1880 = vmul.f32 %v1861, %v413
        %v1881 = vmul.f32 %v1874, %v409
        %v1882 = vmul.f32 %v1862, %v413
        %s1883 = scalar_lea.vmem %s7, 8
        %v1884 = vld [vmem:[%s1883] sm:$0xff]
        %1885 = vrot.lane.b32.xlu0 %v1823, 16
        %v1886 = vpop.permute.xlu0 %1885
        %1887 = vrot.lane.b32.xlu0 %v1825, 16
        %v1888 = vpop.permute.xlu0 %1887
        %1889 = vrot.lane.b32.xlu0 %v1827, 16
        %v1890 = vpop.permute.xlu0 %1889
        %1891 = vrot.lane.b32.xlu0 %v1829, 16
        %v1892 = vpop.permute.xlu0 %1891
        %1897 = vrot.lane.b32.xlu0 %v1822, 16
        %v1898 = vpop.permute.xlu0 %1897
        %1899 = vrot.lane.b32.xlu0 %v1824, 16
        %v1900 = vpop.permute.xlu0 %1899
        %1901 = vrot.lane.b32.xlu0 %v1826, 16
        %v1902 = vpop.permute.xlu0 %1901
        %1903 = vrot.lane.b32.xlu0 %v1828, 16
        %v1904 = vpop.permute.xlu0 %1903
        %v1905 = vsel %vm428, %v1898, %v1886
        %v1906 = vsel %vm428, %v1900, %v1888
        %v1907 = vsel %vm428, %v1902, %v1890
        %v1908 = vsel %vm428, %v1904, %v1892
        %v1917 = vsel %vm428, %v1886, %v1898
        %v1918 = vsel %vm428, %v1888, %v1900
        %v1919 = vsel %vm428, %v1890, %v1902
        %v1920 = vsel %vm428, %v1892, %v1904
        %v1921 = vmul.f32 %v1917, %v439
        %v1922 = vmul.f32 %v1905, %v443
        %v1923 = vmul.f32 %v1918, %v439
        %v1924 = vmul.f32 %v1906, %v443
        %v1925 = vmul.f32 %v1919, %v439
        %v1926 = vmul.f32 %v1907, %v443
        %v1927 = vmul.f32 %v1920, %v439
        %v1928 = vmul.f32 %v1908, %v443
        %v1930 = vsel %vm1720, %v1884, 0
        %1932 = vmatprep.subr.mxu0 0.0
        %1933 = vmatpush1.msra.mxu0 0.0
        %1934 = vmatprep.subr.mxu0 0.0
        %1935 = vmatpush1.msra.mxu0 0.0
        %1936 = vmatprep.subr.mxu0 0.0
        %1937 = vmatpush1.msra.mxu0 0.0
        %1938 = vmatprep.subr.mxu0 0.0
        %1939 = vmatpush1.msra.mxu0 0.0
        %1940 = vmatprep.subr.mxu0 0.0
        %1941 = vmatpush1.msra.mxu0 0.0
        %1942 = vmatprep.subr.mxu0 0.0
        %1943 = vmatpush1.msra.mxu0 0.0
        %1944 = vmatprep.subr.mxu0 0.0
        %1945 = vmatpush1.msra.mxu0 0.0
        %1946 = vmatprep.subr.mxu0 0.0
        %1947 = vmatpush1.msra.mxu0 0.0
        %1948 = vmatprep.subr.mxu0 0.0
        %1949 = vmatpush1.msra.mxu0 0.0
        %1950 = vmatprep.subr.mxu0 0.0
        %1951 = vmatpush1.msra.mxu0 0.0
        %1952 = vmatprep.subr.mxu0 0.0
        %1953 = vmatpush1.msra.mxu0 0.0
        %1954 = vmatprep.subr.mxu0 0.0
        %1955 = vmatpush1.msra.mxu0 0.0
        %1956 = vmatprep.subr.mxu0 %v1928
        %1957 = vmatpush1.msra.mxu0 %v1927
        %1958 = vmatprep.subr.mxu0 %v1926
        %1959 = vmatpush1.msra.mxu0 %v1925
        %1960 = vmatprep.subr.mxu0 %v1924
        %1961 = vmatpush1.msra.mxu0 %v1923
        %1962 = vmatprep.subr.mxu0 %v1922
        %1963 = vmatpush1.msra.mxu0 %v1921
        %1964 = vmatprep.subr.mxu0 0.0
        %1965 = vmatpush2.msra.mxu0 0.0
        %1966 = vmatprep.subr.mxu0 0.0
        %1967 = vmatpush2.msra.mxu0 0.0
        %1968 = vmatprep.subr.mxu0 0.0
        %1969 = vmatpush2.msra.mxu0 0.0
        %1970 = vmatprep.subr.mxu0 0.0
        %1971 = vmatpush2.msra.mxu0 0.0
        %1972 = vmatprep.subr.mxu0 0.0
        %1973 = vmatpush2.msra.mxu0 0.0
        %1974 = vmatprep.subr.mxu0 0.0
        %1975 = vmatpush2.msra.mxu0 0.0
        %1976 = vmatprep.subr.mxu0 0.0
        %1977 = vmatpush2.msra.mxu0 0.0
        %1978 = vmatprep.subr.mxu0 0.0
        %1979 = vmatpush2.msra.mxu0 0.0
        %1980 = vmatprep.subr.mxu0 0.0
        %1981 = vmatpush2.msra.mxu0 0.0
        %1982 = vmatprep.subr.mxu0 0.0
        %1983 = vmatpush2.msra.mxu0 0.0
        %1984 = vmatprep.subr.mxu0 0.0
        %1985 = vmatpush2.msra.mxu0 0.0
        %1986 = vmatprep.subr.mxu0 0.0
        %1987 = vmatpush2.msra.mxu0 0.0
        %1988 = vmatprep.subr.mxu0 0.0
        %1989 = vmatpush2.msra.mxu0 0.0
        %1990 = vmatprep.subr.mxu0 0.0
        %1991 = vmatpush2.msra.mxu0 0.0
        %1992 = vmatprep.subr.mxu0 0.0
        %1993 = vmatpush2.msra.mxu0 0.0
        %1994 = vmatprep.subr.mxu0 0.0
        %1995 = vmatpush2.msra.mxu0 0.0
        %1996 = vmatprep.mubr.f32.mxu0 0.0
        %1997 = vmatmul.mubr.f32.gmra.mxu0 %v1930
        %v1998 = vpop.f32.mrf.mxu0
        %v1999 = vadd.f32 0.0, %v1998
        %v2000 = vpop.f32.mrf.mxu0
        %v2001 = vadd.f32 0.0, %v2000
        %2002 = vdwg.mxu0
        %v2004 = vsel %vm1720, %v1830, 0
        %2006 = vmatprep.subr.mxu0 0.0
        %2007 = vmatpush1.msra.mxu0 0.0
        %2008 = vmatprep.subr.mxu0 0.0
        %2009 = vmatpush1.msra.mxu0 0.0
        %2010 = vmatprep.subr.mxu0 0.0
        %2011 = vmatpush1.msra.mxu0 0.0
        %2012 = vmatprep.subr.mxu0 0.0
        %2013 = vmatpush1.msra.mxu0 0.0
        %2014 = vmatprep.subr.mxu0 0.0
        %2015 = vmatpush1.msra.mxu0 0.0
        %2016 = vmatprep.subr.mxu0 0.0
        %2017 = vmatpush1.msra.mxu0 0.0
        %2018 = vmatprep.subr.mxu0 0.0
        %2019 = vmatpush1.msra.mxu0 0.0
        %2020 = vmatprep.subr.mxu0 0.0
        %2021 = vmatpush1.msra.mxu0 0.0
        %2022 = vmatprep.subr.mxu0 0.0
        %2023 = vmatpush1.msra.mxu0 0.0
        %2024 = vmatprep.subr.mxu0 0.0
        %2025 = vmatpush1.msra.mxu0 0.0
        %2026 = vmatprep.subr.mxu0 0.0
        %2027 = vmatpush1.msra.mxu0 0.0
        %2028 = vmatprep.subr.mxu0 0.0
        %2029 = vmatpush1.msra.mxu0 0.0
        %2030 = vmatprep.subr.mxu0 %v1882
        %2031 = vmatpush1.msra.mxu0 %v1881
        %2032 = vmatprep.subr.mxu0 %v1880
        %2033 = vmatpush1.msra.mxu0 %v1879
        %2034 = vmatprep.subr.mxu0 %v1878
        %2035 = vmatpush1.msra.mxu0 %v1877
        %2036 = vmatprep.subr.mxu0 %v1876
        %2037 = vmatpush1.msra.mxu0 %v1875
        %2038 = vmatprep.subr.mxu0 0.0
        %2039 = vmatpush2.msra.mxu0 0.0
        %2040 = vmatprep.subr.mxu0 0.0
        %2041 = vmatpush2.msra.mxu0 0.0
        %2042 = vmatprep.subr.mxu0 0.0
        %2043 = vmatpush2.msra.mxu0 0.0
        %2044 = vmatprep.subr.mxu0 0.0
        %2045 = vmatpush2.msra.mxu0 0.0
        %2046 = vmatprep.subr.mxu0 0.0
        %2047 = vmatpush2.msra.mxu0 0.0
        %2048 = vmatprep.subr.mxu0 0.0
        %2049 = vmatpush2.msra.mxu0 0.0
        %2050 = vmatprep.subr.mxu0 0.0
        %2051 = vmatpush2.msra.mxu0 0.0
        %2052 = vmatprep.subr.mxu0 0.0
        %2053 = vmatpush2.msra.mxu0 0.0
        %2054 = vmatprep.subr.mxu0 0.0
        %2055 = vmatpush2.msra.mxu0 0.0
        %2056 = vmatprep.subr.mxu0 0.0
        %2057 = vmatpush2.msra.mxu0 0.0
        %2058 = vmatprep.subr.mxu0 0.0
        %2059 = vmatpush2.msra.mxu0 0.0
        %2060 = vmatprep.subr.mxu0 0.0
        %2061 = vmatpush2.msra.mxu0 0.0
        %2062 = vmatprep.subr.mxu0 0.0
        %2063 = vmatpush2.msra.mxu0 0.0
        %2064 = vmatprep.subr.mxu0 0.0
        %2065 = vmatpush2.msra.mxu0 0.0
        %2066 = vmatprep.subr.mxu0 0.0
        %2067 = vmatpush2.msra.mxu0 0.0
        %2068 = vmatprep.subr.mxu0 0.0
        %2069 = vmatpush2.msra.mxu0 0.0
        %2070 = vmatprep.mubr.f32.mxu0 0.0
        %2071 = vmatmul.mubr.f32.gmra.mxu0 %v2004
        %v2072 = vpop.f32.mrf.mxu0
        %v2073 = vadd.f32 %v1999, %v2072
        %v2074 = vpop.f32.mrf.mxu0
        %v2075 = vadd.f32 %v2001, %v2074
        %2076 = vdwg.mxu0
        %s2077 = scalar_lea.vmem %s7, 16
        %v2078 = vld [vmem:[%s2077] sm:$0xff]
        %2079 = vrot.lane.b32.xlu0 %v1823, 15
        %v2080 = vpop.permute.xlu0 %2079
        %2081 = vrot.lane.b32.xlu0 %v1825, 15
        %v2082 = vpop.permute.xlu0 %2081
        %2083 = vrot.lane.b32.xlu0 %v1827, 15
        %v2084 = vpop.permute.xlu0 %2083
        %2085 = vrot.lane.b32.xlu0 %v1829, 15
        %v2086 = vpop.permute.xlu0 %2085
        %2091 = vrot.lane.b32.xlu0 %v1822, 15
        %v2092 = vpop.permute.xlu0 %2091
        %2093 = vrot.lane.b32.xlu0 %v1824, 15
        %v2094 = vpop.permute.xlu0 %2093
        %2095 = vrot.lane.b32.xlu0 %v1826, 15
        %v2096 = vpop.permute.xlu0 %2095
        %2097 = vrot.lane.b32.xlu0 %v1828, 15
        %v2098 = vpop.permute.xlu0 %2097
        %v2099 = vsel %vm674, %v2092, %v2080
        %v2100 = vsel %vm674, %v2094, %v2082
        %v2101 = vsel %vm674, %v2096, %v2084
        %v2102 = vsel %vm674, %v2098, %v2086
        %v2111 = vsel %vm674, %v2080, %v2092
        %v2112 = vsel %vm674, %v2082, %v2094
        %v2113 = vsel %vm674, %v2084, %v2096
        %v2114 = vsel %vm674, %v2086, %v2098
        %v2115 = vmul.f32 %v2111, %v685
        %v2116 = vmul.f32 %v2099, %v689
        %v2117 = vmul.f32 %v2112, %v685
        %v2118 = vmul.f32 %v2100, %v689
        %v2119 = vmul.f32 %v2113, %v685
        %v2120 = vmul.f32 %v2101, %v689
        %v2121 = vmul.f32 %v2114, %v685
        %v2122 = vmul.f32 %v2102, %v689
        %v2124 = vsel %vm1720, %v2078, 0
        %2126 = vmatprep.subr.mxu0 0.0
        %2127 = vmatpush1.msra.mxu0 0.0
        %2128 = vmatprep.subr.mxu0 0.0
        %2129 = vmatpush1.msra.mxu0 0.0
        %2130 = vmatprep.subr.mxu0 0.0
        %2131 = vmatpush1.msra.mxu0 0.0
        %2132 = vmatprep.subr.mxu0 0.0
        %2133 = vmatpush1.msra.mxu0 0.0
        %2134 = vmatprep.subr.mxu0 0.0
        %2135 = vmatpush1.msra.mxu0 0.0
        %2136 = vmatprep.subr.mxu0 0.0
        %2137 = vmatpush1.msra.mxu0 0.0
        %2138 = vmatprep.subr.mxu0 0.0
        %2139 = vmatpush1.msra.mxu0 0.0
        %2140 = vmatprep.subr.mxu0 0.0
        %2141 = vmatpush1.msra.mxu0 0.0
        %2142 = vmatprep.subr.mxu0 0.0
        %2143 = vmatpush1.msra.mxu0 0.0
        %2144 = vmatprep.subr.mxu0 0.0
        %2145 = vmatpush1.msra.mxu0 0.0
        %2146 = vmatprep.subr.mxu0 0.0
        %2147 = vmatpush1.msra.mxu0 0.0
        %2148 = vmatprep.subr.mxu0 0.0
        %2149 = vmatpush1.msra.mxu0 0.0
        %2150 = vmatprep.subr.mxu0 %v2122
        %2151 = vmatpush1.msra.mxu0 %v2121
        %2152 = vmatprep.subr.mxu0 %v2120
        %2153 = vmatpush1.msra.mxu0 %v2119
        %2154 = vmatprep.subr.mxu0 %v2118
        %2155 = vmatpush1.msra.mxu0 %v2117
        %2156 = vmatprep.subr.mxu0 %v2116
        %2157 = vmatpush1.msra.mxu0 %v2115
        %2158 = vmatprep.subr.mxu0 0.0
        %2159 = vmatpush2.msra.mxu0 0.0
        %2160 = vmatprep.subr.mxu0 0.0
        %2161 = vmatpush2.msra.mxu0 0.0
        %2162 = vmatprep.subr.mxu0 0.0
        %2163 = vmatpush2.msra.mxu0 0.0
        %2164 = vmatprep.subr.mxu0 0.0
        %2165 = vmatpush2.msra.mxu0 0.0
        %2166 = vmatprep.subr.mxu0 0.0
        %2167 = vmatpush2.msra.mxu0 0.0
        %2168 = vmatprep.subr.mxu0 0.0
        %2169 = vmatpush2.msra.mxu0 0.0
        %2170 = vmatprep.subr.mxu0 0.0
        %2171 = vmatpush2.msra.mxu0 0.0
        %2172 = vmatprep.subr.mxu0 0.0
        %2173 = vmatpush2.msra.mxu0 0.0
        %2174 = vmatprep.subr.mxu0 0.0
        %2175 = vmatpush2.msra.mxu0 0.0
        %2176 = vmatprep.subr.mxu0 0.0
        %2177 = vmatpush2.msra.mxu0 0.0
        %2178 = vmatprep.subr.mxu0 0.0
        %2179 = vmatpush2.msra.mxu0 0.0
        %2180 = vmatprep.subr.mxu0 0.0
        %2181 = vmatpush2.msra.mxu0 0.0
        %2182 = vmatprep.subr.mxu0 0.0
        %2183 = vmatpush2.msra.mxu0 0.0
        %2184 = vmatprep.subr.mxu0 0.0
        %2185 = vmatpush2.msra.mxu0 0.0
        %2186 = vmatprep.subr.mxu0 0.0
        %2187 = vmatpush2.msra.mxu0 0.0
        %2188 = vmatprep.subr.mxu0 0.0
        %2189 = vmatpush2.msra.mxu0 0.0
        %2190 = vmatprep.mubr.f32.mxu0 0.0
        %2191 = vmatmul.mubr.f32.gmra.mxu0 %v2124
        %v2192 = vpop.f32.mrf.mxu0
        %v2193 = vadd.f32 0.0, %v2192
        %v2194 = vpop.f32.mrf.mxu0
        %v2195 = vadd.f32 0.0, %v2194
        %2196 = vdwg.mxu0
        %v2197 = vadd.f32 %v2073, %v2193
        %v2198 = vadd.f32 %v2075, %v2195
        %s2199 = scalar_lea.vmem %s7, 24
        %v2200 = vld [vmem:[%s2199] sm:$0xff]
        %2201 = vrot.lane.b32.xlu0 %v1823, 1
        %v2202 = vpop.permute.xlu0 %2201
        %2203 = vrot.lane.b32.xlu0 %v1825, 1
        %v2204 = vpop.permute.xlu0 %2203
        %2205 = vrot.lane.b32.xlu0 %v1827, 1
        %v2206 = vpop.permute.xlu0 %2205
        %2207 = vrot.lane.b32.xlu0 %v1829, 1
        %v2208 = vpop.permute.xlu0 %2207
        %2213 = vrot.lane.b32.xlu0 %v1822, 1
        %v2214 = vpop.permute.xlu0 %2213
        %2215 = vrot.lane.b32.xlu0 %v1824, 1
        %v2216 = vpop.permute.xlu0 %2215
        %2217 = vrot.lane.b32.xlu0 %v1826, 1
        %v2218 = vpop.permute.xlu0 %2217
        %2219 = vrot.lane.b32.xlu0 %v1828, 1
        %v2220 = vpop.permute.xlu0 %2219
        %v2221 = vsel %vm819, %v2214, %v2202
        %v2222 = vsel %vm819, %v2216, %v2204
        %v2223 = vsel %vm819, %v2218, %v2206
        %v2224 = vsel %vm819, %v2220, %v2208
        %v2233 = vsel %vm819, %v2202, %v2214
        %v2234 = vsel %vm819, %v2204, %v2216
        %v2235 = vsel %vm819, %v2206, %v2218
        %v2236 = vsel %vm819, %v2208, %v2220
        %v2237 = vmul.f32 %v2233, %v830
        %v2238 = vmul.f32 %v2221, %v834
        %v2239 = vmul.f32 %v2234, %v830
        %v2240 = vmul.f32 %v2222, %v834
        %v2241 = vmul.f32 %v2235, %v830
        %v2242 = vmul.f32 %v2223, %v834
        %v2243 = vmul.f32 %v2236, %v830
        %v2244 = vmul.f32 %v2224, %v834
        %v2246 = vsel %vm1720, %v2200, 0
        %2248 = vmatprep.subr.mxu0 0.0
        %2249 = vmatpush1.msra.mxu0 0.0
        %2250 = vmatprep.subr.mxu0 0.0
        %2251 = vmatpush1.msra.mxu0 0.0
        %2252 = vmatprep.subr.mxu0 0.0
        %2253 = vmatpush1.msra.mxu0 0.0
        %2254 = vmatprep.subr.mxu0 0.0
        %2255 = vmatpush1.msra.mxu0 0.0
        %2256 = vmatprep.subr.mxu0 0.0
        %2257 = vmatpush1.msra.mxu0 0.0
        %2258 = vmatprep.subr.mxu0 0.0
        %2259 = vmatpush1.msra.mxu0 0.0
        %2260 = vmatprep.subr.mxu0 0.0
        %2261 = vmatpush1.msra.mxu0 0.0
        %2262 = vmatprep.subr.mxu0 0.0
        %2263 = vmatpush1.msra.mxu0 0.0
        %2264 = vmatprep.subr.mxu0 0.0
        %2265 = vmatpush1.msra.mxu0 0.0
        %2266 = vmatprep.subr.mxu0 0.0
        %2267 = vmatpush1.msra.mxu0 0.0
        %2268 = vmatprep.subr.mxu0 0.0
        %2269 = vmatpush1.msra.mxu0 0.0
        %2270 = vmatprep.subr.mxu0 0.0
        %2271 = vmatpush1.msra.mxu0 0.0
        %2272 = vmatprep.subr.mxu0 %v2244
        %2273 = vmatpush1.msra.mxu0 %v2243
        %2274 = vmatprep.subr.mxu0 %v2242
        %2275 = vmatpush1.msra.mxu0 %v2241
        %2276 = vmatprep.subr.mxu0 %v2240
        %2277 = vmatpush1.msra.mxu0 %v2239
        %2278 = vmatprep.subr.mxu0 %v2238
        %2279 = vmatpush1.msra.mxu0 %v2237
        %2280 = vmatprep.subr.mxu0 0.0
        %2281 = vmatpush2.msra.mxu0 0.0
        %2282 = vmatprep.subr.mxu0 0.0
        %2283 = vmatpush2.msra.mxu0 0.0
        %2284 = vmatprep.subr.mxu0 0.0
        %2285 = vmatpush2.msra.mxu0 0.0
        %2286 = vmatprep.subr.mxu0 0.0
        %2287 = vmatpush2.msra.mxu0 0.0
        %2288 = vmatprep.subr.mxu0 0.0
        %2289 = vmatpush2.msra.mxu0 0.0
        %2290 = vmatprep.subr.mxu0 0.0
        %2291 = vmatpush2.msra.mxu0 0.0
        %2292 = vmatprep.subr.mxu0 0.0
        %2293 = vmatpush2.msra.mxu0 0.0
        %2294 = vmatprep.subr.mxu0 0.0
        %2295 = vmatpush2.msra.mxu0 0.0
        %2296 = vmatprep.subr.mxu0 0.0
        %2297 = vmatpush2.msra.mxu0 0.0
        %2298 = vmatprep.subr.mxu0 0.0
        %2299 = vmatpush2.msra.mxu0 0.0
        %2300 = vmatprep.subr.mxu0 0.0
        %2301 = vmatpush2.msra.mxu0 0.0
        %2302 = vmatprep.subr.mxu0 0.0
        %2303 = vmatpush2.msra.mxu0 0.0
        %2304 = vmatprep.subr.mxu0 0.0
        %2305 = vmatpush2.msra.mxu0 0.0
        %2306 = vmatprep.subr.mxu0 0.0
        %2307 = vmatpush2.msra.mxu0 0.0
        %2308 = vmatprep.subr.mxu0 0.0
        %2309 = vmatpush2.msra.mxu0 0.0
        %2310 = vmatprep.subr.mxu0 0.0
        %2311 = vmatpush2.msra.mxu0 0.0
        %2312 = vmatprep.mubr.f32.mxu0 0.0
        %2313 = vmatmul.mubr.f32.gmra.mxu0 %v2246
        %v2314 = vpop.f32.mrf.mxu0
        %v2315 = vadd.f32 0.0, %v2314
        %v2316 = vpop.f32.mrf.mxu0
        %v2317 = vadd.f32 0.0, %v2316
        %2318 = vdwg.mxu0
        %v2319 = vadd.f32 %v2197, %v2315
        %v2320 = vadd.f32 %v2198, %v2317
        %s2321 = scalar_lea.vmem %s7, 32
        %v2322 = vld [vmem:[%s2321] sm:$0xff]
        %v2324 = vsel %vm1720, %v2322, 0
        %2326 = vmatprep.subr.mxu0 0.0
        %2327 = vmatpush1.msra.mxu0 0.0
        %2328 = vmatprep.subr.mxu0 0.0
        %2329 = vmatpush1.msra.mxu0 0.0
        %2330 = vmatprep.subr.mxu0 0.0
        %2331 = vmatpush1.msra.mxu0 0.0
        %2332 = vmatprep.subr.mxu0 0.0
        %2333 = vmatpush1.msra.mxu0 0.0
        %2334 = vmatprep.subr.mxu0 0.0
        %2335 = vmatpush1.msra.mxu0 0.0
        %2336 = vmatprep.subr.mxu0 0.0
        %2337 = vmatpush1.msra.mxu0 0.0
        %2338 = vmatprep.subr.mxu0 0.0
        %2339 = vmatpush1.msra.mxu0 0.0
        %2340 = vmatprep.subr.mxu0 0.0
        %2341 = vmatpush1.msra.mxu0 0.0
        %2342 = vmatprep.subr.mxu0 0.0
        %2343 = vmatpush1.msra.mxu0 0.0
        %2344 = vmatprep.subr.mxu0 0.0
        %2345 = vmatpush1.msra.mxu0 0.0
        %2346 = vmatprep.subr.mxu0 0.0
        %2347 = vmatpush1.msra.mxu0 0.0
        %2348 = vmatprep.subr.mxu0 0.0
        %2349 = vmatpush1.msra.mxu0 0.0
        %2350 = vmatprep.subr.mxu0 %v1829
        %2351 = vmatpush1.msra.mxu0 %v1828
        %2352 = vmatprep.subr.mxu0 %v1827
        %2353 = vmatpush1.msra.mxu0 %v1826
        %2354 = vmatprep.subr.mxu0 %v1825
        %2355 = vmatpush1.msra.mxu0 %v1824
        %2356 = vmatprep.subr.mxu0 %v1823
        %2357 = vmatpush1.msra.mxu0 %v1822
        %2358 = vmatprep.subr.mxu0 0.0
        %2359 = vmatpush2.msra.mxu0 0.0
        %2360 = vmatprep.subr.mxu0 0.0
        %2361 = vmatpush2.msra.mxu0 0.0
        %2362 = vmatprep.subr.mxu0 0.0
        %2363 = vmatpush2.msra.mxu0 0.0
        %2364 = vmatprep.subr.mxu0 0.0
        %2365 = vmatpush2.msra.mxu0 0.0
        %2366 = vmatprep.subr.mxu0 0.0
        %2367 = vmatpush2.msra.mxu0 0.0
        %2368 = vmatprep.subr.mxu0 0.0
        %2369 = vmatpush2.msra.mxu0 0.0
        %2370 = vmatprep.subr.mxu0 0.0
        %2371 = vmatpush2.msra.mxu0 0.0
        %2372 = vmatprep.subr.mxu0 0.0
        %2373 = vmatpush2.msra.mxu0 0.0
        %2374 = vmatprep.subr.mxu0 0.0
        %2375 = vmatpush2.msra.mxu0 0.0
        %2376 = vmatprep.subr.mxu0 0.0
        %2377 = vmatpush2.msra.mxu0 0.0
        %2378 = vmatprep.subr.mxu0 0.0
        %2379 = vmatpush2.msra.mxu0 0.0
        %2380 = vmatprep.subr.mxu0 0.0
        %2381 = vmatpush2.msra.mxu0 0.0
        %2382 = vmatprep.subr.mxu0 0.0
        %2383 = vmatpush2.msra.mxu0 0.0
        %2384 = vmatprep.subr.mxu0 0.0
        %2385 = vmatpush2.msra.mxu0 0.0
        %2386 = vmatprep.subr.mxu0 0.0
        %2387 = vmatpush2.msra.mxu0 0.0
        %2388 = vmatprep.subr.mxu0 0.0
        %2389 = vmatpush2.msra.mxu0 0.0
        %2390 = vmatprep.mubr.f32.mxu0 0.0
        %2391 = vmatmul.mubr.f32.gmra.mxu0 %v2324
        %v2392 = vpop.f32.mrf.mxu0
        %v2393 = vadd.f32 0.0, %v2392
        %v2394 = vpop.f32.mrf.mxu0
        %v2395 = vadd.f32 0.0, %v2394
        %2396 = vdwg.mxu0
        %v2397 = vadd.f32 %v2319, %v2393
        %v2398 = vadd.f32 %v2320, %v2395
        %s2399 = scalar_lea.vmem %s7, 40
        %v2400 = vld [vmem:[%s2399] sm:$0xff]
        %2401 = vrot.lane.b32.xlu0 %v1822, 127
        %v2402 = vpop.permute.xlu0 %2401
        %2403 = vrot.lane.b32.xlu0 %v1823, 127
        %v2404 = vpop.permute.xlu0 %2403
        %2405 = vrot.lane.b32.xlu0 %v1824, 127
        %v2406 = vpop.permute.xlu0 %2405
        %2407 = vrot.lane.b32.xlu0 %v1825, 127
        %v2408 = vpop.permute.xlu0 %2407
        %2409 = vrot.lane.b32.xlu0 %v1826, 127
        %v2410 = vpop.permute.xlu0 %2409
        %2411 = vrot.lane.b32.xlu0 %v1827, 127
        %v2412 = vpop.permute.xlu0 %2411
        %2413 = vrot.lane.b32.xlu0 %v1828, 127
        %v2414 = vpop.permute.xlu0 %2413
        %2415 = vrot.lane.b32.xlu0 %v1829, 127
        %v2416 = vpop.permute.xlu0 %2415
        %v2417 = vsel %vm1081, %v2402, %v2404
        %v2418 = vsel %vm1081, %v2406, %v2408
        %v2419 = vsel %vm1081, %v2410, %v2412
        %v2420 = vsel %vm1081, %v2414, %v2416
        %v2433 = vsel %vm1081, %v2404, %v2402
        %v2434 = vsel %vm1081, %v2408, %v2406
        %v2435 = vsel %vm1081, %v2412, %v2410
        %v2436 = vsel %vm1081, %v2416, %v2414
        %v2437 = vmul.f32 %v2417, %v1093
        %v2438 = vmul.f32 %v2433, %v1097
        %v2439 = vmul.f32 %v2418, %v1093
        %v2440 = vmul.f32 %v2434, %v1097
        %v2441 = vmul.f32 %v2419, %v1093
        %v2442 = vmul.f32 %v2435, %v1097
        %v2443 = vmul.f32 %v2420, %v1093
        %v2444 = vmul.f32 %v2436, %v1097
        %v2446 = vsel %vm1720, %v2400, 0
        %2448 = vmatprep.subr.mxu0 0.0
        %2449 = vmatpush1.msra.mxu0 0.0
        %2450 = vmatprep.subr.mxu0 0.0
        %2451 = vmatpush1.msra.mxu0 0.0
        %2452 = vmatprep.subr.mxu0 0.0
        %2453 = vmatpush1.msra.mxu0 0.0
        %2454 = vmatprep.subr.mxu0 0.0
        %2455 = vmatpush1.msra.mxu0 0.0
        %2456 = vmatprep.subr.mxu0 0.0
        %2457 = vmatpush1.msra.mxu0 0.0
        %2458 = vmatprep.subr.mxu0 0.0
        %2459 = vmatpush1.msra.mxu0 0.0
        %2460 = vmatprep.subr.mxu0 0.0
        %2461 = vmatpush1.msra.mxu0 0.0
        %2462 = vmatprep.subr.mxu0 0.0
        %2463 = vmatpush1.msra.mxu0 0.0
        %2464 = vmatprep.subr.mxu0 0.0
        %2465 = vmatpush1.msra.mxu0 0.0
        %2466 = vmatprep.subr.mxu0 0.0
        %2467 = vmatpush1.msra.mxu0 0.0
        %2468 = vmatprep.subr.mxu0 0.0
        %2469 = vmatpush1.msra.mxu0 0.0
        %2470 = vmatprep.subr.mxu0 0.0
        %2471 = vmatpush1.msra.mxu0 0.0
        %2472 = vmatprep.subr.mxu0 %v2444
        %2473 = vmatpush1.msra.mxu0 %v2443
        %2474 = vmatprep.subr.mxu0 %v2442
        %2475 = vmatpush1.msra.mxu0 %v2441
        %2476 = vmatprep.subr.mxu0 %v2440
        %2477 = vmatpush1.msra.mxu0 %v2439
        %2478 = vmatprep.subr.mxu0 %v2438
        %2479 = vmatpush1.msra.mxu0 %v2437
        %2480 = vmatprep.subr.mxu0 0.0
        %2481 = vmatpush2.msra.mxu0 0.0
        %2482 = vmatprep.subr.mxu0 0.0
        %2483 = vmatpush2.msra.mxu0 0.0
        %2484 = vmatprep.subr.mxu0 0.0
        %2485 = vmatpush2.msra.mxu0 0.0
        %2486 = vmatprep.subr.mxu0 0.0
        %2487 = vmatpush2.msra.mxu0 0.0
        %2488 = vmatprep.subr.mxu0 0.0
        %2489 = vmatpush2.msra.mxu0 0.0
        %2490 = vmatprep.subr.mxu0 0.0
        %2491 = vmatpush2.msra.mxu0 0.0
        %2492 = vmatprep.subr.mxu0 0.0
        %2493 = vmatpush2.msra.mxu0 0.0
        %2494 = vmatprep.subr.mxu0 0.0
        %2495 = vmatpush2.msra.mxu0 0.0
        %2496 = vmatprep.subr.mxu0 0.0
        %2497 = vmatpush2.msra.mxu0 0.0
        %2498 = vmatprep.subr.mxu0 0.0
        %2499 = vmatpush2.msra.mxu0 0.0
        %2500 = vmatprep.subr.mxu0 0.0
        %2501 = vmatpush2.msra.mxu0 0.0
        %2502 = vmatprep.subr.mxu0 0.0
        %2503 = vmatpush2.msra.mxu0 0.0
        %2504 = vmatprep.subr.mxu0 0.0
        %2505 = vmatpush2.msra.mxu0 0.0
        %2506 = vmatprep.subr.mxu0 0.0
        %2507 = vmatpush2.msra.mxu0 0.0
        %2508 = vmatprep.subr.mxu0 0.0
        %2509 = vmatpush2.msra.mxu0 0.0
        %2510 = vmatprep.subr.mxu0 0.0
        %2511 = vmatpush2.msra.mxu0 0.0
        %2512 = vmatprep.mubr.f32.mxu0 0.0
        %2513 = vmatmul.mubr.f32.gmra.mxu0 %v2446
        %v2514 = vpop.f32.mrf.mxu0
        %v2515 = vadd.f32 0.0, %v2514
        %v2516 = vpop.f32.mrf.mxu0
        %v2517 = vadd.f32 0.0, %v2516
        %2518 = vdwg.mxu0
        %v2519 = vadd.f32 %v2397, %v2515
        %v2520 = vadd.f32 %v2398, %v2517
        %s2521 = scalar_lea.vmem %s7, 48
        %v2522 = vld [vmem:[%s2521] sm:$0xff]
        %2523 = vrot.lane.b32.xlu0 %v1822, 113
        %v2524 = vpop.permute.xlu0 %2523
        %2525 = vrot.lane.b32.xlu0 %v1823, 113
        %v2526 = vpop.permute.xlu0 %2525
        %2527 = vrot.lane.b32.xlu0 %v1824, 113
        %v2528 = vpop.permute.xlu0 %2527
        %2529 = vrot.lane.b32.xlu0 %v1825, 113
        %v2530 = vpop.permute.xlu0 %2529
        %2531 = vrot.lane.b32.xlu0 %v1826, 113
        %v2532 = vpop.permute.xlu0 %2531
        %2533 = vrot.lane.b32.xlu0 %v1827, 113
        %v2534 = vpop.permute.xlu0 %2533
        %2535 = vrot.lane.b32.xlu0 %v1828, 113
        %v2536 = vpop.permute.xlu0 %2535
        %2537 = vrot.lane.b32.xlu0 %v1829, 113
        %v2538 = vpop.permute.xlu0 %2537
        %v2539 = vsel %vm1226, %v2524, %v2526
        %v2540 = vsel %vm1226, %v2528, %v2530
        %v2541 = vsel %vm1226, %v2532, %v2534
        %v2542 = vsel %vm1226, %v2536, %v2538
        %v2555 = vsel %vm1226, %v2526, %v2524
        %v2556 = vsel %vm1226, %v2530, %v2528
        %v2557 = vsel %vm1226, %v2534, %v2532
        %v2558 = vsel %vm1226, %v2538, %v2536
        %v2559 = vmul.f32 %v2539, %v1238
        %v2560 = vmul.f32 %v2555, %v1242
        %v2561 = vmul.f32 %v2540, %v1238
        %v2562 = vmul.f32 %v2556, %v1242
        %v2563 = vmul.f32 %v2541, %v1238
        %v2564 = vmul.f32 %v2557, %v1242
        %v2565 = vmul.f32 %v2542, %v1238
        %v2566 = vmul.f32 %v2558, %v1242
        %v2568 = vsel %vm1720, %v2522, 0
        %2570 = vmatprep.subr.mxu0 0.0
        %2571 = vmatpush1.msra.mxu0 0.0
        %2572 = vmatprep.subr.mxu0 0.0
        %2573 = vmatpush1.msra.mxu0 0.0
        %2574 = vmatprep.subr.mxu0 0.0
        %2575 = vmatpush1.msra.mxu0 0.0
        %2576 = vmatprep.subr.mxu0 0.0
        %2577 = vmatpush1.msra.mxu0 0.0
        %2578 = vmatprep.subr.mxu0 0.0
        %2579 = vmatpush1.msra.mxu0 0.0
        %2580 = vmatprep.subr.mxu0 0.0
        %2581 = vmatpush1.msra.mxu0 0.0
        %2582 = vmatprep.subr.mxu0 0.0
        %2583 = vmatpush1.msra.mxu0 0.0
        %2584 = vmatprep.subr.mxu0 0.0
        %2585 = vmatpush1.msra.mxu0 0.0
        %2586 = vmatprep.subr.mxu0 0.0
        %2587 = vmatpush1.msra.mxu0 0.0
        %2588 = vmatprep.subr.mxu0 0.0
        %2589 = vmatpush1.msra.mxu0 0.0
        %2590 = vmatprep.subr.mxu0 0.0
        %2591 = vmatpush1.msra.mxu0 0.0
        %2592 = vmatprep.subr.mxu0 0.0
        %2593 = vmatpush1.msra.mxu0 0.0
        %2594 = vmatprep.subr.mxu0 %v2566
        %2595 = vmatpush1.msra.mxu0 %v2565
        %2596 = vmatprep.subr.mxu0 %v2564
        %2597 = vmatpush1.msra.mxu0 %v2563
        %2598 = vmatprep.subr.mxu0 %v2562
        %2599 = vmatpush1.msra.mxu0 %v2561
        %2600 = vmatprep.subr.mxu0 %v2560
        %2601 = vmatpush1.msra.mxu0 %v2559
        %2602 = vmatprep.subr.mxu0 0.0
        %2603 = vmatpush2.msra.mxu0 0.0
        %2604 = vmatprep.subr.mxu0 0.0
        %2605 = vmatpush2.msra.mxu0 0.0
        %2606 = vmatprep.subr.mxu0 0.0
        %2607 = vmatpush2.msra.mxu0 0.0
        %2608 = vmatprep.subr.mxu0 0.0
        %2609 = vmatpush2.msra.mxu0 0.0
        %2610 = vmatprep.subr.mxu0 0.0
        %2611 = vmatpush2.msra.mxu0 0.0
        %2612 = vmatprep.subr.mxu0 0.0
        %2613 = vmatpush2.msra.mxu0 0.0
        %2614 = vmatprep.subr.mxu0 0.0
        %2615 = vmatpush2.msra.mxu0 0.0
        %2616 = vmatprep.subr.mxu0 0.0
        %2617 = vmatpush2.msra.mxu0 0.0
        %2618 = vmatprep.subr.mxu0 0.0
        %2619 = vmatpush2.msra.mxu0 0.0
        %2620 = vmatprep.subr.mxu0 0.0
        %2621 = vmatpush2.msra.mxu0 0.0
        %2622 = vmatprep.subr.mxu0 0.0
        %2623 = vmatpush2.msra.mxu0 0.0
        %2624 = vmatprep.subr.mxu0 0.0
        %2625 = vmatpush2.msra.mxu0 0.0
        %2626 = vmatprep.subr.mxu0 0.0
        %2627 = vmatpush2.msra.mxu0 0.0
        %2628 = vmatprep.subr.mxu0 0.0
        %2629 = vmatpush2.msra.mxu0 0.0
        %2630 = vmatprep.subr.mxu0 0.0
        %2631 = vmatpush2.msra.mxu0 0.0
        %2632 = vmatprep.subr.mxu0 0.0
        %2633 = vmatpush2.msra.mxu0 0.0
        %2634 = vmatprep.mubr.f32.mxu0 0.0
        %2635 = vmatmul.mubr.f32.gmra.mxu0 %v2568
        %v2636 = vpop.f32.mrf.mxu0
        %v2637 = vadd.f32 0.0, %v2636
        %v2638 = vpop.f32.mrf.mxu0
        %v2639 = vadd.f32 0.0, %v2638
        %2640 = vdwg.mxu0
        %v2641 = vadd.f32 %v2519, %v2637
        %v2642 = vadd.f32 %v2520, %v2639
        %s2643 = scalar_lea.vmem %s7, 56
        %v2644 = vld [vmem:[%s2643] sm:$0xff]
        %2645 = vrot.lane.b32.xlu0 %v1822, 112
        %v2646 = vpop.permute.xlu0 %2645
        %2647 = vrot.lane.b32.xlu0 %v1823, 112
        %v2648 = vpop.permute.xlu0 %2647
        %2649 = vrot.lane.b32.xlu0 %v1824, 112
        %v2650 = vpop.permute.xlu0 %2649
        %2651 = vrot.lane.b32.xlu0 %v1825, 112
        %v2652 = vpop.permute.xlu0 %2651
        %2653 = vrot.lane.b32.xlu0 %v1826, 112
        %v2654 = vpop.permute.xlu0 %2653
        %2655 = vrot.lane.b32.xlu0 %v1827, 112
        %v2656 = vpop.permute.xlu0 %2655
        %2657 = vrot.lane.b32.xlu0 %v1828, 112
        %v2658 = vpop.permute.xlu0 %2657
        %2659 = vrot.lane.b32.xlu0 %v1829, 112
        %v2660 = vpop.permute.xlu0 %2659
        %v2661 = vsel %vm1371, %v2646, %v2648
        %v2662 = vsel %vm1371, %v2650, %v2652
        %v2663 = vsel %vm1371, %v2654, %v2656
        %v2664 = vsel %vm1371, %v2658, %v2660
        %v2677 = vsel %vm1371, %v2648, %v2646
        %v2678 = vsel %vm1371, %v2652, %v2650
        %v2679 = vsel %vm1371, %v2656, %v2654
        %v2680 = vsel %vm1371, %v2660, %v2658
        %v2681 = vmul.f32 %v2661, %v1383
        %v2682 = vmul.f32 %v2677, %v1387
        %v2683 = vmul.f32 %v2662, %v1383
        %v2684 = vmul.f32 %v2678, %v1387
        %v2685 = vmul.f32 %v2663, %v1383
        %v2686 = vmul.f32 %v2679, %v1387
        %v2687 = vmul.f32 %v2664, %v1383
        %v2688 = vmul.f32 %v2680, %v1387
        %v2690 = vsel %vm1720, %v2644, 0
        %2692 = vmatprep.subr.mxu0 0.0
        %2693 = vmatpush1.msra.mxu0 0.0
        %2694 = vmatprep.subr.mxu0 0.0
        %2695 = vmatpush1.msra.mxu0 0.0
        %2696 = vmatprep.subr.mxu0 0.0
        %2697 = vmatpush1.msra.mxu0 0.0
        %2698 = vmatprep.subr.mxu0 0.0
        %2699 = vmatpush1.msra.mxu0 0.0
        %2700 = vmatprep.subr.mxu0 0.0
        %2701 = vmatpush1.msra.mxu0 0.0
        %2702 = vmatprep.subr.mxu0 0.0
        %2703 = vmatpush1.msra.mxu0 0.0
        %2704 = vmatprep.subr.mxu0 0.0
        %2705 = vmatpush1.msra.mxu0 0.0
        %2706 = vmatprep.subr.mxu0 0.0
        %2707 = vmatpush1.msra.mxu0 0.0
        %2708 = vmatprep.subr.mxu0 0.0
        %2709 = vmatpush1.msra.mxu0 0.0
        %2710 = vmatprep.subr.mxu0 0.0
        %2711 = vmatpush1.msra.mxu0 0.0
        %2712 = vmatprep.subr.mxu0 0.0
        %2713 = vmatpush1.msra.mxu0 0.0
        %2714 = vmatprep.subr.mxu0 0.0
        %2715 = vmatpush1.msra.mxu0 0.0
        %2716 = vmatprep.subr.mxu0 %v2688
        %2717 = vmatpush1.msra.mxu0 %v2687
        %2718 = vmatprep.subr.mxu0 %v2686
        %2719 = vmatpush1.msra.mxu0 %v2685
        %2720 = vmatprep.subr.mxu0 %v2684
        %2721 = vmatpush1.msra.mxu0 %v2683
        %2722 = vmatprep.subr.mxu0 %v2682
        %2723 = vmatpush1.msra.mxu0 %v2681
        %2724 = vmatprep.subr.mxu0 0.0
        %2725 = vmatpush2.msra.mxu0 0.0
        %2726 = vmatprep.subr.mxu0 0.0
        %2727 = vmatpush2.msra.mxu0 0.0
        %2728 = vmatprep.subr.mxu0 0.0
        %2729 = vmatpush2.msra.mxu0 0.0
        %2730 = vmatprep.subr.mxu0 0.0
        %2731 = vmatpush2.msra.mxu0 0.0
        %2732 = vmatprep.subr.mxu0 0.0
        %2733 = vmatpush2.msra.mxu0 0.0
        %2734 = vmatprep.subr.mxu0 0.0
        %2735 = vmatpush2.msra.mxu0 0.0
        %2736 = vmatprep.subr.mxu0 0.0
        %2737 = vmatpush2.msra.mxu0 0.0
        %2738 = vmatprep.subr.mxu0 0.0
        %2739 = vmatpush2.msra.mxu0 0.0
        %2740 = vmatprep.subr.mxu0 0.0
        %2741 = vmatpush2.msra.mxu0 0.0
        %2742 = vmatprep.subr.mxu0 0.0
        %2743 = vmatpush2.msra.mxu0 0.0
        %2744 = vmatprep.subr.mxu0 0.0
        %2745 = vmatpush2.msra.mxu0 0.0
        %2746 = vmatprep.subr.mxu0 0.0
        %2747 = vmatpush2.msra.mxu0 0.0
        %2748 = vmatprep.subr.mxu0 0.0
        %2749 = vmatpush2.msra.mxu0 0.0
        %2750 = vmatprep.subr.mxu0 0.0
        %2751 = vmatpush2.msra.mxu0 0.0
        %2752 = vmatprep.subr.mxu0 0.0
        %2753 = vmatpush2.msra.mxu0 0.0
        %2754 = vmatprep.subr.mxu0 0.0
        %2755 = vmatpush2.msra.mxu0 0.0
        %2756 = vmatprep.mubr.f32.mxu0 0.0
        %2757 = vmatmul.mubr.f32.gmra.mxu0 %v2690
        %v2758 = vpop.f32.mrf.mxu0
        %v2759 = vadd.f32 0.0, %v2758
        %v2760 = vpop.f32.mrf.mxu0
        %v2761 = vadd.f32 0.0, %v2760
        %2762 = vdwg.mxu0
        %v2763 = vadd.f32 %v2641, %v2759
        %v2764 = vadd.f32 %v2642, %v2761
        %s2765 = scalar_lea.vmem %s7, 64
        %v2766 = vld [vmem:[%s2765] sm:$0xff]
        %2767 = vrot.lane.b32.xlu0 %v1822, 111
        %v2768 = vpop.permute.xlu0 %2767
        %2769 = vrot.lane.b32.xlu0 %v1823, 111
        %v2770 = vpop.permute.xlu0 %2769
        %2771 = vrot.lane.b32.xlu0 %v1824, 111
        %v2772 = vpop.permute.xlu0 %2771
        %2773 = vrot.lane.b32.xlu0 %v1825, 111
        %v2774 = vpop.permute.xlu0 %2773
        %2775 = vrot.lane.b32.xlu0 %v1826, 111
        %v2776 = vpop.permute.xlu0 %2775
        %2777 = vrot.lane.b32.xlu0 %v1827, 111
        %v2778 = vpop.permute.xlu0 %2777
        %2779 = vrot.lane.b32.xlu0 %v1828, 111
        %v2780 = vpop.permute.xlu0 %2779
        %2781 = vrot.lane.b32.xlu0 %v1829, 111
        %v2782 = vpop.permute.xlu0 %2781
        %v2783 = vsel %vm1516, %v2768, %v2770
        %v2784 = vsel %vm1516, %v2772, %v2774
        %v2785 = vsel %vm1516, %v2776, %v2778
        %v2786 = vsel %vm1516, %v2780, %v2782
        %v2799 = vsel %vm1516, %v2770, %v2768
        %v2800 = vsel %vm1516, %v2774, %v2772
        %v2801 = vsel %vm1516, %v2778, %v2776
        %v2802 = vsel %vm1516, %v2782, %v2780
        %v2803 = vmul.f32 %v2783, %v1528
        %v2804 = vmul.f32 %v2799, %v1532
        %v2805 = vmul.f32 %v2784, %v1528
        %v2806 = vmul.f32 %v2800, %v1532
        %v2807 = vmul.f32 %v2785, %v1528
        %v2808 = vmul.f32 %v2801, %v1532
        %v2809 = vmul.f32 %v2786, %v1528
        %v2810 = vmul.f32 %v2802, %v1532
        %v2812 = vsel %vm1720, %v2766, 0
        %2814 = vmatprep.subr.mxu0 0.0
        %2815 = vmatpush1.msra.mxu0 0.0
        %2816 = vmatprep.subr.mxu0 0.0
        %2817 = vmatpush1.msra.mxu0 0.0
        %2818 = vmatprep.subr.mxu0 0.0
        %2819 = vmatpush1.msra.mxu0 0.0
        %2820 = vmatprep.subr.mxu0 0.0
        %2821 = vmatpush1.msra.mxu0 0.0
        %2822 = vmatprep.subr.mxu0 0.0
        %2823 = vmatpush1.msra.mxu0 0.0
        %2824 = vmatprep.subr.mxu0 0.0
        %2825 = vmatpush1.msra.mxu0 0.0
        %2826 = vmatprep.subr.mxu0 0.0
        %2827 = vmatpush1.msra.mxu0 0.0
        %2828 = vmatprep.subr.mxu0 0.0
        %2829 = vmatpush1.msra.mxu0 0.0
        %2830 = vmatprep.subr.mxu0 0.0
        %2831 = vmatpush1.msra.mxu0 0.0
        %2832 = vmatprep.subr.mxu0 0.0
        %2833 = vmatpush1.msra.mxu0 0.0
        %2834 = vmatprep.subr.mxu0 0.0
        %2835 = vmatpush1.msra.mxu0 0.0
        %2836 = vmatprep.subr.mxu0 0.0
        %2837 = vmatpush1.msra.mxu0 0.0
        %2838 = vmatprep.subr.mxu0 %v2810
        %2839 = vmatpush1.msra.mxu0 %v2809
        %2840 = vmatprep.subr.mxu0 %v2808
        %2841 = vmatpush1.msra.mxu0 %v2807
        %2842 = vmatprep.subr.mxu0 %v2806
        %2843 = vmatpush1.msra.mxu0 %v2805
        %2844 = vmatprep.subr.mxu0 %v2804
        %2845 = vmatpush1.msra.mxu0 %v2803
        %2846 = vmatprep.subr.mxu0 0.0
        %2847 = vmatpush2.msra.mxu0 0.0
        %2848 = vmatprep.subr.mxu0 0.0
        %2849 = vmatpush2.msra.mxu0 0.0
        %2850 = vmatprep.subr.mxu0 0.0
        %2851 = vmatpush2.msra.mxu0 0.0
        %2852 = vmatprep.subr.mxu0 0.0
        %2853 = vmatpush2.msra.mxu0 0.0
        %2854 = vmatprep.subr.mxu0 0.0
        %2855 = vmatpush2.msra.mxu0 0.0
        %2856 = vmatprep.subr.mxu0 0.0
        %2857 = vmatpush2.msra.mxu0 0.0
        %2858 = vmatprep.subr.mxu0 0.0
        %2859 = vmatpush2.msra.mxu0 0.0
        %2860 = vmatprep.subr.mxu0 0.0
        %2861 = vmatpush2.msra.mxu0 0.0
        %2862 = vmatprep.subr.mxu0 0.0
        %2863 = vmatpush2.msra.mxu0 0.0
        %2864 = vmatprep.subr.mxu0 0.0
        %2865 = vmatpush2.msra.mxu0 0.0
        %2866 = vmatprep.subr.mxu0 0.0
        %2867 = vmatpush2.msra.mxu0 0.0
        %2868 = vmatprep.subr.mxu0 0.0
        %2869 = vmatpush2.msra.mxu0 0.0
        %2870 = vmatprep.subr.mxu0 0.0
        %2871 = vmatpush2.msra.mxu0 0.0
        %2872 = vmatprep.subr.mxu0 0.0
        %2873 = vmatpush2.msra.mxu0 0.0
        %2874 = vmatprep.subr.mxu0 0.0
        %2875 = vmatpush2.msra.mxu0 0.0
        %2876 = vmatprep.subr.mxu0 0.0
        %2877 = vmatpush2.msra.mxu0 0.0
        %2878 = vmatprep.mubr.f32.mxu0 0.0
        %2879 = vmatmul.mubr.f32.gmra.mxu0 %v2812
        %v2880 = vpop.f32.mrf.mxu0
        %v2881 = vadd.f32 0.0, %v2880
        %v2882 = vpop.f32.mrf.mxu0
        %v2883 = vadd.f32 0.0, %v2882
        %2884 = vdwg.mxu0
        %v2885 = vadd.f32 %v2763, %v2881
        %v2886 = vadd.f32 %v2764, %v2883
        %v2887 = vld [vmem:[%s8] sm:$0xff]
        %2889 = vset.pattern.permute.xlu0 0
        %2890 = vperm.xlu0 %2889, %v2887
        %v2891 = vpop.permute.xlu0 %2890
        %v2893 = vadd.f32 %v2885, %v2891
        %v2894 = vadd.f32 %v2886, %v2891
        %v2895 = vmax.f32 %v2893, 0.0
        %v2896 = vmax.f32 %v2894, 0.0
        %v2897 = vand.u32 2147483647, %v2893
        %v2898 = vand.u32 2147483647, %v2894
        %v2899 = vsub.f32 0.0, %v2897
        %v2900 = vsub.f32 0.0, %v2898
        %v2901 = vmul.f32 %v2899, 1.442695
        %v2902 = vpow.pop %v2901
        %v2903 = vmul.f32 %v2900, 1.442695
        %v2904 = vpow.pop %v2903
        %v2905 = vadd.f32 %v2902, 1.0
        %v2906 = vadd.f32 %v2904, 1.0
        %v2907 = vlog2.pop %v2905
        %v2908 = vmul.f32 %v2907, 0.6931472
        %v2909 = vlog2.pop %v2906
        %v2910 = vmul.f32 %v2909, 0.6931472
        %v2911 = vadd.f32 %v2895, %v2908
        %v2912 = vadd.f32 %v2896, %v2910
        %v2913 = vld [vmem:[%s383] sm:$0xff]
        %v2916 = vcombine.low %v2893, %v2894
        %v2918 = vadd.f32 %v2913, %v2916
        %v2921 = vcombine.high %v2911, %v2912
        %v2923 = vmul.f32 %v2918, %v2921
        %2924 = vst [vmem:[%s368] sm:$0xff] %v2923
        %v2925 = vlog2.pop %v2911
        %v2926 = vmul.f32 %v2925, 0.6931472
        %v2927 = vlog2.pop %v2912
        %v2928 = vmul.f32 %v2927, 0.6931472
        %v2931 = vrot.slane %v2926, 4
        %v2932 = vrot.slane %v2928, 4
        %v2935 = vsel %vm461, %v2931, 0.0
        %v2936 = vsel %vm461, %v2932, 0.0
        %v2937 = vadd.f32 %v2935, %v2936
        %2938 = vadd.xlane.f32.xlu0 %v2937
        %v2939 = vpop.xlane.xlu0 %2938
        %v2940 = vrot.slane %v2939, 4
        %v2941 = vadd.f32 %v2939, %v2940
        %v2942 = vrot.slane %v2941, 2
        %v2943 = vadd.f32 %v2941, %v2942
        %v2944 = vrot.slane %v2943, 1
        %v2945 = vadd.f32 %v2943, %v2944
        %s2946 = vtos %v2945
        %v2947 = vstv %s2946
        %vm2948 = vcmask 0
        %2949 = vst.msk [vmem:[%s386] sm:$0x1] %vm2948, %v2947
        %s2950 = sand.u32 %s232, 1
        %s2951 = scalar_lea.sflag [#allocation3], %s2950
        %s2952 = sand.u32 %s232, 1
        %s2953 = smul.addr %s2952, 8
        %s2954 = scalar_lea.vmem [#allocation2], %s2953
        %p2955 = scmp.lt.s32.totalorder %s25, 1
        %s2956 = scalar_select %p2955, %s25, 1
        %s2957 = scalar_lea.vmem %s10, %s2956
        // Predicated region
        $region57: #{tpu_custom_call.1} parent=55 // pred_check
          %p2958 = pneg %p242
        $region58: #{tpu_custom_call.1} parent=55 // pred_check_branch
          %2960 = sbr.rel (%p2958) target = $region60
        $region59: #{tpu_custom_call.1} parent=55 // pred_region
          %s2962 = ssub.s32 128, 128
          %2963 = vsyncadd %s2951, %s2962
          %s2964 = smul.addr %s25, 2
          %s2965 = smul.addr %s2964, 64
          %s2966 = scalar_lea.hbm %s9, %s2965
          %s2968 = sshll.u32 %s2954, 4
          %s2969 = int_to_ptr.vmem [resolvable:$true] %s2968
          %2971 = dma.vmem_to_hbm [thread:$0]  %s2969, 128, %s2966, %s2951
        $region60: #{tpu_custom_call.1} parent=55 // pred_fallthru
          _
        // Predicated region
        $region61: #{tpu_custom_call.1} parent=55 // pred_check
          %p2972 = pneg %p268
        $region62: #{tpu_custom_call.1} parent=55 // pred_check_branch
          %2974 = sbr.rel (%p2972) target = $region64
        $region63: #{tpu_custom_call.1} parent=55 // pred_region
          _
        $region64: #{tpu_custom_call.1} parent=55 // pred_fallthru
          _
      $region56: #{tpu_custom_call.1} parent=5 // pred_fallthru
        _
      %p2975 = scmp.le.s32.totalorder 2, %s20
      // Predicated region
      $region65: #{tpu_custom_call.1} parent=5 // pred_check
        %p2976 = pneg %p2975
      $region66: #{tpu_custom_call.1} parent=5 // pred_check_branch
        %2978 = sbr.rel (%p2976) target = $region68
      $region67: #{tpu_custom_call.1} parent=5 // pred_region
        %s2979 = ssub.s32 %s20, 2
        // Predicated region
        $region69: #{tpu_custom_call.1} parent=67 // pred_check
          %p2980 = pneg %p248
        $region70: #{tpu_custom_call.1} parent=67 // pred_check_branch
          %2982 = sbr.rel (%p2980) target = $region72
        $region71: #{tpu_custom_call.1} parent=67 // pred_region
          %s2983 = sand.u32 %s233, 1
          %s2984 = scalar_lea.sflag [#allocation3], %s2983
          %s2985 = sand.u32 %s233, 1
          %s2986 = smul.addr %s2985, 8
          %s2987 = scalar_lea.vmem [#allocation2], %s2986
          %2988 = dma.done %s2984, 128
        $region72: #{tpu_custom_call.1} parent=67 // pred_fallthru
          _
        // Predicated region
        $region73: #{tpu_custom_call.1} parent=67 // pred_check
          %p2989 = pneg %p274
        $region74: #{tpu_custom_call.1} parent=67 // pred_check_branch
          %2991 = sbr.rel (%p2989) target = $region76
        $region75: #{tpu_custom_call.1} parent=67 // pred_region
          %p2992 = scmp.lt.s32.totalorder %s26, 1
          %s2993 = scalar_select %p2992, %s26, 1
          %s2994 = scalar_lea.vmem %s10, %s2993
        $region76: #{tpu_custom_call.1} parent=67 // pred_fallthru
          _
      $region68: #{tpu_custom_call.1} parent=5 // pred_fallthru
        _
    $region6: #{tpu_custom_call.1} parent=1 // loop_footer
      %s24 = sadd.s32 1, %s20
    $region7: #{tpu_custom_call.1} parent=1 // loop_footer_branch
      %19 = sbr.rel target = $region3
    $region8: #{tpu_custom_call.1} parent=1 // loop_exit
      _
    %2995 = vsyncpa [#allocation3], 1
    %s2996 = scalar_lea.sflag [#allocation3], 1
    %2997 = vsyncpa %s2996, 1

</llo_original>
